<compile_context>
chip_gen: v7x
topology: tpu7x:2x2x1
jax: 0.10.0
libtpu: 0.0.40
codegen_flags: <defaults>
</compile_context>

<pallas_src>
import functools
import math

import jax
import jax.numpy as jnp
from jax.experimental import pallas as pl
from jax.experimental.pallas import tpu as pltpu


# -----------------------------------------------------------------------------
# Generation-aware VMEM tuning (safe fallback = v7x-conservative settings)
# -----------------------------------------------------------------------------
def _vmem_capacity_bytes():
    try:
        info = pltpu.get_tpu_info()
        return int(getattr(info, "vmem_capacity_bytes", 64 * 1024 * 1024))
    except Exception:
        return 64 * 1024 * 1024


_VMEM_CAP = _vmem_capacity_bytes()
_BIG_VMEM = _VMEM_CAP >= 100 * 1024 * 1024          # v5e/v6e: 128 MiB; v7x: 64 MiB
_FC_TILE_N = 2048 if _BIG_VMEM else 1024            # fc2 weight tile columns
_VMEM_LIMIT = (96 if _BIG_VMEM else 48) * 1024 * 1024


# -----------------------------------------------------------------------------
# 3x3 "same" conv + bias + ReLU (+ optional fused 2x2 maxpool)
# -----------------------------------------------------------------------------
def _conv3x3_kernel(x_ref, w_ref, b_ref, o_ref, *, pool):
    # x_ref: (1, H, W, Cin) f32   w_ref: (3, 3*Cin, tco) bf16   b_ref: (1, tco) f32
    # o_ref: (1, H, W, tco) or (1, H//2, W//2, tco) f32
    _, H, W, cin = x_ref.shape
    tco = o_ref.shape[-1]

    x = x_ref[0].astype(jnp.bfloat16)                        # (H, W, Cin)
    # Zero halo built in VMEM (no wrapper-side pad / HBM round trip).
    zr = jnp.zeros((1, W, cin), jnp.bfloat16)
    xp = jnp.concatenate([zr, x, zr], axis=0)                # (H+2, W, Cin)
    zc = jnp.zeros((H + 2, 1, cin), jnp.bfloat16)
    xp = jnp.concatenate([zc, xp, zc], axis=1)               # (H+2, W+2, Cin)

    # Single K = 3*Cin slab covering the three dx taps; the three dy taps are
    # free leading-dim slices of it (3 matmuls, f32 accumulation).
    slab = jnp.concatenate(
        [xp[:, 0:W, :], xp[:, 1:W + 1, :], xp[:, 2:W + 2, :]],
        axis=-1)                                             # (H+2, W, 3*Cin)

    acc = jnp.dot(slab[0:H].reshape(H * W, 3 * cin), w_ref[0],
                  preferred_element_type=jnp.float32)
    for dy in (1, 2):                                        # static unroll
        acc = acc + jnp.dot(slab[dy:dy + H].reshape(H * W, 3 * cin), w_ref[dy],
                            preferred_element_type=jnp.float32)

    y = jnp.maximum(acc + b_ref[...], 0.0).reshape(H, W, tco)
    if pool:
        y = y.reshape(H // 2, 2, W // 2, 2, tco)
        y = jnp.max(jnp.max(y, axis=3), axis=1)
    o_ref[0] = y


def conv3x3_relu(x, w, b, *, pool=False, cout_tile=256):
    # x: (N, H, W, Cin) f32, w: (3, 3*Cin, Cout) bf16, b: (1, Cout) f32
    N, H, W, Cin = x.shape
    Cout = w.shape[-1]
    tco = min(Cout, cout_tile)
    assert Cout % tco == 0
    if pool:
        # PyTorch MaxPool2d(2,2) floors odd dims; here we require even dims.
        assert H % 2 == 0 and W % 2 == 0
    Ho, Wo = (H // 2, W // 2) if pool else (H, W)
    kernel = functools.partial(_conv3x3_kernel, pool=pool)
    # Grid (Cout tiles, batch): batch is the fastest-varying axis, so the
    # weight block index is invariant across it and the weight stays resident
    # in VMEM for the whole batch.
    return pl.pallas_call(
        kernel,
        out_shape=jax.ShapeDtypeStruct((N, Ho, Wo, Cout), jnp.float32),
        grid=(Cout // tco, N),
        in_specs=[
            pl.BlockSpec((1, H, W, Cin), lambda c, n: (n, 0, 0, 0)),
            pl.BlockSpec((3, 3 * Cin, tco), lambda c, n: (0, 0, c)),
            pl.BlockSpec((1, tco), lambda c, n: (0, c)),
        ],
        out_specs=pl.BlockSpec((1, Ho, Wo, tco), lambda c, n: (n, 0, 0, c)),
        compiler_params=pltpu.CompilerParams(
            dimension_semantics=("parallel", "parallel"),
            vmem_limit_bytes=_VMEM_LIMIT),
    )(x, w, b)
    # TODO(synk): for img_size >= ~128 add an H row-tile grid axis (1-row halo)
    # so per-step input + slab + output stay within v7x's 64 MiB VMEM.


# -----------------------------------------------------------------------------
# Fused FC stack: fc1 + dropout + fc2 + dropout + fc3 in one pallas_call.
# fc1 weights / activations stay resident; fc2 weight tiles (and matching fc3
# weight rows) are streamed across the grid with fc3 accumulated on the fly.
# Weights stream in bf16, all MXU accumulation in f32.
# -----------------------------------------------------------------------------
def _fc_stack_kernel(x_ref, w1_ref, b1_ref, s1_ref, w2_ref, b2_ref, s2_ref,
                     w3_ref, b3_ref, o_ref, h1_ref, acc_ref):
    j = pl.program_id(0)

    @pl.when(j == 0)
    def _():
        h1 = jnp.dot(x_ref[...].astype(jnp.bfloat16), w1_ref[...],
                     preferred_element_type=jnp.float32)
        h1 = jnp.maximum(h1 + b1_ref[...], 0.0) * s1_ref[...]
        h1_ref[...] = h1.astype(jnp.bfloat16)
        acc_ref[...] = jnp.zeros_like(acc_ref)

    # fc2 output tile j (+ bias + ReLU + dropout), folded straight into the
    # fc3 accumulation against the matching rows of w3.
    h2 = jnp.dot(h1_ref[...], w2_ref[...], preferred_element_type=jnp.float32)
    h2 = jnp.maximum(h2 + b2_ref[...], 0.0) * s2_ref[...]
    acc_ref[...] += jnp.dot(h2.astype(jnp.bfloat16), w3_ref[...],
                            preferred_element_type=jnp.float32)

    @pl.when(j == pl.num_programs(0) - 1)
    def _():
        o_ref[...] = acc_ref[...] + b3_ref[...]


def fc_stack(x, p, s1, s2):
    # x: (M, K1) f32, s1/s2: (M, 4096) f32 dropout scales
    (w1, b1), (w2, b2), (w3, b3) = p["fc1"], p["fc2"], p["fc3"]
    M, K1 = x.shape
    N1 = w1.shape[1]                       # 4096
    C = w3.shape[1]
    tn = _FC_TILE_N
    assert N1 % tn == 0
    return pl.pallas_call(
        _fc_stack_kernel,
        out_shape=jax.ShapeDtypeStruct((M, C), jnp.float32),
        grid=(N1 // tn,),
        in_specs=[
            pl.BlockSpec((M, K1), lambda j: (0, 0)),    # x (resident)
            pl.BlockSpec((K1, N1), lambda j: (0, 0)),   # w1 (resident)
            pl.BlockSpec((1, N1), lambda j: (0, 0)),    # b1
            pl.BlockSpec((M, N1), lambda j: (0, 0)),    # dropout scale 1
            pl.BlockSpec((N1, tn), lambda j: (0, j)),   # w2 column tile (streamed)
            pl.BlockSpec((1, tn), lambda j: (0, j)),    # b2 tile
            pl.BlockSpec((M, tn), lambda j: (0, j)),    # dropout scale 2 tile
            pl.BlockSpec((tn, C), lambda j: (j, 0)),    # w3 row tile (streamed)
            pl.BlockSpec((1, C), lambda j: (0, 0)),     # b3
        ],
        out_specs=pl.BlockSpec((M, C), lambda j: (0, 0)),
        scratch_shapes=[
            pltpu.VMEM((M, N1), jnp.bfloat16),          # resident fc1 activations
            pltpu.VMEM((M, C), jnp.float32),            # fc3 accumulator
        ],
        compiler_params=pltpu.CompilerParams(
            dimension_semantics=("arbitrary",),
            vmem_limit_bytes=_VMEM_LIMIT),
    )(x, w1, b1, s1, w2, b2, s2, w3, b3)


# -----------------------------------------------------------------------------
# Parameters (deterministic synthetic init) and forward pass
# -----------------------------------------------------------------------------
def init_params(key, img_size, num_classes):
    keys = iter(jax.random.split(key, 22))

    def conv_p(cin, cout):
        kw, kb = next(keys), next(keys)
        w = jax.random.normal(kw, (3, 3, cin, cout), jnp.float32) / math.sqrt(9 * cin)
        b = jax.random.normal(kb, (cout,), jnp.float32) * 0.01
        # Tap layout (dy, dx*Cin + ci, co).  NOTE: importing a real PyTorch
        # state_dict (Cout, Cin, kH, kW) would need permute(2, 3, 1, 0) first.
        # bf16 weight streaming, f32 MXU accumulation.
        return w.reshape(3, 3 * cin, cout).astype(jnp.bfloat16), b.reshape(1, cout)

    def fc_p(fin, fout):
        kw, kb = next(keys), next(keys)
        w = jax.random.normal(kw, (fin, fout), jnp.float32) / math.sqrt(fin)
        b = jax.random.normal(kb, (fout,), jnp.float32) * 0.01
        # FC layers at tiny batch are pure weight-bandwidth bound: stream the
        # weights in bf16, accumulate in f32 on the MXU.
        return w.astype(jnp.bfloat16), b.reshape(1, fout)

    # Reference module quirk: fc1 in-features = img_size^2 / 2 (or 512 if 50);
    # at img_size=32 this equals the true flattened size 512*(img/32)^2.
    fc1_in = 512 if img_size == 50 else (img_size * img_size) // 2
    return {
        "conv1_1": conv_p(3, 64),
        "conv1_2": conv_p(64, 64),
        "conv2_1": conv_p(64, 128),
        "conv2_2": conv_p(128, 128),
        "conv3_1": conv_p(128, 256),
        "conv3_2": conv_p(256, 256),
        "conv4_1": conv_p(256, 512),
        "conv5_1": conv_p(512, 512),
        "fc1": fc_p(fc1_in, 4096),
        "fc2": fc_p(4096, 4096),
        "fc3": fc_p(4096, num_classes),
    }


def vgg16_forward(x_nchw, p, *, dropout_key):
    x = jnp.transpose(x_nchw, (0, 2, 3, 1))          # NCHW -> NHWC
    x = conv3x3_relu(x, *p["conv1_1"])
    x = conv3x3_relu(x, *p["conv1_2"], pool=True)    # conv + relu + maxpool fused
    x = conv3x3_relu(x, *p["conv2_1"])
    x = conv3x3_relu(x, *p["conv2_2"], pool=True)
    x = conv3x3_relu(x, *p["conv3_1"])
    x = conv3x3_relu(x, *p["conv3_2"], pool=True)
    x = conv3x3_relu(x, *p["conv4_1"], pool=True)
    x = conv3x3_relu(x, *p["conv5_1"], pool=True)
    # back to NCHW before flatten -> matches torch.flatten(x, 1) ordering
    x = jnp.transpose(x, (0, 3, 1, 2)).reshape(x.shape[0], -1)

    # TODO(synk): F.dropout(p=0.5, training=True) uses PyTorch's RNG stream,
    # which cannot be bit-matched; an equivalent Bernoulli(0.5) mask with
    # inverted scaling is generated with jax.random and applied in-kernel.
    k1, k2 = jax.random.split(dropout_key)
    m = x.shape[0]
    s1 = jax.random.bernoulli(k1, 0.5, (m, 4096)).astype(jnp.float32) * 2.0
    s2 = jax.random.bernoulli(k2, 0.5, (m, 4096)).astype(jnp.float32) * 2.0

    return fc_stack(x, p, s1, s2)


if __name__ == "__main__":
    img_size = 32       # divisible by 32 so 5 maxpools reach 1x1 and fc1 fan-in matches
    num_classes = 10
    batch = 2

    key = jax.random.PRNGKey(0)
    kx, kp, kd = jax.random.split(key, 3)
    x = jax.random.normal(kx, (batch, 3, img_size, img_size), jnp.float32)
    params = init_params(kp, img_size, num_classes)

    out = vgg16_forward(x, params, dropout_key=kd)
    out = jax.block_until_ready(out)
    assert out.shape == (batch, num_classes), out.shape
    assert bool(jnp.all(jnp.isfinite(out)))
    print("KERNEL_OK")
</pallas_src>

<mosaic_0001>
module attributes {stable_mosaic.version = 11 : i64} {
  func.func @_conv3x3_kernel(%arg0: i32, %arg1: i32, %arg2: memref<1x32x32x3xf32, #tpu.memory_space<vmem>>, %arg3: memref<3x9x64xbf16, #tpu.memory_space<vmem>>, %arg4: memref<1x64xf32, #tpu.memory_space<vmem>>, %arg5: memref<1x32x32x64xf32, #tpu.memory_space<vmem>>) attributes {dimension_semantics = [#tpu.dimension_semantics<parallel>, #tpu.dimension_semantics<parallel>], iteration_bounds = array<i64: 1, 2>, scalar_prefetch = 0 : i64, scratch_operands = 0 : i64, tpu.core_type = #tpu.core_type<tc>, window_params = [{transform_indices = @transform_0, window_bounds = array<i64: 1, 32, 32, 3>}, {transform_indices = @transform_1, window_bounds = array<i64: 3, 9, 64>}, {transform_indices = @transform_2, window_bounds = array<i64: 1, 64>}, {transform_indices = @transform_3, window_bounds = array<i64: 1, 32, 32, 64>}]} {
    %c0 = arith.constant 0 : index
    %c0_0 = arith.constant 0 : index
    %c0_1 = arith.constant 0 : index
    %c0_2 = arith.constant 0 : index
    %0 = vector.load %arg2[%c0, %c0_0, %c0_1, %c0_2] : memref<1x32x32x3xf32, #tpu.memory_space<vmem>>, vector<1x32x32x3xf32>
    %1 = vector.shape_cast %0 : vector<1x32x32x3xf32> to vector<32x32x3xf32>
    %2 = arith.truncf %1 : vector<32x32x3xf32> to vector<32x32x3xbf16>
    %cst = arith.constant 0.000000e+00 : bf16
    %3 = vector.broadcast %cst : bf16 to vector<1x32x3xbf16>
    %4 = tpu.concatenate %3, %2, %3 in 0 : vector<1x32x3xbf16>, vector<32x32x3xbf16>, vector<1x32x3xbf16> -> vector<34x32x3xbf16>
    %cst_3 = arith.constant 0.000000e+00 : bf16
    %5 = vector.broadcast %cst_3 : bf16 to vector<34x1x3xbf16>
    %6 = tpu.concatenate %5, %4, %5 in 1 : vector<34x1x3xbf16>, vector<34x32x3xbf16>, vector<34x1x3xbf16> -> vector<34x34x3xbf16>
    %7 = vector.extract_strided_slice %6 {offsets = [0, 0, 0], sizes = [34, 32, 3], strides = [1, 1, 1]} : vector<34x34x3xbf16> to vector<34x32x3xbf16>
    %8 = vector.extract_strided_slice %6 {offsets = [0, 1, 0], sizes = [34, 32, 3], strides = [1, 1, 1]} : vector<34x34x3xbf16> to vector<34x32x3xbf16>
    %9 = vector.extract_strided_slice %6 {offsets = [0, 2, 0], sizes = [34, 32, 3], strides = [1, 1, 1]} : vector<34x34x3xbf16> to vector<34x32x3xbf16>
    %10 = tpu.concatenate %7, %8, %9 in 2 : vector<34x32x3xbf16>, vector<34x32x3xbf16>, vector<34x32x3xbf16> -> vector<34x32x9xbf16>
    %11 = vector.extract_strided_slice %10 {offsets = [0, 0, 0], sizes = [32, 32, 9], strides = [1, 1, 1]} : vector<34x32x9xbf16> to vector<32x32x9xbf16>
    %12 = vector.shape_cast %11 : vector<32x32x9xbf16> to vector<1024x9xbf16>
    %c0_4 = arith.constant 0 : index
    %c0_5 = arith.constant 0 : index
    %c0_6 = arith.constant 0 : index
    %13 = vector.load %arg3[%c0_4, %c0_5, %c0_6] : memref<3x9x64xbf16, #tpu.memory_space<vmem>>, vector<1x9x64xbf16>
    %14 = vector.shape_cast %13 : vector<1x9x64xbf16> to vector<9x64xbf16>
    %cst_7 = arith.constant dense<0.000000e+00> : vector<1024x64xf32>
    %15 = tpu.matmul %12, %14, %cst_7 {dimension_numbers = #tpu.dot_dimension_numbers<[1], [0], [0], [1], [0, 0, 1, 1], [], []>} : vector<1024x9xbf16>, vector<9x64xbf16>, vector<1024x64xf32> -> vector<1024x64xf32>
    %16 = vector.extract_strided_slice %10 {offsets = [1, 0, 0], sizes = [32, 32, 9], strides = [1, 1, 1]} : vector<34x32x9xbf16> to vector<32x32x9xbf16>
    %17 = vector.shape_cast %16 : vector<32x32x9xbf16> to vector<1024x9xbf16>
    %c1 = arith.constant 1 : index
    %c0_8 = arith.constant 0 : index
    %c0_9 = arith.constant 0 : index
    %18 = vector.load %arg3[%c1, %c0_8, %c0_9] : memref<3x9x64xbf16, #tpu.memory_space<vmem>>, vector<1x9x64xbf16>
    %19 = vector.shape_cast %18 : vector<1x9x64xbf16> to vector<9x64xbf16>
    %cst_10 = arith.constant dense<0.000000e+00> : vector<1024x64xf32>
    %20 = tpu.matmul %17, %19, %cst_10 {dimension_numbers = #tpu.dot_dimension_numbers<[1], [0], [0], [1], [0, 0, 1, 1], [], []>} : vector<1024x9xbf16>, vector<9x64xbf16>, vector<1024x64xf32> -> vector<1024x64xf32>
    %21 = arith.addf %15, %20 : vector<1024x64xf32>
    %22 = vector.extract_strided_slice %10 {offsets = [2, 0, 0], sizes = [32, 32, 9], strides = [1, 1, 1]} : vector<34x32x9xbf16> to vector<32x32x9xbf16>
    %23 = vector.shape_cast %22 : vector<32x32x9xbf16> to vector<1024x9xbf16>
    %c2 = arith.constant 2 : index
    %c0_11 = arith.constant 0 : index
    %c0_12 = arith.constant 0 : index
    %24 = vector.load %arg3[%c2, %c0_11, %c0_12] : memref<3x9x64xbf16, #tpu.memory_space<vmem>>, vector<1x9x64xbf16>
    %25 = vector.shape_cast %24 : vector<1x9x64xbf16> to vector<9x64xbf16>
    %cst_13 = arith.constant dense<0.000000e+00> : vector<1024x64xf32>
    %26 = tpu.matmul %23, %25, %cst_13 {dimension_numbers = #tpu.dot_dimension_numbers<[1], [0], [0], [1], [0, 0, 1, 1], [], []>} : vector<1024x9xbf16>, vector<9x64xbf16>, vector<1024x64xf32> -> vector<1024x64xf32>
    %27 = arith.addf %21, %26 : vector<1024x64xf32>
    %c0_14 = arith.constant 0 : index
    %c0_15 = arith.constant 0 : index
    %28 = vector.load %arg4[%c0_14, %c0_15] : memref<1x64xf32, #tpu.memory_space<vmem>>, vector<1x64xf32>
    %29 = vector.broadcast %28 : vector<1x64xf32> to vector<1024x64xf32>
    %30 = arith.addf %27, %29 : vector<1024x64xf32>
    %cst_16 = arith.constant 0.000000e+00 : f32
    %31 = vector.broadcast %cst_16 : f32 to vector<1024x64xf32>
    %32 = arith.maximumf %30, %31 : vector<1024x64xf32>
    %33 = vector.shape_cast %32 : vector<1024x64xf32> to vector<32x32x64xf32>
    %c0_17 = arith.constant 0 : index
    %c0_18 = arith.constant 0 : index
    %c0_19 = arith.constant 0 : index
    %c0_20 = arith.constant 0 : index
    %34 = vector.load %arg5[%c0_17, %c0_18, %c0_19, %c0_20] : memref<1x32x32x64xf32, #tpu.memory_space<vmem>>, vector<1x32x32x64xf32>
    %35 = vector.shape_cast %34 : vector<1x32x32x64xf32> to vector<32x32x64xf32>
    %36 = vector.shape_cast %33 : vector<32x32x64xf32> to vector<1x32x32x64xf32>
    tpu.vector_store %arg5[%c0_17, %c0_18, %c0_19, %c0_20], %36 {strides = array<i32>} : memref<1x32x32x64xf32, #tpu.memory_space<vmem>>, vector<1x32x32x64xf32>,
    return
  }
  func.func @transform_0(%arg0: i32, %arg1: i32) -> (i32, i32, i32, i32) {
    %c0_i32 = arith.constant 0 : i32
    %c0_i32_0 = arith.constant 0 : i32
    %c0_i32_1 = arith.constant 0 : i32
    %c0_i32_2 = arith.constant 0 : i32
    return %arg1, %c0_i32, %c0_i32_0, %c0_i32_1 : i32, i32, i32, i32
  }
  func.func @transform_1(%arg0: i32, %arg1: i32) -> (i32, i32, i32) {
    %c0_i32 = arith.constant 0 : i32
    %c0_i32_0 = arith.constant 0 : i32
    %c0_i32_1 = arith.constant 0 : i32
    return %c0_i32, %c0_i32_0, %arg0 : i32, i32, i32
  }
  func.func @transform_2(%arg0: i32, %arg1: i32) -> (i32, i32) {
    %c0_i32 = arith.constant 0 : i32
    %c0_i32_0 = arith.constant 0 : i32
    return %c0_i32, %arg0 : i32, i32
  }
  func.func @transform_3(%arg0: i32, %arg1: i32) -> (i32, i32, i32, i32) {
    %c0_i32 = arith.constant 0 : i32
    %c0_i32_0 = arith.constant 0 : i32
    %c0_i32_1 = arith.constant 0 : i32
    return %arg1, %c0_i32, %c0_i32_0, %arg0 : i32, i32, i32, i32
  }
}

</mosaic_0001>

<llo_original>
// kernel: tpu_custom_call.1
$region0: #{tpu_custom_call.1}
  #allocation0 [shape = 'u32[]', space=smem, size = 0x4, offset = 0x4, fixed_abs, tag = 'smem constant byte address 0x4 - core index']
  #allocation1 [shape = 'u32[144,128]{1,0:T(1,128)}', space=vmem, size = 0x12000, scoped, tag = 'internal scratch']
  %s0 = inlined_call_operand.vmem [shape: f32[2,32,32,3], index: 0, kind: input, shape index: {}]
  %s1 = inlined_call_operand.vmem [shape: bf16[3,9,64], index: 1, kind: input, shape index: {}]
  %s2 = inlined_call_operand.vmem [shape: f32[1,64], index: 2, kind: input, shape index: {}]
  %s3 = inlined_call_operand.hbm [shape: f32[2,32,32,64], index: 3, kind: output, shape index: {}]
  %s4 = sld [smem:[#allocation0]]
  $region45: #{tpu_custom_call.1} parent=0
    _
  %s6 = ssub.s32 1, %s4
  %s7 = scalar_select 0, %s6, %s4
  $region1: #{tpu_custom_call.1} parent=0
    #allocation2 [shape = 'u8[1048576]{0}', space=vmem, size = 0x100000, scoped, tag = 'output window, operand 0']
    #allocation3 [shape = 's32[2]{0}', space=sflag, size = 0x8, scoped, tag = 'scoped memory for tpu_custom_call.1']
    %8 = vsyncpa [#allocation3], 0
    %s9 = scalar_lea.sflag [#allocation3], 1
    %10 = vsyncpa %s9, 0
    loop: start=0, step=1, limit=4
    $region2: #{tpu_custom_call.1} parent=1 // loop_pre_header
      _
    $region3: #{tpu_custom_call.1} parent=1 // loop_header
      %s12 = sphi 0, %s16
      %p13 = scmp.ge.s32.totalorder %s12, 4
      %s19 = sphi 0, %s31
      %s20 = sphi 0, %s27
      %s21 = sphi 0, %s19
      %s22 = sphi 0, %s20
      %s23 = sphi 0, %s21
      %s24 = sphi 0, %s22
      %s34 = sphi 0, %s36
      %s37 = sphi 0, %s34
      %s38 = sphi 0, %s37
      %s54 = sphi 0, %s38
      %s60 = sphi 0, %s62
      %s63 = sphi 0, %s60
      %s64 = sphi 0, %s63
      %s80 = sphi 0, %s64
      %s86 = sphi 0, %s88
      %s89 = sphi 0, %s86
      %s90 = sphi 0, %s89
      %s106 = sphi 0, %s90
      %s114 = sphi 0, %s116
      %s117 = sphi 0, %s114
      %s118 = sphi 0, %s117
      %s134 = sphi 0, %s118
    $region4: #{tpu_custom_call.1} parent=1 // loop_header_branch
      %15 = sbr.rel (%p13) target = $region8
    $region5: #{tpu_custom_call.1} parent=1 // loop_body
      %s17 = ssub.s32 %s12, 1
      %s18 = ssub.s32 %s12, 2
      %s25 = sadd.s32 1, %s20
      %p26 = scmp.ge.s32.totalorder %s25, 2
      %s27 = scalar_select %p26, 0, %s25
      %s28 = sadd.s32 1, %s19
      %s29 = scalar_select %p26, %s28, %s19
      %p30 = scmp.ge.s32.totalorder %s29, 1
      %s31 = scalar_select %p30, 0, %s29
      %s32 = ssub.s32 %s20, %s27
      %p33 = scmp.eq.s32.totalorder %s32, 0
      %s35 = sadd.s32 %s34, 1
      %s36 = scalar_select %p33, %s34, %s35
      %p39 = pneg %p33
      %p40 = scmp.eq.s32.totalorder %s12, 1
      %p41 = por %p39, %p40
      %p42 = scmp.ne.s32.totalorder %s34, %s37
      %p43 = scmp.eq.s32.totalorder %s12, 0
      %p44 = por %p42, %p43
      %p45 = scmp.ne.s32.totalorder %s34, %s37
      %p46 = scmp.eq.s32.totalorder %s17, 1
      %p47 = por %p45, %p46
      %p48 = scmp.ne.s32.totalorder %s37, %s38
      %p49 = scmp.eq.s32.totalorder %s17, 0
      %p50 = por %p48, %p49
      %p51 = scmp.ne.s32.totalorder %s37, %s38
      %p52 = scmp.eq.s32.totalorder %s18, 1
      %p53 = por %p51, %p52
      %p55 = scmp.ne.s32.totalorder %s38, %s54
      %p56 = scmp.eq.s32.totalorder %s18, 0
      %p57 = por %p55, %p56
      %s58 = ssub.s32 %s19, %s31
      %p59 = scmp.eq.s32.totalorder %s58, 0
      %s61 = sadd.s32 %s60, 1
      %s62 = scalar_select %p59, %s60, %s61
      %p65 = pneg %p59
      %p66 = scmp.eq.s32.totalorder %s12, 1
      %p67 = por %p65, %p66
      %p68 = scmp.ne.s32.totalorder %s60, %s63
      %p69 = scmp.eq.s32.totalorder %s12, 0
      %p70 = por %p68, %p69
      %p71 = scmp.ne.s32.totalorder %s60, %s63
      %p72 = scmp.eq.s32.totalorder %s17, 1
      %p73 = por %p71, %p72
      %p74 = scmp.ne.s32.totalorder %s63, %s64
      %p75 = scmp.eq.s32.totalorder %s17, 0
      %p76 = por %p74, %p75
      %p77 = scmp.ne.s32.totalorder %s63, %s64
      %p78 = scmp.eq.s32.totalorder %s18, 1
      %p79 = por %p77, %p78
      %p81 = scmp.ne.s32.totalorder %s64, %s80
      %p82 = scmp.eq.s32.totalorder %s18, 0
      %p83 = por %p81, %p82
      %s84 = ssub.s32 %s19, %s31
      %p85 = scmp.eq.s32.totalorder %s84, 0
      %s87 = sadd.s32 %s86, 1
      %s88 = scalar_select %p85, %s86, %s87
      %p91 = pneg %p85
      %p92 = scmp.eq.s32.totalorder %s12, 1
      %p93 = por %p91, %p92
      %p94 = scmp.ne.s32.totalorder %s86, %s89
      %p95 = scmp.eq.s32.totalorder %s12, 0
      %p96 = por %p94, %p95
      %p97 = scmp.ne.s32.totalorder %s86, %s89
      %p98 = scmp.eq.s32.totalorder %s17, 1
      %p99 = por %p97, %p98
      %p100 = scmp.ne.s32.totalorder %s89, %s90
      %p101 = scmp.eq.s32.totalorder %s17, 0
      %p102 = por %p100, %p101
      %p103 = scmp.ne.s32.totalorder %s89, %s90
      %p104 = scmp.eq.s32.totalorder %s18, 1
      %p105 = por %p103, %p104
      %p107 = scmp.ne.s32.totalorder %s90, %s106
      %p108 = scmp.eq.s32.totalorder %s18, 0
      %p109 = por %p107, %p108
      %s110 = ssub.s32 %s20, %s27
      %s111 = ssub.s32 %s19, %s31
      %s112 = sor.u32 %s110, %s111
      %p113 = scmp.eq.s32.totalorder %s112, 0
      %s115 = sadd.s32 %s114, 1
      %s116 = scalar_select %p113, %s114, %s115
      %p119 = pneg %p113
      %p120 = scmp.eq.s32.totalorder %s12, 1
      %p121 = por %p119, %p120
      %p122 = scmp.ne.s32.totalorder %s114, %s117
      %p123 = scmp.eq.s32.totalorder %s12, 0
      %p124 = por %p122, %p123
      %p125 = scmp.ne.s32.totalorder %s114, %s117
      %p126 = scmp.eq.s32.totalorder %s17, 1
      %p127 = por %p125, %p126
      %p128 = scmp.ne.s32.totalorder %s117, %s118
      %p129 = scmp.eq.s32.totalorder %s17, 0
      %p130 = por %p128, %p129
      %p131 = scmp.ne.s32.totalorder %s117, %s118
      %p132 = scmp.eq.s32.totalorder %s18, 1
      %p133 = por %p131, %p132
      %p135 = scmp.ne.s32.totalorder %s118, %s134
      %p136 = scmp.eq.s32.totalorder %s18, 0
      %p137 = por %p135, %p136
      %p138 = scmp.le.s32.totalorder 1, %s12
      %p139 = scmp.lt.s32.totalorder %s12, 3
      %p140 = pnand %p138, %p139
      %p141 = pneg %p140
      // Predicated region
      $region9: #{tpu_custom_call.1} parent=5 // pred_check
        _
      $region10: #{tpu_custom_call.1} parent=5 // pred_check_branch
        %143 = sbr.rel (%p140) target = $region12
      $region11: #{tpu_custom_call.1} parent=5 // pred_region
        %s144 = ssub.s32 %s12, 1
        // Predicated region
        $region13: #{tpu_custom_call.1} parent=11 // pred_check
          %p145 = pneg %p76
        $region14: #{tpu_custom_call.1} parent=11 // pred_check_branch
          %147 = sbr.rel (%p145) target = $region16
        $region15: #{tpu_custom_call.1} parent=11 // pred_region
          %p148 = scmp.lt.s32.totalorder %s21, 0
          %s149 = scalar_select %p148, %s21, 0
          %s150 = smul.addr %s149, 4
          %s151 = scalar_lea.vmem %s1, %s150
        $region16: #{tpu_custom_call.1} parent=11 // pred_fallthru
          _
        // Predicated region
        $region17: #{tpu_custom_call.1} parent=11 // pred_check
          %p152 = pneg %p102
        $region18: #{tpu_custom_call.1} parent=11 // pred_check_branch
          %154 = sbr.rel (%p152) target = $region20
        $region19: #{tpu_custom_call.1} parent=11 // pred_region
          %p155 = scmp.lt.s32.totalorder %s21, 0
          %s156 = scalar_select %p155, %s21, 0
          %s157 = scalar_lea.vmem %s2, %s156
        $region20: #{tpu_custom_call.1} parent=11 // pred_fallthru
          _
      $region12: #{tpu_custom_call.1} parent=5 // pred_fallthru
        _
      %p158 = scmp.lt.s32.totalorder %s12, 2
      // Predicated region
      $region21: #{tpu_custom_call.1} parent=5 // pred_check
        %p159 = pneg %p158
      $region22: #{tpu_custom_call.1} parent=5 // pred_check_branch
        %161 = sbr.rel (%p159) target = $region24
      $region23: #{tpu_custom_call.1} parent=5 // pred_region
        // Predicated region
        $region25: #{tpu_custom_call.1} parent=23 // pred_check
          %p162 = pneg %p44
        $region26: #{tpu_custom_call.1} parent=23 // pred_check_branch
          %164 = sbr.rel (%p162) target = $region28
        $region27: #{tpu_custom_call.1} parent=23 // pred_region
          %p165 = scmp.lt.s32.totalorder %s20, 1
          %s166 = scalar_select %p165, %s20, 1
          %s167 = smul.addr %s166, 128
          %s168 = smul.addr %s167, 8
          %s169 = scalar_lea.vmem %s0, %s168
        $region28: #{tpu_custom_call.1} parent=23 // pred_fallthru
          _
      $region24: #{tpu_custom_call.1} parent=5 // pred_fallthru
        _
      %p170 = scmp.le.s32.totalorder 1, %s12
      %p171 = scmp.lt.s32.totalorder %s12, 3
      %p172 = pnand %p170, %p171
      %p173 = pneg %p172
      // Predicated region
      $region29: #{tpu_custom_call.1} parent=5 // pred_check
        _
      $region30: #{tpu_custom_call.1} parent=5 // pred_check_branch
        %175 = sbr.rel (%p172) target = $region32
      $region31: #{tpu_custom_call.1} parent=5 // pred_region
        %s176 = ssub.s32 %s12, 1
        %p177 = scmp.lt.s32.totalorder %s22, 1
        %s178 = scalar_select %p177, %s22, 1
        %s179 = smul.addr %s178, 128
        %s180 = smul.addr %s179, 8
        %s181 = scalar_lea.vmem %s0, %s180
        %p182 = pneg %p50
        %p183 = pneg %p47
        %p184 = scmp.lt.s32.totalorder %s21, 0
        %s185 = scalar_select %p184, %s21, 0
        %s186 = smul.addr %s185, 4
        %s187 = scalar_lea.vmem %s1, %s186
        %p188 = pneg %p76
        %p189 = pneg %p73
        %p190 = scmp.lt.s32.totalorder %s21, 0
        %s191 = scalar_select %p190, %s21, 0
        %s192 = scalar_lea.vmem %s2, %s191
        %p193 = pneg %p102
        %p194 = pneg %p99
        %p195 = pneg %p130
        %p196 = pneg %p127
        %s197 = sand.u32 %s117, 1
        %s198 = scalar_lea.sflag [#allocation3], %s197
        %s199 = sand.u32 %s117, 1
        %s200 = smul.addr %s199, 1024
        %s201 = scalar_lea.vmem [#allocation2], %s200
        %p202 = scmp.lt.s32.totalorder %s22, 1
        %s203 = scalar_select %p202, %s22, 1
        %s204 = smul.addr %s203, 128
        %s205 = smul.addr %s204, 8
        %s206 = scalar_lea.vmem %s0, %s205
        %p207 = scmp.lt.s32.totalorder %s21, 0
        %s208 = scalar_select %p207, %s21, 0
        %s209 = smul.addr %s208, 4
        %s210 = scalar_lea.vmem %s1, %s209
        %p211 = scmp.lt.s32.totalorder %s21, 0
        %s212 = scalar_select %p211, %s21, 0
        %s213 = scalar_lea.vmem %s2, %s212
        %v215 = vld [vmem:[%s206] sm:$0xff]
        %v216 = vld [vmem:[%s206 + $0x8] sm:$0xff]
        %v217 = vld [vmem:[%s206 + $0x10] sm:$0xff]
        %v218 = vld [vmem:[%s206 + $0x18] sm:$0xff]
        %v219 = vld [vmem:[%s206 + $0x20] sm:$0xff]
        %v220 = vld [vmem:[%s206 + $0x28] sm:$0xff]
        %v221 = vld [vmem:[%s206 + $0x30] sm:$0xff]
        %v222 = vld [vmem:[%s206 + $0x38] sm:$0xff]
        %v223 = vld [vmem:[%s206 + $0x40] sm:$0xff]
        %v224 = vld [vmem:[%s206 + $0x48] sm:$0xff]
        %v225 = vld [vmem:[%s206 + $0x50] sm:$0xff]
        %v226 = vld [vmem:[%s206 + $0x58] sm:$0xff]
        %v227 = vld [vmem:[%s206 + $0x60] sm:$0xff]
        %v228 = vld [vmem:[%s206 + $0x68] sm:$0xff]
        %v229 = vld [vmem:[%s206 + $0x70] sm:$0xff]
        %v230 = vld [vmem:[%s206 + $0x78] sm:$0xff]
        %v231 = vld [vmem:[%s206 + $0x80] sm:$0xff]
        %v232 = vld [vmem:[%s206 + $0x88] sm:$0xff]
        %v233 = vld [vmem:[%s206 + $0x90] sm:$0xff]
        %v234 = vld [vmem:[%s206 + $0x98] sm:$0xff]
        %v235 = vld [vmem:[%s206 + $0xa0] sm:$0xff]
        %v236 = vld [vmem:[%s206 + $0xa8] sm:$0xff]
        %v237 = vld [vmem:[%s206 + $0xb0] sm:$0xff]
        %v238 = vld [vmem:[%s206 + $0xb8] sm:$0xff]
        %v239 = vld [vmem:[%s206 + $0xc0] sm:$0xff]
        %v240 = vld [vmem:[%s206 + $0xc8] sm:$0xff]
        %v241 = vld [vmem:[%s206 + $0xd0] sm:$0xff]
        %v242 = vld [vmem:[%s206 + $0xd8] sm:$0xff]
        %v243 = vld [vmem:[%s206 + $0xe0] sm:$0xff]
        %v244 = vld [vmem:[%s206 + $0xe8] sm:$0xff]
        %v245 = vld [vmem:[%s206 + $0xf0] sm:$0xff]
        %v246 = vld [vmem:[%s206 + $0xf8] sm:$0xff]
        %v247 = vld [vmem:[%s206 + $0x100] sm:$0xff]
        %v248 = vld [vmem:[%s206 + $0x108] sm:$0xff]
        %v249 = vld [vmem:[%s206 + $0x110] sm:$0xff]
        %v250 = vld [vmem:[%s206 + $0x118] sm:$0xff]
        %v251 = vld [vmem:[%s206 + $0x120] sm:$0xff]
        %v252 = vld [vmem:[%s206 + $0x128] sm:$0xff]
        %v253 = vld [vmem:[%s206 + $0x130] sm:$0xff]
        %v254 = vld [vmem:[%s206 + $0x138] sm:$0xff]
        %v255 = vld [vmem:[%s206 + $0x140] sm:$0xff]
        %v256 = vld [vmem:[%s206 + $0x148] sm:$0xff]
        %v257 = vld [vmem:[%s206 + $0x150] sm:$0xff]
        %v258 = vld [vmem:[%s206 + $0x158] sm:$0xff]
        %v259 = vld [vmem:[%s206 + $0x160] sm:$0xff]
        %v260 = vld [vmem:[%s206 + $0x168] sm:$0xff]
        %v261 = vld [vmem:[%s206 + $0x170] sm:$0xff]
        %v262 = vld [vmem:[%s206 + $0x178] sm:$0xff]
        %v263 = vld [vmem:[%s206 + $0x180] sm:$0xff]
        %v264 = vld [vmem:[%s206 + $0x188] sm:$0xff]
        %v265 = vld [vmem:[%s206 + $0x190] sm:$0xff]
        %v266 = vld [vmem:[%s206 + $0x198] sm:$0xff]
        %v267 = vld [vmem:[%s206 + $0x1a0] sm:$0xff]
        %v268 = vld [vmem:[%s206 + $0x1a8] sm:$0xff]
        %v269 = vld [vmem:[%s206 + $0x1b0] sm:$0xff]
        %v270 = vld [vmem:[%s206 + $0x1b8] sm:$0xff]
        %v271 = vld [vmem:[%s206 + $0x1c0] sm:$0xff]
        %v272 = vld [vmem:[%s206 + $0x1c8] sm:$0xff]
        %v273 = vld [vmem:[%s206 + $0x1d0] sm:$0xff]
        %v274 = vld [vmem:[%s206 + $0x1d8] sm:$0xff]
        %v275 = vld [vmem:[%s206 + $0x1e0] sm:$0xff]
        %v276 = vld [vmem:[%s206 + $0x1e8] sm:$0xff]
        %v277 = vld [vmem:[%s206 + $0x1f0] sm:$0xff]
        %v278 = vld [vmem:[%s206 + $0x1f8] sm:$0xff]
        %v279 = vld [vmem:[%s206 + $0x200] sm:$0xff]
        %v280 = vld [vmem:[%s206 + $0x208] sm:$0xff]
        %v281 = vld [vmem:[%s206 + $0x210] sm:$0xff]
        %v282 = vld [vmem:[%s206 + $0x218] sm:$0xff]
        %v283 = vld [vmem:[%s206 + $0x220] sm:$0xff]
        %v284 = vld [vmem:[%s206 + $0x228] sm:$0xff]
        %v285 = vld [vmem:[%s206 + $0x230] sm:$0xff]
        %v286 = vld [vmem:[%s206 + $0x238] sm:$0xff]
        %v287 = vld [vmem:[%s206 + $0x240] sm:$0xff]
        %v288 = vld [vmem:[%s206 + $0x248] sm:$0xff]
        %v289 = vld [vmem:[%s206 + $0x250] sm:$0xff]
        %v290 = vld [vmem:[%s206 + $0x258] sm:$0xff]
        %v291 = vld [vmem:[%s206 + $0x260] sm:$0xff]
        %v292 = vld [vmem:[%s206 + $0x268] sm:$0xff]
        %v293 = vld [vmem:[%s206 + $0x270] sm:$0xff]
        %v294 = vld [vmem:[%s206 + $0x278] sm:$0xff]
        %v295 = vld [vmem:[%s206 + $0x280] sm:$0xff]
        %v296 = vld [vmem:[%s206 + $0x288] sm:$0xff]
        %v297 = vld [vmem:[%s206 + $0x290] sm:$0xff]
        %v298 = vld [vmem:[%s206 + $0x298] sm:$0xff]
        %v299 = vld [vmem:[%s206 + $0x2a0] sm:$0xff]
        %v300 = vld [vmem:[%s206 + $0x2a8] sm:$0xff]
        %v301 = vld [vmem:[%s206 + $0x2b0] sm:$0xff]
        %v302 = vld [vmem:[%s206 + $0x2b8] sm:$0xff]
        %v303 = vld [vmem:[%s206 + $0x2c0] sm:$0xff]
        %v304 = vld [vmem:[%s206 + $0x2c8] sm:$0xff]
        %v305 = vld [vmem:[%s206 + $0x2d0] sm:$0xff]
        %v306 = vld [vmem:[%s206 + $0x2d8] sm:$0xff]
        %v307 = vld [vmem:[%s206 + $0x2e0] sm:$0xff]
        %v308 = vld [vmem:[%s206 + $0x2e8] sm:$0xff]
        %v309 = vld [vmem:[%s206 + $0x2f0] sm:$0xff]
        %v310 = vld [vmem:[%s206 + $0x2f8] sm:$0xff]
        %v311 = vld [vmem:[%s206 + $0x300] sm:$0xff]
        %v312 = vld [vmem:[%s206 + $0x308] sm:$0xff]
        %v313 = vld [vmem:[%s206 + $0x310] sm:$0xff]
        %v314 = vld [vmem:[%s206 + $0x318] sm:$0xff]
        %v315 = vld [vmem:[%s206 + $0x320] sm:$0xff]
        %v316 = vld [vmem:[%s206 + $0x328] sm:$0xff]
        %v317 = vld [vmem:[%s206 + $0x330] sm:$0xff]
        %v318 = vld [vmem:[%s206 + $0x338] sm:$0xff]
        %v319 = vld [vmem:[%s206 + $0x340] sm:$0xff]
        %v320 = vld [vmem:[%s206 + $0x348] sm:$0xff]
        %v321 = vld [vmem:[%s206 + $0x350] sm:$0xff]
        %v322 = vld [vmem:[%s206 + $0x358] sm:$0xff]
        %v323 = vld [vmem:[%s206 + $0x360] sm:$0xff]
        %v324 = vld [vmem:[%s206 + $0x368] sm:$0xff]
        %v325 = vld [vmem:[%s206 + $0x370] sm:$0xff]
        %v326 = vld [vmem:[%s206 + $0x378] sm:$0xff]
        %v327 = vld [vmem:[%s206 + $0x380] sm:$0xff]
        %v328 = vld [vmem:[%s206 + $0x388] sm:$0xff]
        %v329 = vld [vmem:[%s206 + $0x390] sm:$0xff]
        %v330 = vld [vmem:[%s206 + $0x398] sm:$0xff]
        %v331 = vld [vmem:[%s206 + $0x3a0] sm:$0xff]
        %v332 = vld [vmem:[%s206 + $0x3a8] sm:$0xff]
        %v333 = vld [vmem:[%s206 + $0x3b0] sm:$0xff]
        %v334 = vld [vmem:[%s206 + $0x3b8] sm:$0xff]
        %v335 = vld [vmem:[%s206 + $0x3c0] sm:$0xff]
        %v336 = vld [vmem:[%s206 + $0x3c8] sm:$0xff]
        %v337 = vld [vmem:[%s206 + $0x3d0] sm:$0xff]
        %v338 = vld [vmem:[%s206 + $0x3d8] sm:$0xff]
        %v339 = vld [vmem:[%s206 + $0x3e0] sm:$0xff]
        %v340 = vld [vmem:[%s206 + $0x3e8] sm:$0xff]
        %v341 = vld [vmem:[%s206 + $0x3f0] sm:$0xff]
        %v342 = vld [vmem:[%s206 + $0x3f8] sm:$0xff]
        %v343 = vpack.c.bf16 %v216, %v215
        %v344 = vpack.c.bf16 %v218, %v217
        %v345 = vpack.c.bf16 %v220, %v219
        %v346 = vpack.c.bf16 %v222, %v221
        %v347 = vpack.c.bf16 %v224, %v223
        %v348 = vpack.c.bf16 %v226, %v225
        %v349 = vpack.c.bf16 %v228, %v227
        %v350 = vpack.c.bf16 %v230, %v229
        %v351 = vpack.c.bf16 %v232, %v231
        %v352 = vpack.c.bf16 %v234, %v233
        %v353 = vpack.c.bf16 %v236, %v235
        %v354 = vpack.c.bf16 %v238, %v237
        %v355 = vpack.c.bf16 %v240, %v239
        %v356 = vpack.c.bf16 %v242, %v241
        %v357 = vpack.c.bf16 %v244, %v243
        %v358 = vpack.c.bf16 %v246, %v245
        %v359 = vpack.c.bf16 %v248, %v247
        %v360 = vpack.c.bf16 %v250, %v249
        %v361 = vpack.c.bf16 %v252, %v251
        %v362 = vpack.c.bf16 %v254, %v253
        %v363 = vpack.c.bf16 %v256, %v255
        %v364 = vpack.c.bf16 %v258, %v257
        %v365 = vpack.c.bf16 %v260, %v259
        %v366 = vpack.c.bf16 %v262, %v261
        %v367 = vpack.c.bf16 %v264, %v263
        %v368 = vpack.c.bf16 %v266, %v265
        %v369 = vpack.c.bf16 %v268, %v267
        %v370 = vpack.c.bf16 %v270, %v269
        %v371 = vpack.c.bf16 %v272, %v271
        %v372 = vpack.c.bf16 %v274, %v273
        %v373 = vpack.c.bf16 %v276, %v275
        %v374 = vpack.c.bf16 %v278, %v277
        %v375 = vpack.c.bf16 %v280, %v279
        %v376 = vpack.c.bf16 %v282, %v281
        %v377 = vpack.c.bf16 %v284, %v283
        %v378 = vpack.c.bf16 %v286, %v285
        %v379 = vpack.c.bf16 %v288, %v287
        %v380 = vpack.c.bf16 %v290, %v289
        %v381 = vpack.c.bf16 %v292, %v291
        %v382 = vpack.c.bf16 %v294, %v293
        %v383 = vpack.c.bf16 %v296, %v295
        %v384 = vpack.c.bf16 %v298, %v297
        %v385 = vpack.c.bf16 %v300, %v299
        %v386 = vpack.c.bf16 %v302, %v301
        %v387 = vpack.c.bf16 %v304, %v303
        %v388 = vpack.c.bf16 %v306, %v305
        %v389 = vpack.c.bf16 %v308, %v307
        %v390 = vpack.c.bf16 %v310, %v309
        %v391 = vpack.c.bf16 %v312, %v311
        %v392 = vpack.c.bf16 %v314, %v313
        %v393 = vpack.c.bf16 %v316, %v315
        %v394 = vpack.c.bf16 %v318, %v317
        %v395 = vpack.c.bf16 %v320, %v319
        %v396 = vpack.c.bf16 %v322, %v321
        %v397 = vpack.c.bf16 %v324, %v323
        %v398 = vpack.c.bf16 %v326, %v325
        %v399 = vpack.c.bf16 %v328, %v327
        %v400 = vpack.c.bf16 %v330, %v329
        %v401 = vpack.c.bf16 %v332, %v331
        %v402 = vpack.c.bf16 %v334, %v333
        %v403 = vpack.c.bf16 %v336, %v335
        %v404 = vpack.c.bf16 %v338, %v337
        %v405 = vpack.c.bf16 %v340, %v339
        %v406 = vpack.c.bf16 %v342, %v341
        %vm407 = vsmask.f32 256
        %v409 = vshrl.u32 0, 16
        %v411 = vrot.slane %v409, 7
        %v412 = vshll.u32 0, 16
        %v414 = vor.u32 %v411, %v412
        %v415 = vsel %vm407, %v411, %v414
        %v417 = vshrl.u32 %v343, 16
        %v419 = vrot.slane %v417, 7
        %v420 = vshll.u32 %v343, 16
        %v422 = vor.u32 %v419, %v420
        %v424 = vshrl.u32 %v344, 16
        %v426 = vrot.slane %v424, 7
        %v427 = vshll.u32 %v344, 16
        %v429 = vor.u32 %v426, %v427
        %v430 = vsel %vm407, %v419, %v429
        %v432 = vshrl.u32 %v345, 16
        %v434 = vrot.slane %v432, 7
        %v435 = vshll.u32 %v345, 16
        %v437 = vor.u32 %v434, %v435
        %v439 = vshrl.u32 %v346, 16
        %v441 = vrot.slane %v439, 7
        %v442 = vshll.u32 %v346, 16
        %v444 = vor.u32 %v441, %v442
        %v445 = vsel %vm407, %v434, %v444
        %v447 = vshrl.u32 %v347, 16
        %v449 = vrot.slane %v447, 7
        %v450 = vshll.u32 %v347, 16
        %v452 = vor.u32 %v449, %v450
        %v454 = vshrl.u32 %v348, 16
        %v456 = vrot.slane %v454, 7
        %v457 = vshll.u32 %v348, 16
        %v459 = vor.u32 %v456, %v457
        %v460 = vsel %vm407, %v449, %v459
        %v462 = vshrl.u32 %v349, 16
        %v464 = vrot.slane %v462, 7
        %v465 = vshll.u32 %v349, 16
        %v467 = vor.u32 %v464, %v465
        %v469 = vshrl.u32 %v350, 16
        %v471 = vrot.slane %v469, 7
        %v472 = vshll.u32 %v350, 16
        %v474 = vor.u32 %v471, %v472
        %v475 = vsel %vm407, %v464, %v474
        %v477 = vshrl.u32 %v351, 16
        %v479 = vrot.slane %v477, 7
        %v480 = vshll.u32 %v351, 16
        %v482 = vor.u32 %v479, %v480
        %v484 = vshrl.u32 %v352, 16
        %v486 = vrot.slane %v484, 7
        %v487 = vshll.u32 %v352, 16
        %v489 = vor.u32 %v486, %v487
        %v490 = vsel %vm407, %v479, %v489
        %v492 = vshrl.u32 %v353, 16
        %v494 = vrot.slane %v492, 7
        %v495 = vshll.u32 %v353, 16
        %v497 = vor.u32 %v494, %v495
        %v499 = vshrl.u32 %v354, 16
        %v501 = vrot.slane %v499, 7
        %v502 = vshll.u32 %v354, 16
        %v504 = vor.u32 %v501, %v502
        %v505 = vsel %vm407, %v494, %v504
        %v507 = vshrl.u32 %v355, 16
        %v509 = vrot.slane %v507, 7
        %v510 = vshll.u32 %v355, 16
        %v512 = vor.u32 %v509, %v510
        %v514 = vshrl.u32 %v356, 16
        %v516 = vrot.slane %v514, 7
        %v517 = vshll.u32 %v356, 16
        %v519 = vor.u32 %v516, %v517
        %v520 = vsel %vm407, %v509, %v519
        %v522 = vshrl.u32 %v357, 16
        %v524 = vrot.slane %v522, 7
        %v525 = vshll.u32 %v357, 16
        %v527 = vor.u32 %v524, %v525
        %v529 = vshrl.u32 %v358, 16
        %v531 = vrot.slane %v529, 7
        %v532 = vshll.u32 %v358, 16
        %v534 = vor.u32 %v531, %v532
        %v535 = vsel %vm407, %v524, %v534
        %v537 = vshrl.u32 %v359, 16
        %v539 = vrot.slane %v537, 7
        %v540 = vshll.u32 %v359, 16
        %v542 = vor.u32 %v539, %v540
        %v544 = vshrl.u32 %v360, 16
        %v546 = vrot.slane %v544, 7
        %v547 = vshll.u32 %v360, 16
        %v549 = vor.u32 %v546, %v547
        %v550 = vsel %vm407, %v539, %v549
        %v552 = vshrl.u32 %v361, 16
        %v554 = vrot.slane %v552, 7
        %v555 = vshll.u32 %v361, 16
        %v557 = vor.u32 %v554, %v555
        %v559 = vshrl.u32 %v362, 16
        %v561 = vrot.slane %v559, 7
        %v562 = vshll.u32 %v362, 16
        %v564 = vor.u32 %v561, %v562
        %v565 = vsel %vm407, %v554, %v564
        %v567 = vshrl.u32 %v363, 16
        %v569 = vrot.slane %v567, 7
        %v570 = vshll.u32 %v363, 16
        %v572 = vor.u32 %v569, %v570
        %v574 = vshrl.u32 %v364, 16
        %v576 = vrot.slane %v574, 7
        %v577 = vshll.u32 %v364, 16
        %v579 = vor.u32 %v576, %v577
        %v580 = vsel %vm407, %v569, %v579
        %v582 = vshrl.u32 %v365, 16
        %v584 = vrot.slane %v582, 7
        %v585 = vshll.u32 %v365, 16
        %v587 = vor.u32 %v584, %v585
        %v589 = vshrl.u32 %v366, 16
        %v591 = vrot.slane %v589, 7
        %v592 = vshll.u32 %v366, 16
        %v594 = vor.u32 %v591, %v592
        %v595 = vsel %vm407, %v584, %v594
        %v597 = vshrl.u32 %v367, 16
        %v599 = vrot.slane %v597, 7
        %v600 = vshll.u32 %v367, 16
        %v602 = vor.u32 %v599, %v600
        %v604 = vshrl.u32 %v368, 16
        %v606 = vrot.slane %v604, 7
        %v607 = vshll.u32 %v368, 16
        %v609 = vor.u32 %v606, %v607
        %v610 = vsel %vm407, %v599, %v609
        %v612 = vshrl.u32 %v369, 16
        %v614 = vrot.slane %v612, 7
        %v615 = vshll.u32 %v369, 16
        %v617 = vor.u32 %v614, %v615
        %v619 = vshrl.u32 %v370, 16
        %v621 = vrot.slane %v619, 7
        %v622 = vshll.u32 %v370, 16
        %v624 = vor.u32 %v621, %v622
        %v625 = vsel %vm407, %v614, %v624
        %v627 = vshrl.u32 %v371, 16
        %v629 = vrot.slane %v627, 7
        %v630 = vshll.u32 %v371, 16
        %v632 = vor.u32 %v629, %v630
        %v634 = vshrl.u32 %v372, 16
        %v636 = vrot.slane %v634, 7
        %v637 = vshll.u32 %v372, 16
        %v639 = vor.u32 %v636, %v637
        %v640 = vsel %vm407, %v629, %v639
        %v642 = vshrl.u32 %v373, 16
        %v644 = vrot.slane %v642, 7
        %v645 = vshll.u32 %v373, 16
        %v647 = vor.u32 %v644, %v645
        %v649 = vshrl.u32 %v374, 16
        %v651 = vrot.slane %v649, 7
        %v652 = vshll.u32 %v374, 16
        %v654 = vor.u32 %v651, %v652
        %v655 = vsel %vm407, %v644, %v654
        %v657 = vshrl.u32 %v375, 16
        %v659 = vrot.slane %v657, 7
        %v660 = vshll.u32 %v375, 16
        %v662 = vor.u32 %v659, %v660
        %v664 = vshrl.u32 %v376, 16
        %v666 = vrot.slane %v664, 7
        %v667 = vshll.u32 %v376, 16
        %v669 = vor.u32 %v666, %v667
        %v670 = vsel %vm407, %v659, %v669
        %v672 = vshrl.u32 %v377, 16
        %v674 = vrot.slane %v672, 7
        %v675 = vshll.u32 %v377, 16
        %v677 = vor.u32 %v674, %v675
        %v679 = vshrl.u32 %v378, 16
        %v681 = vrot.slane %v679, 7
        %v682 = vshll.u32 %v378, 16
        %v684 = vor.u32 %v681, %v682
        %v685 = vsel %vm407, %v674, %v684
        %v687 = vshrl.u32 %v379, 16
        %v689 = vrot.slane %v687, 7
        %v690 = vshll.u32 %v379, 16
        %v692 = vor.u32 %v689, %v690
        %v694 = vshrl.u32 %v380, 16
        %v696 = vrot.slane %v694, 7
        %v697 = vshll.u32 %v380, 16
        %v699 = vor.u32 %v696, %v697
        %v700 = vsel %vm407, %v689, %v699
        %v702 = vshrl.u32 %v381, 16
        %v704 = vrot.slane %v702, 7
        %v705 = vshll.u32 %v381, 16
        %v707 = vor.u32 %v704, %v705
        %v709 = vshrl.u32 %v382, 16
        %v711 = vrot.slane %v709, 7
        %v712 = vshll.u32 %v382, 16
        %v714 = vor.u32 %v711, %v712
        %v715 = vsel %vm407, %v704, %v714
        %v717 = vshrl.u32 %v383, 16
        %v719 = vrot.slane %v717, 7
        %v720 = vshll.u32 %v383, 16
        %v722 = vor.u32 %v719, %v720
        %v724 = vshrl.u32 %v384, 16
        %v726 = vrot.slane %v724, 7
        %v727 = vshll.u32 %v384, 16
        %v729 = vor.u32 %v726, %v727
        %v730 = vsel %vm407, %v719, %v729
        %v732 = vshrl.u32 %v385, 16
        %v734 = vrot.slane %v732, 7
        %v735 = vshll.u32 %v385, 16
        %v737 = vor.u32 %v734, %v735
        %v739 = vshrl.u32 %v386, 16
        %v741 = vrot.slane %v739, 7
        %v742 = vshll.u32 %v386, 16
        %v744 = vor.u32 %v741, %v742
        %v745 = vsel %vm407, %v734, %v744
        %v747 = vshrl.u32 %v387, 16
        %v749 = vrot.slane %v747, 7
        %v750 = vshll.u32 %v387, 16
        %v752 = vor.u32 %v749, %v750
        %v754 = vshrl.u32 %v388, 16
        %v756 = vrot.slane %v754, 7
        %v757 = vshll.u32 %v388, 16
        %v759 = vor.u32 %v756, %v757
        %v760 = vsel %vm407, %v749, %v759
        %v762 = vshrl.u32 %v389, 16
        %v764 = vrot.slane %v762, 7
        %v765 = vshll.u32 %v389, 16
        %v767 = vor.u32 %v764, %v765
        %v769 = vshrl.u32 %v390, 16
        %v771 = vrot.slane %v769, 7
        %v772 = vshll.u32 %v390, 16
        %v774 = vor.u32 %v771, %v772
        %v775 = vsel %vm407, %v764, %v774
        %v777 = vshrl.u32 %v391, 16
        %v779 = vrot.slane %v777, 7
        %v780 = vshll.u32 %v391, 16
        %v782 = vor.u32 %v779, %v780
        %v784 = vshrl.u32 %v392, 16
        %v786 = vrot.slane %v784, 7
        %v787 = vshll.u32 %v392, 16
        %v789 = vor.u32 %v786, %v787
        %v790 = vsel %vm407, %v779, %v789
        %v792 = vshrl.u32 %v393, 16
        %v794 = vrot.slane %v792, 7
        %v795 = vshll.u32 %v393, 16
        %v797 = vor.u32 %v794, %v795
        %v799 = vshrl.u32 %v394, 16
        %v801 = vrot.slane %v799, 7
        %v802 = vshll.u32 %v394, 16
        %v804 = vor.u32 %v801, %v802
        %v805 = vsel %vm407, %v794, %v804
        %v807 = vshrl.u32 %v395, 16
        %v809 = vrot.slane %v807, 7
        %v810 = vshll.u32 %v395, 16
        %v812 = vor.u32 %v809, %v810
        %v814 = vshrl.u32 %v396, 16
        %v816 = vrot.slane %v814, 7
        %v817 = vshll.u32 %v396, 16
        %v819 = vor.u32 %v816, %v817
        %v820 = vsel %vm407, %v809, %v819
        %v822 = vshrl.u32 %v397, 16
        %v824 = vrot.slane %v822, 7
        %v825 = vshll.u32 %v397, 16
        %v827 = vor.u32 %v824, %v825
        %v829 = vshrl.u32 %v398, 16
        %v831 = vrot.slane %v829, 7
        %v832 = vshll.u32 %v398, 16
        %v834 = vor.u32 %v831, %v832
        %v835 = vsel %vm407, %v824, %v834
        %v837 = vshrl.u32 %v399, 16
        %v839 = vrot.slane %v837, 7
        %v840 = vshll.u32 %v399, 16
        %v842 = vor.u32 %v839, %v840
        %v844 = vshrl.u32 %v400, 16
        %v846 = vrot.slane %v844, 7
        %v847 = vshll.u32 %v400, 16
        %v849 = vor.u32 %v846, %v847
        %v850 = vsel %vm407, %v839, %v849
        %v852 = vshrl.u32 %v401, 16
        %v854 = vrot.slane %v852, 7
        %v855 = vshll.u32 %v401, 16
        %v857 = vor.u32 %v854, %v855
        %v859 = vshrl.u32 %v402, 16
        %v861 = vrot.slane %v859, 7
        %v862 = vshll.u32 %v402, 16
        %v864 = vor.u32 %v861, %v862
        %v865 = vsel %vm407, %v854, %v864
        %v867 = vshrl.u32 %v403, 16
        %v869 = vrot.slane %v867, 7
        %v870 = vshll.u32 %v403, 16
        %v872 = vor.u32 %v869, %v870
        %v874 = vshrl.u32 %v404, 16
        %v876 = vrot.slane %v874, 7
        %v877 = vshll.u32 %v404, 16
        %v879 = vor.u32 %v876, %v877
        %v880 = vsel %vm407, %v869, %v879
        %v882 = vshrl.u32 %v405, 16
        %v884 = vrot.slane %v882, 7
        %v885 = vshll.u32 %v405, 16
        %v887 = vor.u32 %v884, %v885
        %v889 = vshrl.u32 %v406, 16
        %v891 = vrot.slane %v889, 7
        %v892 = vshll.u32 %v406, 16
        %v894 = vor.u32 %v891, %v892
        %v895 = vsel %vm407, %v884, %v894
        %vm962 = vcmask 1040384
        %vm963 = vmand %vm962, %vm407
        %v964 = vsel %vm963, 0, %v414
        %v965 = vsel %vm963, 0, %v422
        %v966 = vsel %vm963, 0, %v437
        %v967 = vsel %vm963, 0, %v452
        %v968 = vsel %vm963, 0, %v467
        %v969 = vsel %vm963, 0, %v482
        %v970 = vsel %vm963, 0, %v497
        %v971 = vsel %vm963, 0, %v512
        %v972 = vsel %vm963, 0, %v527
        %v973 = vsel %vm963, 0, %v542
        %v974 = vsel %vm963, 0, %v557
        %v975 = vsel %vm963, 0, %v572
        %v976 = vsel %vm963, 0, %v587
        %v977 = vsel %vm963, 0, %v602
        %v978 = vsel %vm963, 0, %v617
        %v979 = vsel %vm963, 0, %v632
        %v980 = vsel %vm963, 0, %v647
        %v981 = vsel %vm963, 0, %v662
        %v982 = vsel %vm963, 0, %v677
        %v983 = vsel %vm963, 0, %v692
        %v984 = vsel %vm963, 0, %v707
        %v985 = vsel %vm963, 0, %v722
        %v986 = vsel %vm963, 0, %v737
        %v987 = vsel %vm963, 0, %v752
        %v988 = vsel %vm963, 0, %v767
        %v989 = vsel %vm963, 0, %v782
        %v990 = vsel %vm963, 0, %v797
        %v991 = vsel %vm963, 0, %v812
        %v992 = vsel %vm963, 0, %v827
        %v993 = vsel %vm963, 0, %v842
        %v994 = vsel %vm963, 0, %v857
        %v995 = vsel %vm963, 0, %v872
        %v996 = vsel %vm963, 0, %v887
        %v997 = vsel %vm963, %v411, 0
        %v998 = vsel %vm963, %v426, 0
        %v999 = vsel %vm963, %v441, 0
        %v1000 = vsel %vm963, %v456, 0
        %v1001 = vsel %vm963, %v471, 0
        %v1002 = vsel %vm963, %v486, 0
        %v1003 = vsel %vm963, %v501, 0
        %v1004 = vsel %vm963, %v516, 0
        %v1005 = vsel %vm963, %v531, 0
        %v1006 = vsel %vm963, %v546, 0
        %v1007 = vsel %vm963, %v561, 0
        %v1008 = vsel %vm963, %v576, 0
        %v1009 = vsel %vm963, %v591, 0
        %v1010 = vsel %vm963, %v606, 0
        %v1011 = vsel %vm963, %v621, 0
        %v1012 = vsel %vm963, %v636, 0
        %v1013 = vsel %vm963, %v651, 0
        %v1014 = vsel %vm963, %v666, 0
        %v1015 = vsel %vm963, %v681, 0
        %v1016 = vsel %vm963, %v696, 0
        %v1017 = vsel %vm963, %v711, 0
        %v1018 = vsel %vm963, %v726, 0
        %v1019 = vsel %vm963, %v741, 0
        %v1020 = vsel %vm963, %v756, 0
        %v1021 = vsel %vm963, %v771, 0
        %v1022 = vsel %vm963, %v786, 0
        %v1023 = vsel %vm963, %v801, 0
        %v1024 = vsel %vm963, %v816, 0
        %v1025 = vsel %vm963, %v831, 0
        %v1026 = vsel %vm963, %v846, 0
        %v1027 = vsel %vm963, %v861, 0
        %v1028 = vsel %vm963, %v876, 0
        %v1029 = vsel %vm963, %v891, 0
        %vm1030 = vsmask.f32 7424
        %v1032 = vshrl.u32 %v964, 16
        %v1034 = vshll.u32 %v964, 16
        %v1036 = vrot.slane %v1034, 1
        %v1037 = vor.u32 %v1032, %v1036
        %v1039 = vshll.u32 %v415, 16
        %v1041 = vrot.slane %v1039, 1
        %v1042 = vsel %vm1030, %v1037, %v1041
        %v1043 = vshrl.u32 %v415, 16
        %v1045 = vor.u32 %v1043, %v1041
        %v1047 = vshll.u32 %v997, 16
        %v1049 = vrot.slane %v1047, 1
        %v1050 = vsel %vm1030, %v1045, %v1049
        %v1052 = vshrl.u32 %v965, 16
        %v1054 = vshll.u32 %v965, 16
        %v1056 = vrot.slane %v1054, 1
        %v1057 = vor.u32 %v1052, %v1056
        %v1059 = vshll.u32 %v430, 16
        %v1061 = vrot.slane %v1059, 1
        %v1062 = vsel %vm1030, %v1057, %v1061
        %v1063 = vshrl.u32 %v430, 16
        %v1065 = vor.u32 %v1063, %v1061
        %v1067 = vshll.u32 %v998, 16
        %v1069 = vrot.slane %v1067, 1
        %v1070 = vsel %vm1030, %v1065, %v1069
        %v1072 = vshrl.u32 %v966, 16
        %v1074 = vshll.u32 %v966, 16
        %v1076 = vrot.slane %v1074, 1
        %v1077 = vor.u32 %v1072, %v1076
        %v1079 = vshll.u32 %v445, 16
        %v1081 = vrot.slane %v1079, 1
        %v1082 = vsel %vm1030, %v1077, %v1081
        %v1083 = vshrl.u32 %v445, 16
        %v1085 = vor.u32 %v1083, %v1081
        %v1087 = vshll.u32 %v999, 16
        %v1089 = vrot.slane %v1087, 1
        %v1090 = vsel %vm1030, %v1085, %v1089
        %v1092 = vshrl.u32 %v967, 16
        %v1094 = vshll.u32 %v967, 16
        %v1096 = vrot.slane %v1094, 1
        %v1097 = vor.u32 %v1092, %v1096
        %v1099 = vshll.u32 %v460, 16
        %v1101 = vrot.slane %v1099, 1
        %v1102 = vsel %vm1030, %v1097, %v1101
        %v1103 = vshrl.u32 %v460, 16
        %v1105 = vor.u32 %v1103, %v1101
        %v1107 = vshll.u32 %v1000, 16
        %v1109 = vrot.slane %v1107, 1
        %v1110 = vsel %vm1030, %v1105, %v1109
        %v1112 = vshrl.u32 %v968, 16
        %v1114 = vshll.u32 %v968, 16
        %v1116 = vrot.slane %v1114, 1
        %v1117 = vor.u32 %v1112, %v1116
        %v1119 = vshll.u32 %v475, 16
        %v1121 = vrot.slane %v1119, 1
        %v1122 = vsel %vm1030, %v1117, %v1121
        %v1123 = vshrl.u32 %v475, 16
        %v1125 = vor.u32 %v1123, %v1121
        %v1127 = vshll.u32 %v1001, 16
        %v1129 = vrot.slane %v1127, 1
        %v1130 = vsel %vm1030, %v1125, %v1129
        %v1132 = vshrl.u32 %v969, 16
        %v1134 = vshll.u32 %v969, 16
        %v1136 = vrot.slane %v1134, 1
        %v1137 = vor.u32 %v1132, %v1136
        %v1139 = vshll.u32 %v490, 16
        %v1141 = vrot.slane %v1139, 1
        %v1142 = vsel %vm1030, %v1137, %v1141
        %v1143 = vshrl.u32 %v490, 16
        %v1145 = vor.u32 %v1143, %v1141
        %v1147 = vshll.u32 %v1002, 16
        %v1149 = vrot.slane %v1147, 1
        %v1150 = vsel %vm1030, %v1145, %v1149
        %v1152 = vshrl.u32 %v970, 16
        %v1154 = vshll.u32 %v970, 16
        %v1156 = vrot.slane %v1154, 1
        %v1157 = vor.u32 %v1152, %v1156
        %v1159 = vshll.u32 %v505, 16
        %v1161 = vrot.slane %v1159, 1
        %v1162 = vsel %vm1030, %v1157, %v1161
        %v1163 = vshrl.u32 %v505, 16
        %v1165 = vor.u32 %v1163, %v1161
        %v1167 = vshll.u32 %v1003, 16
        %v1169 = vrot.slane %v1167, 1
        %v1170 = vsel %vm1030, %v1165, %v1169
        %v1172 = vshrl.u32 %v971, 16
        %v1174 = vshll.u32 %v971, 16
        %v1176 = vrot.slane %v1174, 1
        %v1177 = vor.u32 %v1172, %v1176
        %v1179 = vshll.u32 %v520, 16
        %v1181 = vrot.slane %v1179, 1
        %v1182 = vsel %vm1030, %v1177, %v1181
        %v1183 = vshrl.u32 %v520, 16
        %v1185 = vor.u32 %v1183, %v1181
        %v1187 = vshll.u32 %v1004, 16
        %v1189 = vrot.slane %v1187, 1
        %v1190 = vsel %vm1030, %v1185, %v1189
        %v1192 = vshrl.u32 %v972, 16
        %v1194 = vshll.u32 %v972, 16
        %v1196 = vrot.slane %v1194, 1
        %v1197 = vor.u32 %v1192, %v1196
        %v1199 = vshll.u32 %v535, 16
        %v1201 = vrot.slane %v1199, 1
        %v1202 = vsel %vm1030, %v1197, %v1201
        %v1203 = vshrl.u32 %v535, 16
        %v1205 = vor.u32 %v1203, %v1201
        %v1207 = vshll.u32 %v1005, 16
        %v1209 = vrot.slane %v1207, 1
        %v1210 = vsel %vm1030, %v1205, %v1209
        %v1212 = vshrl.u32 %v973, 16
        %v1214 = vshll.u32 %v973, 16
        %v1216 = vrot.slane %v1214, 1
        %v1217 = vor.u32 %v1212, %v1216
        %v1219 = vshll.u32 %v550, 16
        %v1221 = vrot.slane %v1219, 1
        %v1222 = vsel %vm1030, %v1217, %v1221
        %v1223 = vshrl.u32 %v550, 16
        %v1225 = vor.u32 %v1223, %v1221
        %v1227 = vshll.u32 %v1006, 16
        %v1229 = vrot.slane %v1227, 1
        %v1230 = vsel %vm1030, %v1225, %v1229
        %v1232 = vshrl.u32 %v974, 16
        %v1234 = vshll.u32 %v974, 16
        %v1236 = vrot.slane %v1234, 1
        %v1237 = vor.u32 %v1232, %v1236
        %v1239 = vshll.u32 %v565, 16
        %v1241 = vrot.slane %v1239, 1
        %v1242 = vsel %vm1030, %v1237, %v1241
        %v1243 = vshrl.u32 %v565, 16
        %v1245 = vor.u32 %v1243, %v1241
        %v1247 = vshll.u32 %v1007, 16
        %v1249 = vrot.slane %v1247, 1
        %v1250 = vsel %vm1030, %v1245, %v1249
        %v1252 = vshrl.u32 %v975, 16
        %v1254 = vshll.u32 %v975, 16
        %v1256 = vrot.slane %v1254, 1
        %v1257 = vor.u32 %v1252, %v1256
        %v1259 = vshll.u32 %v580, 16
        %v1261 = vrot.slane %v1259, 1
        %v1262 = vsel %vm1030, %v1257, %v1261
        %v1263 = vshrl.u32 %v580, 16
        %v1265 = vor.u32 %v1263, %v1261
        %v1267 = vshll.u32 %v1008, 16
        %v1269 = vrot.slane %v1267, 1
        %v1270 = vsel %vm1030, %v1265, %v1269
        %v1272 = vshrl.u32 %v976, 16
        %v1274 = vshll.u32 %v976, 16
        %v1276 = vrot.slane %v1274, 1
        %v1277 = vor.u32 %v1272, %v1276
        %v1279 = vshll.u32 %v595, 16
        %v1281 = vrot.slane %v1279, 1
        %v1282 = vsel %vm1030, %v1277, %v1281
        %v1283 = vshrl.u32 %v595, 16
        %v1285 = vor.u32 %v1283, %v1281
        %v1287 = vshll.u32 %v1009, 16
        %v1289 = vrot.slane %v1287, 1
        %v1290 = vsel %vm1030, %v1285, %v1289
        %v1292 = vshrl.u32 %v977, 16
        %v1294 = vshll.u32 %v977, 16
        %v1296 = vrot.slane %v1294, 1
        %v1297 = vor.u32 %v1292, %v1296
        %v1299 = vshll.u32 %v610, 16
        %v1301 = vrot.slane %v1299, 1
        %v1302 = vsel %vm1030, %v1297, %v1301
        %v1303 = vshrl.u32 %v610, 16
        %v1305 = vor.u32 %v1303, %v1301
        %v1307 = vshll.u32 %v1010, 16
        %v1309 = vrot.slane %v1307, 1
        %v1310 = vsel %vm1030, %v1305, %v1309
        %v1312 = vshrl.u32 %v978, 16
        %v1314 = vshll.u32 %v978, 16
        %v1316 = vrot.slane %v1314, 1
        %v1317 = vor.u32 %v1312, %v1316
        %v1319 = vshll.u32 %v625, 16
        %v1321 = vrot.slane %v1319, 1
        %v1322 = vsel %vm1030, %v1317, %v1321
        %v1323 = vshrl.u32 %v625, 16
        %v1325 = vor.u32 %v1323, %v1321
        %v1327 = vshll.u32 %v1011, 16
        %v1329 = vrot.slane %v1327, 1
        %v1330 = vsel %vm1030, %v1325, %v1329
        %v1332 = vshrl.u32 %v979, 16
        %v1334 = vshll.u32 %v979, 16
        %v1336 = vrot.slane %v1334, 1
        %v1337 = vor.u32 %v1332, %v1336
        %v1339 = vshll.u32 %v640, 16
        %v1341 = vrot.slane %v1339, 1
        %v1342 = vsel %vm1030, %v1337, %v1341
        %v1343 = vshrl.u32 %v640, 16
        %v1345 = vor.u32 %v1343, %v1341
        %v1347 = vshll.u32 %v1012, 16
        %v1349 = vrot.slane %v1347, 1
        %v1350 = vsel %vm1030, %v1345, %v1349
        %v1352 = vshrl.u32 %v980, 16
        %v1354 = vshll.u32 %v980, 16
        %v1356 = vrot.slane %v1354, 1
        %v1357 = vor.u32 %v1352, %v1356
        %v1359 = vshll.u32 %v655, 16
        %v1361 = vrot.slane %v1359, 1
        %v1362 = vsel %vm1030, %v1357, %v1361
        %v1363 = vshrl.u32 %v655, 16
        %v1365 = vor.u32 %v1363, %v1361
        %v1367 = vshll.u32 %v1013, 16
        %v1369 = vrot.slane %v1367, 1
        %v1370 = vsel %vm1030, %v1365, %v1369
        %v1372 = vshrl.u32 %v981, 16
        %v1374 = vshll.u32 %v981, 16
        %v1376 = vrot.slane %v1374, 1
        %v1377 = vor.u32 %v1372, %v1376
        %v1379 = vshll.u32 %v670, 16
        %v1381 = vrot.slane %v1379, 1
        %v1382 = vsel %vm1030, %v1377, %v1381
        %v1383 = vshrl.u32 %v670, 16
        %v1385 = vor.u32 %v1383, %v1381
        %v1387 = vshll.u32 %v1014, 16
        %v1389 = vrot.slane %v1387, 1
        %v1390 = vsel %vm1030, %v1385, %v1389
        %v1392 = vshrl.u32 %v982, 16
        %v1394 = vshll.u32 %v982, 16
        %v1396 = vrot.slane %v1394, 1
        %v1397 = vor.u32 %v1392, %v1396
        %v1399 = vshll.u32 %v685, 16
        %v1401 = vrot.slane %v1399, 1
        %v1402 = vsel %vm1030, %v1397, %v1401
        %v1403 = vshrl.u32 %v685, 16
        %v1405 = vor.u32 %v1403, %v1401
        %v1407 = vshll.u32 %v1015, 16
        %v1409 = vrot.slane %v1407, 1
        %v1410 = vsel %vm1030, %v1405, %v1409
        %v1412 = vshrl.u32 %v983, 16
        %v1414 = vshll.u32 %v983, 16
        %v1416 = vrot.slane %v1414, 1
        %v1417 = vor.u32 %v1412, %v1416
        %v1419 = vshll.u32 %v700, 16
        %v1421 = vrot.slane %v1419, 1
        %v1422 = vsel %vm1030, %v1417, %v1421
        %v1423 = vshrl.u32 %v700, 16
        %v1425 = vor.u32 %v1423, %v1421
        %v1427 = vshll.u32 %v1016, 16
        %v1429 = vrot.slane %v1427, 1
        %v1430 = vsel %vm1030, %v1425, %v1429
        %v1432 = vshrl.u32 %v984, 16
        %v1434 = vshll.u32 %v984, 16
        %v1436 = vrot.slane %v1434, 1
        %v1437 = vor.u32 %v1432, %v1436
        %v1439 = vshll.u32 %v715, 16
        %v1441 = vrot.slane %v1439, 1
        %v1442 = vsel %vm1030, %v1437, %v1441
        %v1443 = vshrl.u32 %v715, 16
        %v1445 = vor.u32 %v1443, %v1441
        %v1447 = vshll.u32 %v1017, 16
        %v1449 = vrot.slane %v1447, 1
        %v1450 = vsel %vm1030, %v1445, %v1449
        %v1452 = vshrl.u32 %v985, 16
        %v1454 = vshll.u32 %v985, 16
        %v1456 = vrot.slane %v1454, 1
        %v1457 = vor.u32 %v1452, %v1456
        %v1459 = vshll.u32 %v730, 16
        %v1461 = vrot.slane %v1459, 1
        %v1462 = vsel %vm1030, %v1457, %v1461
        %v1463 = vshrl.u32 %v730, 16
        %v1465 = vor.u32 %v1463, %v1461
        %v1467 = vshll.u32 %v1018, 16
        %v1469 = vrot.slane %v1467, 1
        %v1470 = vsel %vm1030, %v1465, %v1469
        %v1472 = vshrl.u32 %v986, 16
        %v1474 = vshll.u32 %v986, 16
        %v1476 = vrot.slane %v1474, 1
        %v1477 = vor.u32 %v1472, %v1476
        %v1479 = vshll.u32 %v745, 16
        %v1481 = vrot.slane %v1479, 1
        %v1482 = vsel %vm1030, %v1477, %v1481
        %v1483 = vshrl.u32 %v745, 16
        %v1485 = vor.u32 %v1483, %v1481
        %v1487 = vshll.u32 %v1019, 16
        %v1489 = vrot.slane %v1487, 1
        %v1490 = vsel %vm1030, %v1485, %v1489
        %v1492 = vshrl.u32 %v987, 16
        %v1494 = vshll.u32 %v987, 16
        %v1496 = vrot.slane %v1494, 1
        %v1497 = vor.u32 %v1492, %v1496
        %v1499 = vshll.u32 %v760, 16
        %v1501 = vrot.slane %v1499, 1
        %v1502 = vsel %vm1030, %v1497, %v1501
        %v1503 = vshrl.u32 %v760, 16
        %v1505 = vor.u32 %v1503, %v1501
        %v1507 = vshll.u32 %v1020, 16
        %v1509 = vrot.slane %v1507, 1
        %v1510 = vsel %vm1030, %v1505, %v1509
        %v1512 = vshrl.u32 %v988, 16
        %v1514 = vshll.u32 %v988, 16
        %v1516 = vrot.slane %v1514, 1
        %v1517 = vor.u32 %v1512, %v1516
        %v1519 = vshll.u32 %v775, 16
        %v1521 = vrot.slane %v1519, 1
        %v1522 = vsel %vm1030, %v1517, %v1521
        %v1523 = vshrl.u32 %v775, 16
        %v1525 = vor.u32 %v1523, %v1521
        %v1527 = vshll.u32 %v1021, 16
        %v1529 = vrot.slane %v1527, 1
        %v1530 = vsel %vm1030, %v1525, %v1529
        %v1532 = vshrl.u32 %v989, 16
        %v1534 = vshll.u32 %v989, 16
        %v1536 = vrot.slane %v1534, 1
        %v1537 = vor.u32 %v1532, %v1536
        %v1539 = vshll.u32 %v790, 16
        %v1541 = vrot.slane %v1539, 1
        %v1542 = vsel %vm1030, %v1537, %v1541
        %v1543 = vshrl.u32 %v790, 16
        %v1545 = vor.u32 %v1543, %v1541
        %v1547 = vshll.u32 %v1022, 16
        %v1549 = vrot.slane %v1547, 1
        %v1550 = vsel %vm1030, %v1545, %v1549
        %v1552 = vshrl.u32 %v990, 16
        %v1554 = vshll.u32 %v990, 16
        %v1556 = vrot.slane %v1554, 1
        %v1557 = vor.u32 %v1552, %v1556
        %v1559 = vshll.u32 %v805, 16
        %v1561 = vrot.slane %v1559, 1
        %v1562 = vsel %vm1030, %v1557, %v1561
        %v1563 = vshrl.u32 %v805, 16
        %v1565 = vor.u32 %v1563, %v1561
        %v1567 = vshll.u32 %v1023, 16
        %v1569 = vrot.slane %v1567, 1
        %v1570 = vsel %vm1030, %v1565, %v1569
        %v1572 = vshrl.u32 %v991, 16
        %v1574 = vshll.u32 %v991, 16
        %v1576 = vrot.slane %v1574, 1
        %v1577 = vor.u32 %v1572, %v1576
        %v1579 = vshll.u32 %v820, 16
        %v1581 = vrot.slane %v1579, 1
        %v1582 = vsel %vm1030, %v1577, %v1581
        %v1583 = vshrl.u32 %v820, 16
        %v1585 = vor.u32 %v1583, %v1581
        %v1587 = vshll.u32 %v1024, 16
        %v1589 = vrot.slane %v1587, 1
        %v1590 = vsel %vm1030, %v1585, %v1589
        %v1592 = vshrl.u32 %v992, 16
        %v1594 = vshll.u32 %v992, 16
        %v1596 = vrot.slane %v1594, 1
        %v1597 = vor.u32 %v1592, %v1596
        %v1599 = vshll.u32 %v835, 16
        %v1601 = vrot.slane %v1599, 1
        %v1602 = vsel %vm1030, %v1597, %v1601
        %v1603 = vshrl.u32 %v835, 16
        %v1605 = vor.u32 %v1603, %v1601
        %v1607 = vshll.u32 %v1025, 16
        %v1609 = vrot.slane %v1607, 1
        %v1610 = vsel %vm1030, %v1605, %v1609
        %v1612 = vshrl.u32 %v993, 16
        %v1614 = vshll.u32 %v993, 16
        %v1616 = vrot.slane %v1614, 1
        %v1617 = vor.u32 %v1612, %v1616
        %v1619 = vshll.u32 %v850, 16
        %v1621 = vrot.slane %v1619, 1
        %v1622 = vsel %vm1030, %v1617, %v1621
        %v1623 = vshrl.u32 %v850, 16
        %v1625 = vor.u32 %v1623, %v1621
        %v1627 = vshll.u32 %v1026, 16
        %v1629 = vrot.slane %v1627, 1
        %v1630 = vsel %vm1030, %v1625, %v1629
        %v1632 = vshrl.u32 %v994, 16
        %v1634 = vshll.u32 %v994, 16
        %v1636 = vrot.slane %v1634, 1
        %v1637 = vor.u32 %v1632, %v1636
        %v1639 = vshll.u32 %v865, 16
        %v1641 = vrot.slane %v1639, 1
        %v1642 = vsel %vm1030, %v1637, %v1641
        %v1643 = vshrl.u32 %v865, 16
        %v1645 = vor.u32 %v1643, %v1641
        %v1647 = vshll.u32 %v1027, 16
        %v1649 = vrot.slane %v1647, 1
        %v1650 = vsel %vm1030, %v1645, %v1649
        %v1652 = vshrl.u32 %v995, 16
        %v1654 = vshll.u32 %v995, 16
        %v1656 = vrot.slane %v1654, 1
        %v1657 = vor.u32 %v1652, %v1656
        %v1659 = vshll.u32 %v880, 16
        %v1661 = vrot.slane %v1659, 1
        %v1662 = vsel %vm1030, %v1657, %v1661
        %v1663 = vshrl.u32 %v880, 16
        %v1665 = vor.u32 %v1663, %v1661
        %v1667 = vshll.u32 %v1028, 16
        %v1669 = vrot.slane %v1667, 1
        %v1670 = vsel %vm1030, %v1665, %v1669
        %v1672 = vshrl.u32 %v996, 16
        %v1674 = vshll.u32 %v996, 16
        %v1676 = vrot.slane %v1674, 1
        %v1677 = vor.u32 %v1672, %v1676
        %v1679 = vshll.u32 %v895, 16
        %v1681 = vrot.slane %v1679, 1
        %v1682 = vsel %vm1030, %v1677, %v1681
        %v1683 = vshrl.u32 %v895, 16
        %v1685 = vor.u32 %v1683, %v1681
        %v1687 = vshll.u32 %v1029, 16
        %v1689 = vrot.slane %v1687, 1
        %v1690 = vsel %vm1030, %v1685, %v1689
        %1691 = vrot.lane.b32.xlu0 %v1042, 3
        %v1692 = vpop.permute.xlu0 %1691
        %1693 = vrot.lane.b32.xlu0 %v1050, 3
        %v1694 = vpop.permute.xlu0 %1693
        %1695 = vrot.lane.b32.xlu0 %v1062, 3
        %v1696 = vpop.permute.xlu0 %1695
        %1697 = vrot.lane.b32.xlu0 %v1070, 3
        %v1698 = vpop.permute.xlu0 %1697
        %1699 = vrot.lane.b32.xlu0 %v1082, 3
        %v1700 = vpop.permute.xlu0 %1699
        %1701 = vrot.lane.b32.xlu0 %v1090, 3
        %v1702 = vpop.permute.xlu0 %1701
        %1703 = vrot.lane.b32.xlu0 %v1102, 3
        %v1704 = vpop.permute.xlu0 %1703
        %1705 = vrot.lane.b32.xlu0 %v1110, 3
        %v1706 = vpop.permute.xlu0 %1705
        %1707 = vrot.lane.b32.xlu0 %v1122, 3
        %v1708 = vpop.permute.xlu0 %1707
        %1709 = vrot.lane.b32.xlu0 %v1130, 3
        %v1710 = vpop.permute.xlu0 %1709
        %1711 = vrot.lane.b32.xlu0 %v1142, 3
        %v1712 = vpop.permute.xlu0 %1711
        %1713 = vrot.lane.b32.xlu0 %v1150, 3
        %v1714 = vpop.permute.xlu0 %1713
        %1715 = vrot.lane.b32.xlu0 %v1162, 3
        %v1716 = vpop.permute.xlu0 %1715
        %1717 = vrot.lane.b32.xlu0 %v1170, 3
        %v1718 = vpop.permute.xlu0 %1717
        %1719 = vrot.lane.b32.xlu0 %v1182, 3
        %v1720 = vpop.permute.xlu0 %1719
        %1721 = vrot.lane.b32.xlu0 %v1190, 3
        %v1722 = vpop.permute.xlu0 %1721
        %1723 = vrot.lane.b32.xlu0 %v1202, 3
        %v1724 = vpop.permute.xlu0 %1723
        %1725 = vrot.lane.b32.xlu0 %v1210, 3
        %v1726 = vpop.permute.xlu0 %1725
        %1727 = vrot.lane.b32.xlu0 %v1222, 3
        %v1728 = vpop.permute.xlu0 %1727
        %1729 = vrot.lane.b32.xlu0 %v1230, 3
        %v1730 = vpop.permute.xlu0 %1729
        %1731 = vrot.lane.b32.xlu0 %v1242, 3
        %v1732 = vpop.permute.xlu0 %1731
        %1733 = vrot.lane.b32.xlu0 %v1250, 3
        %v1734 = vpop.permute.xlu0 %1733
        %1735 = vrot.lane.b32.xlu0 %v1262, 3
        %v1736 = vpop.permute.xlu0 %1735
        %1737 = vrot.lane.b32.xlu0 %v1270, 3
        %v1738 = vpop.permute.xlu0 %1737
        %1739 = vrot.lane.b32.xlu0 %v1282, 3
        %v1740 = vpop.permute.xlu0 %1739
        %1741 = vrot.lane.b32.xlu0 %v1290, 3
        %v1742 = vpop.permute.xlu0 %1741
        %1743 = vrot.lane.b32.xlu0 %v1302, 3
        %v1744 = vpop.permute.xlu0 %1743
        %1745 = vrot.lane.b32.xlu0 %v1310, 3
        %v1746 = vpop.permute.xlu0 %1745
        %1747 = vrot.lane.b32.xlu0 %v1322, 3
        %v1748 = vpop.permute.xlu0 %1747
        %1749 = vrot.lane.b32.xlu0 %v1330, 3
        %v1750 = vpop.permute.xlu0 %1749
        %1751 = vrot.lane.b32.xlu0 %v1342, 3
        %v1752 = vpop.permute.xlu0 %1751
        %1753 = vrot.lane.b32.xlu0 %v1350, 3
        %v1754 = vpop.permute.xlu0 %1753
        %1755 = vrot.lane.b32.xlu0 %v1362, 3
        %v1756 = vpop.permute.xlu0 %1755
        %1757 = vrot.lane.b32.xlu0 %v1370, 3
        %v1758 = vpop.permute.xlu0 %1757
        %1759 = vrot.lane.b32.xlu0 %v1382, 3
        %v1760 = vpop.permute.xlu0 %1759
        %1761 = vrot.lane.b32.xlu0 %v1390, 3
        %v1762 = vpop.permute.xlu0 %1761
        %1763 = vrot.lane.b32.xlu0 %v1402, 3
        %v1764 = vpop.permute.xlu0 %1763
        %1765 = vrot.lane.b32.xlu0 %v1410, 3
        %v1766 = vpop.permute.xlu0 %1765
        %1767 = vrot.lane.b32.xlu0 %v1422, 3
        %v1768 = vpop.permute.xlu0 %1767
        %1769 = vrot.lane.b32.xlu0 %v1430, 3
        %v1770 = vpop.permute.xlu0 %1769
        %1771 = vrot.lane.b32.xlu0 %v1442, 3
        %v1772 = vpop.permute.xlu0 %1771
        %1773 = vrot.lane.b32.xlu0 %v1450, 3
        %v1774 = vpop.permute.xlu0 %1773
        %1775 = vrot.lane.b32.xlu0 %v1462, 3
        %v1776 = vpop.permute.xlu0 %1775
        %1777 = vrot.lane.b32.xlu0 %v1470, 3
        %v1778 = vpop.permute.xlu0 %1777
        %1779 = vrot.lane.b32.xlu0 %v1482, 3
        %v1780 = vpop.permute.xlu0 %1779
        %1781 = vrot.lane.b32.xlu0 %v1490, 3
        %v1782 = vpop.permute.xlu0 %1781
        %1783 = vrot.lane.b32.xlu0 %v1502, 3
        %v1784 = vpop.permute.xlu0 %1783
        %1785 = vrot.lane.b32.xlu0 %v1510, 3
        %v1786 = vpop.permute.xlu0 %1785
        %1787 = vrot.lane.b32.xlu0 %v1522, 3
        %v1788 = vpop.permute.xlu0 %1787
        %1789 = vrot.lane.b32.xlu0 %v1530, 3
        %v1790 = vpop.permute.xlu0 %1789
        %1791 = vrot.lane.b32.xlu0 %v1542, 3
        %v1792 = vpop.permute.xlu0 %1791
        %1793 = vrot.lane.b32.xlu0 %v1550, 3
        %v1794 = vpop.permute.xlu0 %1793
        %1795 = vrot.lane.b32.xlu0 %v1562, 3
        %v1796 = vpop.permute.xlu0 %1795
        %1797 = vrot.lane.b32.xlu0 %v1570, 3
        %v1798 = vpop.permute.xlu0 %1797
        %1799 = vrot.lane.b32.xlu0 %v1582, 3
        %v1800 = vpop.permute.xlu0 %1799
        %1801 = vrot.lane.b32.xlu0 %v1590, 3
        %v1802 = vpop.permute.xlu0 %1801
        %1803 = vrot.lane.b32.xlu0 %v1602, 3
        %v1804 = vpop.permute.xlu0 %1803
        %1805 = vrot.lane.b32.xlu0 %v1610, 3
        %v1806 = vpop.permute.xlu0 %1805
        %1807 = vrot.lane.b32.xlu0 %v1622, 3
        %v1808 = vpop.permute.xlu0 %1807
        %1809 = vrot.lane.b32.xlu0 %v1630, 3
        %v1810 = vpop.permute.xlu0 %1809
        %1811 = vrot.lane.b32.xlu0 %v1642, 3
        %v1812 = vpop.permute.xlu0 %1811
        %1813 = vrot.lane.b32.xlu0 %v1650, 3
        %v1814 = vpop.permute.xlu0 %1813
        %1815 = vrot.lane.b32.xlu0 %v1662, 3
        %v1816 = vpop.permute.xlu0 %1815
        %1817 = vrot.lane.b32.xlu0 %v1670, 3
        %v1818 = vpop.permute.xlu0 %1817
        %1819 = vrot.lane.b32.xlu0 %v1682, 3
        %v1820 = vpop.permute.xlu0 %1819
        %1821 = vrot.lane.b32.xlu0 %v1690, 3
        %v1822 = vpop.permute.xlu0 %1821
        %vm1889 = vcmask 1046528
        %v1890 = vrot.slane %v964, 1
        %v1891 = vrot.slane %v415, 1
        %v1892 = vsel %vm1889, %v1890, %v1891
        %v1893 = vrot.slane %v997, 1
        %v1894 = vsel %vm1889, %v1891, %v1893
        %v1895 = vrot.slane %v965, 1
        %v1896 = vrot.slane %v430, 1
        %v1897 = vsel %vm1889, %v1895, %v1896
        %v1898 = vrot.slane %v998, 1
        %v1899 = vsel %vm1889, %v1896, %v1898
        %v1900 = vrot.slane %v966, 1
        %v1901 = vrot.slane %v445, 1
        %v1902 = vsel %vm1889, %v1900, %v1901
        %v1903 = vrot.slane %v999, 1
        %v1904 = vsel %vm1889, %v1901, %v1903
        %v1905 = vrot.slane %v967, 1
        %v1906 = vrot.slane %v460, 1
        %v1907 = vsel %vm1889, %v1905, %v1906
        %v1908 = vrot.slane %v1000, 1
        %v1909 = vsel %vm1889, %v1906, %v1908
        %v1910 = vrot.slane %v968, 1
        %v1911 = vrot.slane %v475, 1
        %v1912 = vsel %vm1889, %v1910, %v1911
        %v1913 = vrot.slane %v1001, 1
        %v1914 = vsel %vm1889, %v1911, %v1913
        %v1915 = vrot.slane %v969, 1
        %v1916 = vrot.slane %v490, 1
        %v1917 = vsel %vm1889, %v1915, %v1916
        %v1918 = vrot.slane %v1002, 1
        %v1919 = vsel %vm1889, %v1916, %v1918
        %v1920 = vrot.slane %v970, 1
        %v1921 = vrot.slane %v505, 1
        %v1922 = vsel %vm1889, %v1920, %v1921
        %v1923 = vrot.slane %v1003, 1
        %v1924 = vsel %vm1889, %v1921, %v1923
        %v1925 = vrot.slane %v971, 1
        %v1926 = vrot.slane %v520, 1
        %v1927 = vsel %vm1889, %v1925, %v1926
        %v1928 = vrot.slane %v1004, 1
        %v1929 = vsel %vm1889, %v1926, %v1928
        %v1930 = vrot.slane %v972, 1
        %v1931 = vrot.slane %v535, 1
        %v1932 = vsel %vm1889, %v1930, %v1931
        %v1933 = vrot.slane %v1005, 1
        %v1934 = vsel %vm1889, %v1931, %v1933
        %v1935 = vrot.slane %v973, 1
        %v1936 = vrot.slane %v550, 1
        %v1937 = vsel %vm1889, %v1935, %v1936
        %v1938 = vrot.slane %v1006, 1
        %v1939 = vsel %vm1889, %v1936, %v1938
        %v1940 = vrot.slane %v974, 1
        %v1941 = vrot.slane %v565, 1
        %v1942 = vsel %vm1889, %v1940, %v1941
        %v1943 = vrot.slane %v1007, 1
        %v1944 = vsel %vm1889, %v1941, %v1943
        %v1945 = vrot.slane %v975, 1
        %v1946 = vrot.slane %v580, 1
        %v1947 = vsel %vm1889, %v1945, %v1946
        %v1948 = vrot.slane %v1008, 1
        %v1949 = vsel %vm1889, %v1946, %v1948
        %v1950 = vrot.slane %v976, 1
        %v1951 = vrot.slane %v595, 1
        %v1952 = vsel %vm1889, %v1950, %v1951
        %v1953 = vrot.slane %v1009, 1
        %v1954 = vsel %vm1889, %v1951, %v1953
        %v1955 = vrot.slane %v977, 1
        %v1956 = vrot.slane %v610, 1
        %v1957 = vsel %vm1889, %v1955, %v1956
        %v1958 = vrot.slane %v1010, 1
        %v1959 = vsel %vm1889, %v1956, %v1958
        %v1960 = vrot.slane %v978, 1
        %v1961 = vrot.slane %v625, 1
        %v1962 = vsel %vm1889, %v1960, %v1961
        %v1963 = vrot.slane %v1011, 1
        %v1964 = vsel %vm1889, %v1961, %v1963
        %v1965 = vrot.slane %v979, 1
        %v1966 = vrot.slane %v640, 1
        %v1967 = vsel %vm1889, %v1965, %v1966
        %v1968 = vrot.slane %v1012, 1
        %v1969 = vsel %vm1889, %v1966, %v1968
        %v1970 = vrot.slane %v980, 1
        %v1971 = vrot.slane %v655, 1
        %v1972 = vsel %vm1889, %v1970, %v1971
        %v1973 = vrot.slane %v1013, 1
        %v1974 = vsel %vm1889, %v1971, %v1973
        %v1975 = vrot.slane %v981, 1
        %v1976 = vrot.slane %v670, 1
        %v1977 = vsel %vm1889, %v1975, %v1976
        %v1978 = vrot.slane %v1014, 1
        %v1979 = vsel %vm1889, %v1976, %v1978
        %v1980 = vrot.slane %v982, 1
        %v1981 = vrot.slane %v685, 1
        %v1982 = vsel %vm1889, %v1980, %v1981
        %v1983 = vrot.slane %v1015, 1
        %v1984 = vsel %vm1889, %v1981, %v1983
        %v1985 = vrot.slane %v983, 1
        %v1986 = vrot.slane %v700, 1
        %v1987 = vsel %vm1889, %v1985, %v1986
        %v1988 = vrot.slane %v1016, 1
        %v1989 = vsel %vm1889, %v1986, %v1988
        %v1990 = vrot.slane %v984, 1
        %v1991 = vrot.slane %v715, 1
        %v1992 = vsel %vm1889, %v1990, %v1991
        %v1993 = vrot.slane %v1017, 1
        %v1994 = vsel %vm1889, %v1991, %v1993
        %v1995 = vrot.slane %v985, 1
        %v1996 = vrot.slane %v730, 1
        %v1997 = vsel %vm1889, %v1995, %v1996
        %v1998 = vrot.slane %v1018, 1
        %v1999 = vsel %vm1889, %v1996, %v1998
        %v2000 = vrot.slane %v986, 1
        %v2001 = vrot.slane %v745, 1
        %v2002 = vsel %vm1889, %v2000, %v2001
        %v2003 = vrot.slane %v1019, 1
        %v2004 = vsel %vm1889, %v2001, %v2003
        %v2005 = vrot.slane %v987, 1
        %v2006 = vrot.slane %v760, 1
        %v2007 = vsel %vm1889, %v2005, %v2006
        %v2008 = vrot.slane %v1020, 1
        %v2009 = vsel %vm1889, %v2006, %v2008
        %v2010 = vrot.slane %v988, 1
        %v2011 = vrot.slane %v775, 1
        %v2012 = vsel %vm1889, %v2010, %v2011
        %v2013 = vrot.slane %v1021, 1
        %v2014 = vsel %vm1889, %v2011, %v2013
        %v2015 = vrot.slane %v989, 1
        %v2016 = vrot.slane %v790, 1
        %v2017 = vsel %vm1889, %v2015, %v2016
        %v2018 = vrot.slane %v1022, 1
        %v2019 = vsel %vm1889, %v2016, %v2018
        %v2020 = vrot.slane %v990, 1
        %v2021 = vrot.slane %v805, 1
        %v2022 = vsel %vm1889, %v2020, %v2021
        %v2023 = vrot.slane %v1023, 1
        %v2024 = vsel %vm1889, %v2021, %v2023
        %v2025 = vrot.slane %v991, 1
        %v2026 = vrot.slane %v820, 1
        %v2027 = vsel %vm1889, %v2025, %v2026
        %v2028 = vrot.slane %v1024, 1
        %v2029 = vsel %vm1889, %v2026, %v2028
        %v2030 = vrot.slane %v992, 1
        %v2031 = vrot.slane %v835, 1
        %v2032 = vsel %vm1889, %v2030, %v2031
        %v2033 = vrot.slane %v1025, 1
        %v2034 = vsel %vm1889, %v2031, %v2033
        %v2035 = vrot.slane %v993, 1
        %v2036 = vrot.slane %v850, 1
        %v2037 = vsel %vm1889, %v2035, %v2036
        %v2038 = vrot.slane %v1026, 1
        %v2039 = vsel %vm1889, %v2036, %v2038
        %v2040 = vrot.slane %v994, 1
        %v2041 = vrot.slane %v865, 1
        %v2042 = vsel %vm1889, %v2040, %v2041
        %v2043 = vrot.slane %v1027, 1
        %v2044 = vsel %vm1889, %v2041, %v2043
        %v2045 = vrot.slane %v995, 1
        %v2046 = vrot.slane %v880, 1
        %v2047 = vsel %vm1889, %v2045, %v2046
        %v2048 = vrot.slane %v1028, 1
        %v2049 = vsel %vm1889, %v2046, %v2048
        %v2050 = vrot.slane %v996, 1
        %v2051 = vrot.slane %v895, 1
        %v2052 = vsel %vm1889, %v2050, %v2051
        %v2053 = vrot.slane %v1029, 1
        %v2054 = vsel %vm1889, %v2051, %v2053
        %2055 = vrot.lane.b32.xlu0 %v1892, 6
        %v2056 = vpop.permute.xlu0 %2055
        %2057 = vrot.lane.b32.xlu0 %v1894, 6
        %v2058 = vpop.permute.xlu0 %2057
        %2059 = vrot.lane.b32.xlu0 %v1897, 6
        %v2060 = vpop.permute.xlu0 %2059
        %2061 = vrot.lane.b32.xlu0 %v1899, 6
        %v2062 = vpop.permute.xlu0 %2061
        %2063 = vrot.lane.b32.xlu0 %v1902, 6
        %v2064 = vpop.permute.xlu0 %2063
        %2065 = vrot.lane.b32.xlu0 %v1904, 6
        %v2066 = vpop.permute.xlu0 %2065
        %2067 = vrot.lane.b32.xlu0 %v1907, 6
        %v2068 = vpop.permute.xlu0 %2067
        %2069 = vrot.lane.b32.xlu0 %v1909, 6
        %v2070 = vpop.permute.xlu0 %2069
        %2071 = vrot.lane.b32.xlu0 %v1912, 6
        %v2072 = vpop.permute.xlu0 %2071
        %2073 = vrot.lane.b32.xlu0 %v1914, 6
        %v2074 = vpop.permute.xlu0 %2073
        %2075 = vrot.lane.b32.xlu0 %v1917, 6
        %v2076 = vpop.permute.xlu0 %2075
        %2077 = vrot.lane.b32.xlu0 %v1919, 6
        %v2078 = vpop.permute.xlu0 %2077
        %2079 = vrot.lane.b32.xlu0 %v1922, 6
        %v2080 = vpop.permute.xlu0 %2079
        %2081 = vrot.lane.b32.xlu0 %v1924, 6
        %v2082 = vpop.permute.xlu0 %2081
        %2083 = vrot.lane.b32.xlu0 %v1927, 6
        %v2084 = vpop.permute.xlu0 %2083
        %2085 = vrot.lane.b32.xlu0 %v1929, 6
        %v2086 = vpop.permute.xlu0 %2085
        %2087 = vrot.lane.b32.xlu0 %v1932, 6
        %v2088 = vpop.permute.xlu0 %2087
        %2089 = vrot.lane.b32.xlu0 %v1934, 6
        %v2090 = vpop.permute.xlu0 %2089
        %2091 = vrot.lane.b32.xlu0 %v1937, 6
        %v2092 = vpop.permute.xlu0 %2091
        %2093 = vrot.lane.b32.xlu0 %v1939, 6
        %v2094 = vpop.permute.xlu0 %2093
        %2095 = vrot.lane.b32.xlu0 %v1942, 6
        %v2096 = vpop.permute.xlu0 %2095
        %2097 = vrot.lane.b32.xlu0 %v1944, 6
        %v2098 = vpop.permute.xlu0 %2097
        %2099 = vrot.lane.b32.xlu0 %v1947, 6
        %v2100 = vpop.permute.xlu0 %2099
        %2101 = vrot.lane.b32.xlu0 %v1949, 6
        %v2102 = vpop.permute.xlu0 %2101
        %2103 = vrot.lane.b32.xlu0 %v1952, 6
        %v2104 = vpop.permute.xlu0 %2103
        %2105 = vrot.lane.b32.xlu0 %v1954, 6
        %v2106 = vpop.permute.xlu0 %2105
        %2107 = vrot.lane.b32.xlu0 %v1957, 6
        %v2108 = vpop.permute.xlu0 %2107
        %2109 = vrot.lane.b32.xlu0 %v1959, 6
        %v2110 = vpop.permute.xlu0 %2109
        %2111 = vrot.lane.b32.xlu0 %v1962, 6
        %v2112 = vpop.permute.xlu0 %2111
        %2113 = vrot.lane.b32.xlu0 %v1964, 6
        %v2114 = vpop.permute.xlu0 %2113
        %2115 = vrot.lane.b32.xlu0 %v1967, 6
        %v2116 = vpop.permute.xlu0 %2115
        %2117 = vrot.lane.b32.xlu0 %v1969, 6
        %v2118 = vpop.permute.xlu0 %2117
        %2119 = vrot.lane.b32.xlu0 %v1972, 6
        %v2120 = vpop.permute.xlu0 %2119
        %2121 = vrot.lane.b32.xlu0 %v1974, 6
        %v2122 = vpop.permute.xlu0 %2121
        %2123 = vrot.lane.b32.xlu0 %v1977, 6
        %v2124 = vpop.permute.xlu0 %2123
        %2125 = vrot.lane.b32.xlu0 %v1979, 6
        %v2126 = vpop.permute.xlu0 %2125
        %2127 = vrot.lane.b32.xlu0 %v1982, 6
        %v2128 = vpop.permute.xlu0 %2127
        %2129 = vrot.lane.b32.xlu0 %v1984, 6
        %v2130 = vpop.permute.xlu0 %2129
        %2131 = vrot.lane.b32.xlu0 %v1987, 6
        %v2132 = vpop.permute.xlu0 %2131
        %2133 = vrot.lane.b32.xlu0 %v1989, 6
        %v2134 = vpop.permute.xlu0 %2133
        %2135 = vrot.lane.b32.xlu0 %v1992, 6
        %v2136 = vpop.permute.xlu0 %2135
        %2137 = vrot.lane.b32.xlu0 %v1994, 6
        %v2138 = vpop.permute.xlu0 %2137
        %2139 = vrot.lane.b32.xlu0 %v1997, 6
        %v2140 = vpop.permute.xlu0 %2139
        %2141 = vrot.lane.b32.xlu0 %v1999, 6
        %v2142 = vpop.permute.xlu0 %2141
        %2143 = vrot.lane.b32.xlu0 %v2002, 6
        %v2144 = vpop.permute.xlu0 %2143
        %2145 = vrot.lane.b32.xlu0 %v2004, 6
        %v2146 = vpop.permute.xlu0 %2145
        %2147 = vrot.lane.b32.xlu0 %v2007, 6
        %v2148 = vpop.permute.xlu0 %2147
        %2149 = vrot.lane.b32.xlu0 %v2009, 6
        %v2150 = vpop.permute.xlu0 %2149
        %2151 = vrot.lane.b32.xlu0 %v2012, 6
        %v2152 = vpop.permute.xlu0 %2151
        %2153 = vrot.lane.b32.xlu0 %v2014, 6
        %v2154 = vpop.permute.xlu0 %2153
        %2155 = vrot.lane.b32.xlu0 %v2017, 6
        %v2156 = vpop.permute.xlu0 %2155
        %2157 = vrot.lane.b32.xlu0 %v2019, 6
        %v2158 = vpop.permute.xlu0 %2157
        %2159 = vrot.lane.b32.xlu0 %v2022, 6
        %v2160 = vpop.permute.xlu0 %2159
        %2161 = vrot.lane.b32.xlu0 %v2024, 6
        %v2162 = vpop.permute.xlu0 %2161
        %2163 = vrot.lane.b32.xlu0 %v2027, 6
        %v2164 = vpop.permute.xlu0 %2163
        %2165 = vrot.lane.b32.xlu0 %v2029, 6
        %v2166 = vpop.permute.xlu0 %2165
        %2167 = vrot.lane.b32.xlu0 %v2032, 6
        %v2168 = vpop.permute.xlu0 %2167
        %2169 = vrot.lane.b32.xlu0 %v2034, 6
        %v2170 = vpop.permute.xlu0 %2169
        %2171 = vrot.lane.b32.xlu0 %v2037, 6
        %v2172 = vpop.permute.xlu0 %2171
        %2173 = vrot.lane.b32.xlu0 %v2039, 6
        %v2174 = vpop.permute.xlu0 %2173
        %2175 = vrot.lane.b32.xlu0 %v2042, 6
        %v2176 = vpop.permute.xlu0 %2175
        %2177 = vrot.lane.b32.xlu0 %v2044, 6
        %v2178 = vpop.permute.xlu0 %2177
        %2179 = vrot.lane.b32.xlu0 %v2047, 6
        %v2180 = vpop.permute.xlu0 %2179
        %2181 = vrot.lane.b32.xlu0 %v2049, 6
        %v2182 = vpop.permute.xlu0 %2181
        %2183 = vrot.lane.b32.xlu0 %v2052, 6
        %v2184 = vpop.permute.xlu0 %2183
        %2185 = vrot.lane.b32.xlu0 %v2054, 6
        %v2186 = vpop.permute.xlu0 %2185
        %vm2187 = vcmask 23552
        %v2189 = vsel %vm2187, %v964, %v1692
        %v2191 = vsel %vm2187, %v415, %v1694
        %v2193 = vsel %vm2187, %v965, %v1696
        %v2195 = vsel %vm2187, %v430, %v1698
        %v2197 = vsel %vm2187, %v966, %v1700
        %v2199 = vsel %vm2187, %v445, %v1702
        %v2201 = vsel %vm2187, %v967, %v1704
        %v2203 = vsel %vm2187, %v460, %v1706
        %v2205 = vsel %vm2187, %v968, %v1708
        %v2207 = vsel %vm2187, %v475, %v1710
        %v2209 = vsel %vm2187, %v969, %v1712
        %v2211 = vsel %vm2187, %v490, %v1714
        %v2213 = vsel %vm2187, %v970, %v1716
        %v2215 = vsel %vm2187, %v505, %v1718
        %v2217 = vsel %vm2187, %v971, %v1720
        %v2219 = vsel %vm2187, %v520, %v1722
        %v2221 = vsel %vm2187, %v972, %v1724
        %v2223 = vsel %vm2187, %v535, %v1726
        %v2225 = vsel %vm2187, %v973, %v1728
        %v2227 = vsel %vm2187, %v550, %v1730
        %v2229 = vsel %vm2187, %v974, %v1732
        %v2231 = vsel %vm2187, %v565, %v1734
        %v2233 = vsel %vm2187, %v975, %v1736
        %v2235 = vsel %vm2187, %v580, %v1738
        %v2237 = vsel %vm2187, %v976, %v1740
        %v2239 = vsel %vm2187, %v595, %v1742
        %v2241 = vsel %vm2187, %v977, %v1744
        %v2243 = vsel %vm2187, %v610, %v1746
        %v2245 = vsel %vm2187, %v978, %v1748
        %v2247 = vsel %vm2187, %v625, %v1750
        %v2249 = vsel %vm2187, %v979, %v1752
        %v2251 = vsel %vm2187, %v640, %v1754
        %v2253 = vsel %vm2187, %v980, %v1756
        %v2255 = vsel %vm2187, %v655, %v1758
        %v2257 = vsel %vm2187, %v981, %v1760
        %v2259 = vsel %vm2187, %v670, %v1762
        %v2261 = vsel %vm2187, %v982, %v1764
        %v2263 = vsel %vm2187, %v685, %v1766
        %v2265 = vsel %vm2187, %v983, %v1768
        %v2267 = vsel %vm2187, %v700, %v1770
        %v2269 = vsel %vm2187, %v984, %v1772
        %v2271 = vsel %vm2187, %v715, %v1774
        %v2273 = vsel %vm2187, %v985, %v1776
        %v2275 = vsel %vm2187, %v730, %v1778
        %v2277 = vsel %vm2187, %v986, %v1780
        %v2279 = vsel %vm2187, %v745, %v1782
        %v2281 = vsel %vm2187, %v987, %v1784
        %v2283 = vsel %vm2187, %v760, %v1786
        %v2285 = vsel %vm2187, %v988, %v1788
        %v2287 = vsel %vm2187, %v775, %v1790
        %v2289 = vsel %vm2187, %v989, %v1792
        %v2291 = vsel %vm2187, %v790, %v1794
        %v2293 = vsel %vm2187, %v990, %v1796
        %v2295 = vsel %vm2187, %v805, %v1798
        %v2297 = vsel %vm2187, %v991, %v1800
        %v2299 = vsel %vm2187, %v820, %v1802
        %v2301 = vsel %vm2187, %v992, %v1804
        %v2303 = vsel %vm2187, %v835, %v1806
        %v2305 = vsel %vm2187, %v993, %v1808
        %v2307 = vsel %vm2187, %v850, %v1810
        %v2309 = vsel %vm2187, %v994, %v1812
        %v2311 = vsel %vm2187, %v865, %v1814
        %v2313 = vsel %vm2187, %v995, %v1816
        %v2315 = vsel %vm2187, %v880, %v1818
        %v2317 = vsel %vm2187, %v996, %v1820
        %v2319 = vsel %vm2187, %v895, %v1822
        %vm2320 = vcmask 48128
        %v2322 = vsel %vm2320, %v2189, %v2056
        %v2324 = vsel %vm2320, %v2191, %v2058
        %v2326 = vsel %vm2320, %v2193, %v2060
        %v2328 = vsel %vm2320, %v2195, %v2062
        %v2330 = vsel %vm2320, %v2197, %v2064
        %v2332 = vsel %vm2320, %v2199, %v2066
        %v2334 = vsel %vm2320, %v2201, %v2068
        %v2336 = vsel %vm2320, %v2203, %v2070
        %v2338 = vsel %vm2320, %v2205, %v2072
        %v2340 = vsel %vm2320, %v2207, %v2074
        %v2342 = vsel %vm2320, %v2209, %v2076
        %v2344 = vsel %vm2320, %v2211, %v2078
        %v2346 = vsel %vm2320, %v2213, %v2080
        %v2348 = vsel %vm2320, %v2215, %v2082
        %v2350 = vsel %vm2320, %v2217, %v2084
        %v2352 = vsel %vm2320, %v2219, %v2086
        %v2354 = vsel %vm2320, %v2221, %v2088
        %v2356 = vsel %vm2320, %v2223, %v2090
        %v2358 = vsel %vm2320, %v2225, %v2092
        %v2360 = vsel %vm2320, %v2227, %v2094
        %v2362 = vsel %vm2320, %v2229, %v2096
        %v2364 = vsel %vm2320, %v2231, %v2098
        %v2366 = vsel %vm2320, %v2233, %v2100
        %v2368 = vsel %vm2320, %v2235, %v2102
        %v2370 = vsel %vm2320, %v2237, %v2104
        %v2372 = vsel %vm2320, %v2239, %v2106
        %v2374 = vsel %vm2320, %v2241, %v2108
        %v2376 = vsel %vm2320, %v2243, %v2110
        %v2378 = vsel %vm2320, %v2245, %v2112
        %v2380 = vsel %vm2320, %v2247, %v2114
        %v2382 = vsel %vm2320, %v2249, %v2116
        %v2384 = vsel %vm2320, %v2251, %v2118
        %v2386 = vsel %vm2320, %v2253, %v2120
        %v2388 = vsel %vm2320, %v2255, %v2122
        %v2390 = vsel %vm2320, %v2257, %v2124
        %v2392 = vsel %vm2320, %v2259, %v2126
        %v2394 = vsel %vm2320, %v2261, %v2128
        %v2396 = vsel %vm2320, %v2263, %v2130
        %v2398 = vsel %vm2320, %v2265, %v2132
        %v2400 = vsel %vm2320, %v2267, %v2134
        %v2402 = vsel %vm2320, %v2269, %v2136
        %v2404 = vsel %vm2320, %v2271, %v2138
        %v2406 = vsel %vm2320, %v2273, %v2140
        %v2408 = vsel %vm2320, %v2275, %v2142
        %v2410 = vsel %vm2320, %v2277, %v2144
        %v2412 = vsel %vm2320, %v2279, %v2146
        %v2414 = vsel %vm2320, %v2281, %v2148
        %v2416 = vsel %vm2320, %v2283, %v2150
        %v2418 = vsel %vm2320, %v2285, %v2152
        %v2420 = vsel %vm2320, %v2287, %v2154
        %v2422 = vsel %vm2320, %v2289, %v2156
        %v2424 = vsel %vm2320, %v2291, %v2158
        %v2426 = vsel %vm2320, %v2293, %v2160
        %v2428 = vsel %vm2320, %v2295, %v2162
        %v2430 = vsel %vm2320, %v2297, %v2164
        %v2432 = vsel %vm2320, %v2299, %v2166
        %v2434 = vsel %vm2320, %v2301, %v2168
        %v2436 = vsel %vm2320, %v2303, %v2170
        %v2438 = vsel %vm2320, %v2305, %v2172
        %v2440 = vsel %vm2320, %v2307, %v2174
        %v2442 = vsel %vm2320, %v2309, %v2176
        %v2444 = vsel %vm2320, %v2311, %v2178
        %v2446 = vsel %vm2320, %v2313, %v2180
        %v2448 = vsel %vm2320, %v2315, %v2182
        %v2450 = vsel %vm2320, %v2317, %v2184
        %v2452 = vsel %vm2320, %v2319, %v2186
        %v2453 = vld [vmem:[%s210] sm:$0xf]
        %v2454 = vld [vmem:[%s210 + $0x4] sm:$0x1]
        %s2455 = scalar_lea.vmem %s210, 8
        %v2456 = vld [vmem:[%s2455] sm:$0xf]
        %v2457 = vld [vmem:[%s2455 + $0x4] sm:$0x1]
        %v2460 = vunpack.c.l.b16 %v2456
        %v2461 = vunpack.c.l.b16 %v2457
        %v2462 = vpack.c.b16 %v2461, %v2460
        %vm2463 = vcmask 72704
        %v2464 = vsel %vm2463, %v2326, 0
        %v2466 = vsel %vm2463, %v2328, 0
        %v2468 = vsel %vm2463, %v2330, 0
        %v2470 = vsel %vm2463, %v2332, 0
        %v2472 = vsel %vm2463, %v2334, 0
        %v2474 = vsel %vm2463, %v2336, 0
        %v2476 = vsel %vm2463, %v2338, 0
        %v2478 = vsel %vm2463, %v2340, 0
        %v2480 = vsel %vm2463, %v2342, 0
        %v2482 = vsel %vm2463, %v2344, 0
        %v2484 = vsel %vm2463, %v2346, 0
        %v2486 = vsel %vm2463, %v2348, 0
        %v2488 = vsel %vm2463, %v2350, 0
        %v2490 = vsel %vm2463, %v2352, 0
        %v2492 = vsel %vm2463, %v2354, 0
        %v2494 = vsel %vm2463, %v2356, 0
        %v2496 = vsel %vm2463, %v2358, 0
        %v2498 = vsel %vm2463, %v2360, 0
        %v2500 = vsel %vm2463, %v2362, 0
        %v2502 = vsel %vm2463, %v2364, 0
        %v2504 = vsel %vm2463, %v2366, 0
        %v2506 = vsel %vm2463, %v2368, 0
        %v2508 = vsel %vm2463, %v2370, 0
        %v2510 = vsel %vm2463, %v2372, 0
        %v2512 = vsel %vm2463, %v2374, 0
        %v2514 = vsel %vm2463, %v2376, 0
        %v2516 = vsel %vm2463, %v2378, 0
        %v2518 = vsel %vm2463, %v2380, 0
        %v2520 = vsel %vm2463, %v2382, 0
        %v2522 = vsel %vm2463, %v2384, 0
        %v2524 = vsel %vm2463, %v2386, 0
        %v2526 = vsel %vm2463, %v2388, 0
        %v2528 = vsel %vm2463, %v2390, 0
        %v2530 = vsel %vm2463, %v2392, 0
        %v2532 = vsel %vm2463, %v2394, 0
        %v2534 = vsel %vm2463, %v2396, 0
        %v2536 = vsel %vm2463, %v2398, 0
        %v2538 = vsel %vm2463, %v2400, 0
        %v2540 = vsel %vm2463, %v2402, 0
        %v2542 = vsel %vm2463, %v2404, 0
        %v2544 = vsel %vm2463, %v2406, 0
        %v2546 = vsel %vm2463, %v2408, 0
        %v2548 = vsel %vm2463, %v2410, 0
        %v2550 = vsel %vm2463, %v2412, 0
        %v2552 = vsel %vm2463, %v2414, 0
        %v2554 = vsel %vm2463, %v2416, 0
        %v2556 = vsel %vm2463, %v2418, 0
        %v2558 = vsel %vm2463, %v2420, 0
        %v2560 = vsel %vm2463, %v2422, 0
        %v2562 = vsel %vm2463, %v2424, 0
        %v2564 = vsel %vm2463, %v2426, 0
        %v2566 = vsel %vm2463, %v2428, 0
        %v2568 = vsel %vm2463, %v2430, 0
        %v2570 = vsel %vm2463, %v2432, 0
        %v2572 = vsel %vm2463, %v2434, 0
        %v2574 = vsel %vm2463, %v2436, 0
        %v2576 = vsel %vm2463, %v2438, 0
        %v2578 = vsel %vm2463, %v2440, 0
        %v2580 = vsel %vm2463, %v2442, 0
        %v2582 = vsel %vm2463, %v2444, 0
        %v2584 = vsel %vm2463, %v2446, 0
        %v2586 = vsel %vm2463, %v2448, 0
        %v2588 = vsel %vm2463, %v2450, 0
        %v2590 = vsel %vm2463, %v2452, 0
        %vm2592 = vcmask 1043456
        %vm2593 = vcmask 1044480
        %v2594 = vsel %vm2592, 4294967295, 65535
        %v2595 = vsel %vm2593, %v2594, 0
        %v2597 = vand.u32 %v2462, %v2595
        %2599 = vmatprep.subr.bf16.mxu0 0
        %2600 = vmatpush1.bf16.msra.mxu0 %v2597
        %2601 = vmatprep.subr.bf16.mxu0 0
        %2602 = vmatpush1.bf16.msra.mxu0 0
        %2603 = vmatprep.subr.bf16.mxu0 0
        %2604 = vmatpush1.bf16.msra.mxu0 0
        %2605 = vmatprep.subr.bf16.mxu0 0
        %2606 = vmatpush1.bf16.msra.mxu0 0
        %2607 = vmatprep.subr.bf16.mxu0 0
        %2608 = vmatpush1.bf16.msra.mxu0 0
        %2609 = vmatprep.subr.bf16.mxu0 0
        %2610 = vmatpush1.bf16.msra.mxu0 0
        %2611 = vmatprep.subr.bf16.mxu0 0
        %2612 = vmatpush1.bf16.msra.mxu0 0
        %2613 = vmatprep.subr.bf16.mxu0 0
        %2614 = vmatpush1.bf16.msra.mxu0 0
        %2615 = vmatprep.subr.bf16.mxu0 0
        %2616 = vmatpush1.bf16.msra.mxu0 0
        %2617 = vmatprep.subr.bf16.mxu0 0
        %2618 = vmatpush1.bf16.msra.mxu0 0
        %2619 = vmatprep.subr.bf16.mxu0 0
        %2620 = vmatpush1.bf16.msra.mxu0 0
        %2621 = vmatprep.subr.bf16.mxu0 0
        %2622 = vmatpush1.bf16.msra.mxu0 0
        %2623 = vmatprep.subr.bf16.mxu0 0
        %2624 = vmatpush1.bf16.msra.mxu0 0
        %2625 = vmatprep.subr.bf16.mxu0 0
        %2626 = vmatpush1.bf16.msra.mxu0 0
        %2627 = vmatprep.subr.bf16.mxu0 0
        %2628 = vmatpush1.bf16.msra.mxu0 0
        %2629 = vmatprep.subr.bf16.mxu0 0
        %2630 = vmatpush1.bf16.msra.mxu0 0
        %2631 = vmatprep.mubr.bf16.mxu0 0
        %2632 = vmatmul.mubr.bf16.gmra.mrb[0].mxu0 %v2464
        %v2633 = vpop.f32.mrb[0].mxu0
        %v2634 = vadd.f32 0.0, %v2633
        %v2635 = vpop.f32.mrb[0].mxu0
        %v2636 = vpop.f32.mrb[0].mxu0
        %v2637 = vadd.f32 0.0, %v2636
        %v2638 = vpop.f32.mrb[0].mxu0
        %2639 = vmatprep.mubr.bf16.mxu0 0
        %2640 = vmatmul.mubr.bf16.gmra.mrb[0].mxu0 %v2466
        %v2641 = vpop.f32.mrb[0].mxu0
        %v2642 = vadd.f32 0.0, %v2641
        %v2643 = vpop.f32.mrb[0].mxu0
        %v2644 = vpop.f32.mrb[0].mxu0
        %v2645 = vadd.f32 0.0, %v2644
        %v2646 = vpop.f32.mrb[0].mxu0
        %2647 = vmatprep.mubr.bf16.mxu0 0
        %2648 = vmatmul.mubr.bf16.gmra.mrb[0].mxu0 %v2468
        %v2649 = vpop.f32.mrb[0].mxu0
        %v2650 = vadd.f32 0.0, %v2649
        %v2651 = vpop.f32.mrb[0].mxu0
        %v2652 = vpop.f32.mrb[0].mxu0
        %v2653 = vadd.f32 0.0, %v2652
        %v2654 = vpop.f32.mrb[0].mxu0
        %2655 = vmatprep.mubr.bf16.mxu0 0
        %2656 = vmatmul.mubr.bf16.gmra.mrb[0].mxu0 %v2470
        %v2657 = vpop.f32.mrb[0].mxu0
        %v2658 = vadd.f32 0.0, %v2657
        %v2659 = vpop.f32.mrb[0].mxu0
        %v2660 = vpop.f32.mrb[0].mxu0
        %v2661 = vadd.f32 0.0, %v2660
        %v2662 = vpop.f32.mrb[0].mxu0
        %2663 = vmatprep.mubr.bf16.mxu0 0
        %2664 = vmatmul.mubr.bf16.gmra.mrb[0].mxu0 %v2472
        %v2665 = vpop.f32.mrb[0].mxu0
        %v2666 = vadd.f32 0.0, %v2665
        %v2667 = vpop.f32.mrb[0].mxu0
        %v2668 = vpop.f32.mrb[0].mxu0
        %v2669 = vadd.f32 0.0, %v2668
        %v2670 = vpop.f32.mrb[0].mxu0
        %2671 = vmatprep.mubr.bf16.mxu0 0
        %2672 = vmatmul.mubr.bf16.gmra.mrb[0].mxu0 %v2474
        %v2673 = vpop.f32.mrb[0].mxu0
        %v2674 = vadd.f32 0.0, %v2673
        %v2675 = vpop.f32.mrb[0].mxu0
        %v2676 = vpop.f32.mrb[0].mxu0
        %v2677 = vadd.f32 0.0, %v2676
        %v2678 = vpop.f32.mrb[0].mxu0
        %2679 = vmatprep.mubr.bf16.mxu0 0
        %2680 = vmatmul.mubr.bf16.gmra.mrb[0].mxu0 %v2476
        %v2681 = vpop.f32.mrb[0].mxu0
        %v2682 = vadd.f32 0.0, %v2681
        %v2683 = vpop.f32.mrb[0].mxu0
        %v2684 = vpop.f32.mrb[0].mxu0
        %v2685 = vadd.f32 0.0, %v2684
        %v2686 = vpop.f32.mrb[0].mxu0
        %2687 = vmatprep.mubr.bf16.mxu0 0
        %2688 = vmatmul.mubr.bf16.gmra.mrb[0].mxu0 %v2478
        %v2689 = vpop.f32.mrb[0].mxu0
        %v2690 = vadd.f32 0.0, %v2689
        %v2691 = vpop.f32.mrb[0].mxu0
        %v2692 = vpop.f32.mrb[0].mxu0
        %v2693 = vadd.f32 0.0, %v2692
        %v2694 = vpop.f32.mrb[0].mxu0
        %2695 = vmatprep.mubr.bf16.mxu0 0
        %2696 = vmatmul.mubr.bf16.gmra.mrb[0].mxu0 %v2480
        %v2697 = vpop.f32.mrb[0].mxu0
        %v2698 = vadd.f32 0.0, %v2697
        %v2699 = vpop.f32.mrb[0].mxu0
        %v2700 = vpop.f32.mrb[0].mxu0
        %v2701 = vadd.f32 0.0, %v2700
        %v2702 = vpop.f32.mrb[0].mxu0
        %2703 = vmatprep.mubr.bf16.mxu0 0
        %2704 = vmatmul.mubr.bf16.gmra.mrb[0].mxu0 %v2482
        %v2705 = vpop.f32.mrb[0].mxu0
        %v2706 = vadd.f32 0.0, %v2705
        %v2707 = vpop.f32.mrb[0].mxu0
        %v2708 = vpop.f32.mrb[0].mxu0
        %v2709 = vadd.f32 0.0, %v2708
        %v2710 = vpop.f32.mrb[0].mxu0
        %2711 = vmatprep.mubr.bf16.mxu0 0
        %2712 = vmatmul.mubr.bf16.gmra.mrb[0].mxu0 %v2484
        %v2713 = vpop.f32.mrb[0].mxu0
        %v2714 = vadd.f32 0.0, %v2713
        %v2715 = vpop.f32.mrb[0].mxu0
        %v2716 = vpop.f32.mrb[0].mxu0
        %v2717 = vadd.f32 0.0, %v2716
        %v2718 = vpop.f32.mrb[0].mxu0
        %2719 = vmatprep.mubr.bf16.mxu0 0
        %2720 = vmatmul.mubr.bf16.gmra.mrb[0].mxu0 %v2486
        %v2721 = vpop.f32.mrb[0].mxu0
        %v2722 = vadd.f32 0.0, %v2721
        %v2723 = vpop.f32.mrb[0].mxu0
        %v2724 = vpop.f32.mrb[0].mxu0
        %v2725 = vadd.f32 0.0, %v2724
        %v2726 = vpop.f32.mrb[0].mxu0
        %2727 = vmatprep.mubr.bf16.mxu0 0
        %2728 = vmatmul.mubr.bf16.gmra.mrb[0].mxu0 %v2488
        %v2729 = vpop.f32.mrb[0].mxu0
        %v2730 = vadd.f32 0.0, %v2729
        %v2731 = vpop.f32.mrb[0].mxu0
        %v2732 = vpop.f32.mrb[0].mxu0
        %v2733 = vadd.f32 0.0, %v2732
        %v2734 = vpop.f32.mrb[0].mxu0
        %2735 = vmatprep.mubr.bf16.mxu0 0
        %2736 = vmatmul.mubr.bf16.gmra.mrb[0].mxu0 %v2490
        %v2737 = vpop.f32.mrb[0].mxu0
        %v2738 = vadd.f32 0.0, %v2737
        %v2739 = vpop.f32.mrb[0].mxu0
        %v2740 = vpop.f32.mrb[0].mxu0
        %v2741 = vadd.f32 0.0, %v2740
        %v2742 = vpop.f32.mrb[0].mxu0
        %2743 = vmatprep.mubr.bf16.mxu0 0
        %2744 = vmatmul.mubr.bf16.gmra.mrb[0].mxu0 %v2492
        %v2745 = vpop.f32.mrb[0].mxu0
        %v2746 = vadd.f32 0.0, %v2745
        %v2747 = vpop.f32.mrb[0].mxu0
        %v2748 = vpop.f32.mrb[0].mxu0
        %v2749 = vadd.f32 0.0, %v2748
        %v2750 = vpop.f32.mrb[0].mxu0
        %2751 = vmatprep.mubr.bf16.mxu0 0
        %2752 = vmatmul.mubr.bf16.gmra.mrb[0].mxu0 %v2494
        %v2753 = vpop.f32.mrb[0].mxu0
        %v2754 = vadd.f32 0.0, %v2753
        %v2755 = vpop.f32.mrb[0].mxu0
        %v2756 = vpop.f32.mrb[0].mxu0
        %v2757 = vadd.f32 0.0, %v2756
        %v2758 = vpop.f32.mrb[0].mxu0
        %2759 = vmatprep.mubr.bf16.mxu0 0
        %2760 = vmatmul.mubr.bf16.gmra.mrb[0].mxu0 %v2496
        %v2761 = vpop.f32.mrb[0].mxu0
        %v2762 = vadd.f32 0.0, %v2761
        %v2763 = vpop.f32.mrb[0].mxu0
        %v2764 = vpop.f32.mrb[0].mxu0
        %v2765 = vadd.f32 0.0, %v2764
        %v2766 = vpop.f32.mrb[0].mxu0
        %2767 = vmatprep.mubr.bf16.mxu0 0
        %2768 = vmatmul.mubr.bf16.gmra.mrb[0].mxu0 %v2498
        %v2769 = vpop.f32.mrb[0].mxu0
        %v2770 = vadd.f32 0.0, %v2769
        %v2771 = vpop.f32.mrb[0].mxu0
        %v2772 = vpop.f32.mrb[0].mxu0
        %v2773 = vadd.f32 0.0, %v2772
        %v2774 = vpop.f32.mrb[0].mxu0
        %2775 = vmatprep.mubr.bf16.mxu0 0
        %2776 = vmatmul.mubr.bf16.gmra.mrb[0].mxu0 %v2500
        %v2777 = vpop.f32.mrb[0].mxu0
        %v2778 = vadd.f32 0.0, %v2777
        %v2779 = vpop.f32.mrb[0].mxu0
        %v2780 = vpop.f32.mrb[0].mxu0
        %v2781 = vadd.f32 0.0, %v2780
        %v2782 = vpop.f32.mrb[0].mxu0
        %2783 = vmatprep.mubr.bf16.mxu0 0
        %2784 = vmatmul.mubr.bf16.gmra.mrb[0].mxu0 %v2502
        %v2785 = vpop.f32.mrb[0].mxu0
        %v2786 = vadd.f32 0.0, %v2785
        %v2787 = vpop.f32.mrb[0].mxu0
        %v2788 = vpop.f32.mrb[0].mxu0
        %v2789 = vadd.f32 0.0, %v2788
        %v2790 = vpop.f32.mrb[0].mxu0
        %2791 = vmatprep.mubr.bf16.mxu0 0
        %2792 = vmatmul.mubr.bf16.gmra.mrb[0].mxu0 %v2504
        %v2793 = vpop.f32.mrb[0].mxu0
        %v2794 = vadd.f32 0.0, %v2793
        %v2795 = vpop.f32.mrb[0].mxu0
        %v2796 = vpop.f32.mrb[0].mxu0
        %v2797 = vadd.f32 0.0, %v2796
        %v2798 = vpop.f32.mrb[0].mxu0
        %2799 = vmatprep.mubr.bf16.mxu0 0
        %2800 = vmatmul.mubr.bf16.gmra.mrb[0].mxu0 %v2506
        %v2801 = vpop.f32.mrb[0].mxu0
        %v2802 = vadd.f32 0.0, %v2801
        %v2803 = vpop.f32.mrb[0].mxu0
        %v2804 = vpop.f32.mrb[0].mxu0
        %v2805 = vadd.f32 0.0, %v2804
        %v2806 = vpop.f32.mrb[0].mxu0
        %2807 = vmatprep.mubr.bf16.mxu0 0
        %2808 = vmatmul.mubr.bf16.gmra.mrb[0].mxu0 %v2508
        %v2809 = vpop.f32.mrb[0].mxu0
        %v2810 = vadd.f32 0.0, %v2809
        %v2811 = vpop.f32.mrb[0].mxu0
        %v2812 = vpop.f32.mrb[0].mxu0
        %v2813 = vadd.f32 0.0, %v2812
        %v2814 = vpop.f32.mrb[0].mxu0
        %2815 = vmatprep.mubr.bf16.mxu0 0
        %2816 = vmatmul.mubr.bf16.gmra.mrb[0].mxu0 %v2510
        %v2817 = vpop.f32.mrb[0].mxu0
        %v2818 = vadd.f32 0.0, %v2817
        %v2819 = vpop.f32.mrb[0].mxu0
        %v2820 = vpop.f32.mrb[0].mxu0
        %v2821 = vadd.f32 0.0, %v2820
        %v2822 = vpop.f32.mrb[0].mxu0
        %2823 = vmatprep.mubr.bf16.mxu0 0
        %2824 = vmatmul.mubr.bf16.gmra.mrb[0].mxu0 %v2512
        %v2825 = vpop.f32.mrb[0].mxu0
        %v2826 = vadd.f32 0.0, %v2825
        %v2827 = vpop.f32.mrb[0].mxu0
        %v2828 = vpop.f32.mrb[0].mxu0
        %v2829 = vadd.f32 0.0, %v2828
        %v2830 = vpop.f32.mrb[0].mxu0
        %2831 = vmatprep.mubr.bf16.mxu0 0
        %2832 = vmatmul.mubr.bf16.gmra.mrb[0].mxu0 %v2514
        %v2833 = vpop.f32.mrb[0].mxu0
        %v2834 = vadd.f32 0.0, %v2833
        %v2835 = vpop.f32.mrb[0].mxu0
        %v2836 = vpop.f32.mrb[0].mxu0
        %v2837 = vadd.f32 0.0, %v2836
        %v2838 = vpop.f32.mrb[0].mxu0
        %2839 = vmatprep.mubr.bf16.mxu0 0
        %2840 = vmatmul.mubr.bf16.gmra.mrb[0].mxu0 %v2516
        %v2841 = vpop.f32.mrb[0].mxu0
        %v2842 = vadd.f32 0.0, %v2841
        %v2843 = vpop.f32.mrb[0].mxu0
        %v2844 = vpop.f32.mrb[0].mxu0
        %v2845 = vadd.f32 0.0, %v2844
        %v2846 = vpop.f32.mrb[0].mxu0
        %2847 = vmatprep.mubr.bf16.mxu0 0
        %2848 = vmatmul.mubr.bf16.gmra.mrb[0].mxu0 %v2518
        %v2849 = vpop.f32.mrb[0].mxu0
        %v2850 = vadd.f32 0.0, %v2849
        %v2851 = vpop.f32.mrb[0].mxu0
        %v2852 = vpop.f32.mrb[0].mxu0
        %v2853 = vadd.f32 0.0, %v2852
        %v2854 = vpop.f32.mrb[0].mxu0
        %2855 = vmatprep.mubr.bf16.mxu0 0
        %2856 = vmatmul.mubr.bf16.gmra.mrb[0].mxu0 %v2520
        %v2857 = vpop.f32.mrb[0].mxu0
        %v2858 = vadd.f32 0.0, %v2857
        %v2859 = vpop.f32.mrb[0].mxu0
        %v2860 = vpop.f32.mrb[0].mxu0
        %v2861 = vadd.f32 0.0, %v2860
        %v2862 = vpop.f32.mrb[0].mxu0
        %2863 = vmatprep.mubr.bf16.mxu0 0
        %2864 = vmatmul.mubr.bf16.gmra.mrb[0].mxu0 %v2522
        %v2865 = vpop.f32.mrb[0].mxu0
        %v2866 = vadd.f32 0.0, %v2865
        %v2867 = vpop.f32.mrb[0].mxu0
        %v2868 = vpop.f32.mrb[0].mxu0
        %v2869 = vadd.f32 0.0, %v2868
        %v2870 = vpop.f32.mrb[0].mxu0
        %2871 = vmatprep.mubr.bf16.mxu0 0
        %2872 = vmatmul.mubr.bf16.gmra.mrb[0].mxu0 %v2524
        %v2873 = vpop.f32.mrb[0].mxu0
        %v2874 = vadd.f32 0.0, %v2873
        %v2875 = vpop.f32.mrb[0].mxu0
        %v2876 = vpop.f32.mrb[0].mxu0
        %v2877 = vadd.f32 0.0, %v2876
        %v2878 = vpop.f32.mrb[0].mxu0
        %2879 = vmatprep.mubr.bf16.mxu0 0
        %2880 = vmatmul.mubr.bf16.gmra.mrb[0].mxu0 %v2526
        %v2881 = vpop.f32.mrb[0].mxu0
        %v2882 = vadd.f32 0.0, %v2881
        %v2883 = vpop.f32.mrb[0].mxu0
        %v2884 = vpop.f32.mrb[0].mxu0
        %v2885 = vadd.f32 0.0, %v2884
        %v2886 = vpop.f32.mrb[0].mxu0
        %2887 = vmatprep.mubr.bf16.mxu0 0
        %2888 = vmatmul.mubr.bf16.gmra.mrb[0].mxu0 %v2528
        %v2889 = vpop.f32.mrb[0].mxu0
        %v2890 = vadd.f32 0.0, %v2889
        %v2891 = vpop.f32.mrb[0].mxu0
        %v2892 = vpop.f32.mrb[0].mxu0
        %v2893 = vadd.f32 0.0, %v2892
        %v2894 = vpop.f32.mrb[0].mxu0
        %2895 = vmatprep.mubr.bf16.mxu0 0
        %2896 = vmatmul.mubr.bf16.gmra.mrb[0].mxu0 %v2530
        %v2897 = vpop.f32.mrb[0].mxu0
        %v2898 = vadd.f32 0.0, %v2897
        %v2899 = vpop.f32.mrb[0].mxu0
        %v2900 = vpop.f32.mrb[0].mxu0
        %v2901 = vadd.f32 0.0, %v2900
        %v2902 = vpop.f32.mrb[0].mxu0
        %2903 = vmatprep.mubr.bf16.mxu0 0
        %2904 = vmatmul.mubr.bf16.gmra.mrb[0].mxu0 %v2532
        %v2905 = vpop.f32.mrb[0].mxu0
        %v2906 = vadd.f32 0.0, %v2905
        %v2907 = vpop.f32.mrb[0].mxu0
        %v2908 = vpop.f32.mrb[0].mxu0
        %v2909 = vadd.f32 0.0, %v2908
        %v2910 = vpop.f32.mrb[0].mxu0
        %2911 = vmatprep.mubr.bf16.mxu0 0
        %2912 = vmatmul.mubr.bf16.gmra.mrb[0].mxu0 %v2534
        %v2913 = vpop.f32.mrb[0].mxu0
        %v2914 = vadd.f32 0.0, %v2913
        %v2915 = vpop.f32.mrb[0].mxu0
        %v2916 = vpop.f32.mrb[0].mxu0
        %v2917 = vadd.f32 0.0, %v2916
        %v2918 = vpop.f32.mrb[0].mxu0
        %2919 = vmatprep.mubr.bf16.mxu0 0
        %2920 = vmatmul.mubr.bf16.gmra.mrb[0].mxu0 %v2536
        %v2921 = vpop.f32.mrb[0].mxu0
        %v2922 = vadd.f32 0.0, %v2921
        %v2923 = vpop.f32.mrb[0].mxu0
        %v2924 = vpop.f32.mrb[0].mxu0
        %v2925 = vadd.f32 0.0, %v2924
        %v2926 = vpop.f32.mrb[0].mxu0
        %2927 = vmatprep.mubr.bf16.mxu0 0
        %2928 = vmatmul.mubr.bf16.gmra.mrb[0].mxu0 %v2538
        %v2929 = vpop.f32.mrb[0].mxu0
        %v2930 = vadd.f32 0.0, %v2929
        %v2931 = vpop.f32.mrb[0].mxu0
        %v2932 = vpop.f32.mrb[0].mxu0
        %v2933 = vadd.f32 0.0, %v2932
        %v2934 = vpop.f32.mrb[0].mxu0
        %2935 = vmatprep.mubr.bf16.mxu0 0
        %2936 = vmatmul.mubr.bf16.gmra.mrb[0].mxu0 %v2540
        %v2937 = vpop.f32.mrb[0].mxu0
        %v2938 = vadd.f32 0.0, %v2937
        %v2939 = vpop.f32.mrb[0].mxu0
        %v2940 = vpop.f32.mrb[0].mxu0
        %v2941 = vadd.f32 0.0, %v2940
        %v2942 = vpop.f32.mrb[0].mxu0
        %2943 = vmatprep.mubr.bf16.mxu0 0
        %2944 = vmatmul.mubr.bf16.gmra.mrb[0].mxu0 %v2542
        %v2945 = vpop.f32.mrb[0].mxu0
        %v2946 = vadd.f32 0.0, %v2945
        %v2947 = vpop.f32.mrb[0].mxu0
        %v2948 = vpop.f32.mrb[0].mxu0
        %v2949 = vadd.f32 0.0, %v2948
        %v2950 = vpop.f32.mrb[0].mxu0
        %2951 = vmatprep.mubr.bf16.mxu0 0
        %2952 = vmatmul.mubr.bf16.gmra.mrb[0].mxu0 %v2544
        %v2953 = vpop.f32.mrb[0].mxu0
        %v2954 = vadd.f32 0.0, %v2953
        %v2955 = vpop.f32.mrb[0].mxu0
        %v2956 = vpop.f32.mrb[0].mxu0
        %v2957 = vadd.f32 0.0, %v2956
        %v2958 = vpop.f32.mrb[0].mxu0
        %2959 = vmatprep.mubr.bf16.mxu0 0
        %2960 = vmatmul.mubr.bf16.gmra.mrb[0].mxu0 %v2546
        %v2961 = vpop.f32.mrb[0].mxu0
        %v2962 = vadd.f32 0.0, %v2961
        %v2963 = vpop.f32.mrb[0].mxu0
        %v2964 = vpop.f32.mrb[0].mxu0
        %v2965 = vadd.f32 0.0, %v2964
        %v2966 = vpop.f32.mrb[0].mxu0
        %2967 = vmatprep.mubr.bf16.mxu0 0
        %2968 = vmatmul.mubr.bf16.gmra.mrb[0].mxu0 %v2548
        %v2969 = vpop.f32.mrb[0].mxu0
        %v2970 = vadd.f32 0.0, %v2969
        %v2971 = vpop.f32.mrb[0].mxu0
        %v2972 = vpop.f32.mrb[0].mxu0
        %v2973 = vadd.f32 0.0, %v2972
        %v2974 = vpop.f32.mrb[0].mxu0
        %2975 = vmatprep.mubr.bf16.mxu0 0
        %2976 = vmatmul.mubr.bf16.gmra.mrb[0].mxu0 %v2550
        %v2977 = vpop.f32.mrb[0].mxu0
        %v2978 = vadd.f32 0.0, %v2977
        %v2979 = vpop.f32.mrb[0].mxu0
        %v2980 = vpop.f32.mrb[0].mxu0
        %v2981 = vadd.f32 0.0, %v2980
        %v2982 = vpop.f32.mrb[0].mxu0
        %2983 = vmatprep.mubr.bf16.mxu0 0
        %2984 = vmatmul.mubr.bf16.gmra.mrb[0].mxu0 %v2552
        %v2985 = vpop.f32.mrb[0].mxu0
        %v2986 = vadd.f32 0.0, %v2985
        %v2987 = vpop.f32.mrb[0].mxu0
        %v2988 = vpop.f32.mrb[0].mxu0
        %v2989 = vadd.f32 0.0, %v2988
        %v2990 = vpop.f32.mrb[0].mxu0
        %2991 = vmatprep.mubr.bf16.mxu0 0
        %2992 = vmatmul.mubr.bf16.gmra.mrb[0].mxu0 %v2554
        %v2993 = vpop.f32.mrb[0].mxu0
        %v2994 = vadd.f32 0.0, %v2993
        %v2995 = vpop.f32.mrb[0].mxu0
        %v2996 = vpop.f32.mrb[0].mxu0
        %v2997 = vadd.f32 0.0, %v2996
        %v2998 = vpop.f32.mrb[0].mxu0
        %2999 = vmatprep.mubr.bf16.mxu0 0
        %3000 = vmatmul.mubr.bf16.gmra.mrb[0].mxu0 %v2556
        %v3001 = vpop.f32.mrb[0].mxu0
        %v3002 = vadd.f32 0.0, %v3001
        %v3003 = vpop.f32.mrb[0].mxu0
        %v3004 = vpop.f32.mrb[0].mxu0
        %v3005 = vadd.f32 0.0, %v3004
        %v3006 = vpop.f32.mrb[0].mxu0
        %3007 = vmatprep.mubr.bf16.mxu0 0
        %3008 = vmatmul.mubr.bf16.gmra.mrb[0].mxu0 %v2558
        %v3009 = vpop.f32.mrb[0].mxu0
        %v3010 = vadd.f32 0.0, %v3009
        %v3011 = vpop.f32.mrb[0].mxu0
        %v3012 = vpop.f32.mrb[0].mxu0
        %v3013 = vadd.f32 0.0, %v3012
        %v3014 = vpop.f32.mrb[0].mxu0
        %3015 = vmatprep.mubr.bf16.mxu0 0
        %3016 = vmatmul.mubr.bf16.gmra.mrb[0].mxu0 %v2560
        %v3017 = vpop.f32.mrb[0].mxu0
        %v3018 = vadd.f32 0.0, %v3017
        %v3019 = vpop.f32.mrb[0].mxu0
        %v3020 = vpop.f32.mrb[0].mxu0
        %v3021 = vadd.f32 0.0, %v3020
        %v3022 = vpop.f32.mrb[0].mxu0
        %3023 = vmatprep.mubr.bf16.mxu0 0
        %3024 = vmatmul.mubr.bf16.gmra.mrb[0].mxu0 %v2562
        %v3025 = vpop.f32.mrb[0].mxu0
        %v3026 = vadd.f32 0.0, %v3025
        %v3027 = vpop.f32.mrb[0].mxu0
        %v3028 = vpop.f32.mrb[0].mxu0
        %v3029 = vadd.f32 0.0, %v3028
        %v3030 = vpop.f32.mrb[0].mxu0
        %3031 = vmatprep.mubr.bf16.mxu0 0
        %3032 = vmatmul.mubr.bf16.gmra.mrb[0].mxu0 %v2564
        %v3033 = vpop.f32.mrb[0].mxu0
        %v3034 = vadd.f32 0.0, %v3033
        %v3035 = vpop.f32.mrb[0].mxu0
        %v3036 = vpop.f32.mrb[0].mxu0
        %v3037 = vadd.f32 0.0, %v3036
        %v3038 = vpop.f32.mrb[0].mxu0
        %3039 = vmatprep.mubr.bf16.mxu0 0
        %3040 = vmatmul.mubr.bf16.gmra.mrb[0].mxu0 %v2566
        %v3041 = vpop.f32.mrb[0].mxu0
        %v3042 = vadd.f32 0.0, %v3041
        %v3043 = vpop.f32.mrb[0].mxu0
        %v3044 = vpop.f32.mrb[0].mxu0
        %v3045 = vadd.f32 0.0, %v3044
        %v3046 = vpop.f32.mrb[0].mxu0
        %3047 = vmatprep.mubr.bf16.mxu0 0
        %3048 = vmatmul.mubr.bf16.gmra.mrb[0].mxu0 %v2568
        %v3049 = vpop.f32.mrb[0].mxu0
        %v3050 = vadd.f32 0.0, %v3049
        %v3051 = vpop.f32.mrb[0].mxu0
        %v3052 = vpop.f32.mrb[0].mxu0
        %v3053 = vadd.f32 0.0, %v3052
        %v3054 = vpop.f32.mrb[0].mxu0
        %3055 = vmatprep.mubr.bf16.mxu0 0
        %3056 = vmatmul.mubr.bf16.gmra.mrb[0].mxu0 %v2570
        %v3057 = vpop.f32.mrb[0].mxu0
        %v3058 = vadd.f32 0.0, %v3057
        %v3059 = vpop.f32.mrb[0].mxu0
        %v3060 = vpop.f32.mrb[0].mxu0
        %v3061 = vadd.f32 0.0, %v3060
        %v3062 = vpop.f32.mrb[0].mxu0
        %3063 = vmatprep.mubr.bf16.mxu0 0
        %3064 = vmatmul.mubr.bf16.gmra.mrb[0].mxu0 %v2572
        %v3065 = vpop.f32.mrb[0].mxu0
        %v3066 = vadd.f32 0.0, %v3065
        %v3067 = vpop.f32.mrb[0].mxu0
        %v3068 = vpop.f32.mrb[0].mxu0
        %v3069 = vadd.f32 0.0, %v3068
        %v3070 = vpop.f32.mrb[0].mxu0
        %3071 = vmatprep.mubr.bf16.mxu0 0
        %3072 = vmatmul.mubr.bf16.gmra.mrb[0].mxu0 %v2574
        %v3073 = vpop.f32.mrb[0].mxu0
        %v3074 = vadd.f32 0.0, %v3073
        %v3075 = vpop.f32.mrb[0].mxu0
        %v3076 = vpop.f32.mrb[0].mxu0
        %v3077 = vadd.f32 0.0, %v3076
        %v3078 = vpop.f32.mrb[0].mxu0
        %3079 = vmatprep.mubr.bf16.mxu0 0
        %3080 = vmatmul.mubr.bf16.gmra.mrb[0].mxu0 %v2576
        %v3081 = vpop.f32.mrb[0].mxu0
        %v3082 = vadd.f32 0.0, %v3081
        %v3083 = vpop.f32.mrb[0].mxu0
        %v3084 = vpop.f32.mrb[0].mxu0
        %v3085 = vadd.f32 0.0, %v3084
        %v3086 = vpop.f32.mrb[0].mxu0
        %3087 = vmatprep.mubr.bf16.mxu0 0
        %3088 = vmatmul.mubr.bf16.gmra.mrb[0].mxu0 %v2578
        %v3089 = vpop.f32.mrb[0].mxu0
        %v3090 = vadd.f32 0.0, %v3089
        %v3091 = vpop.f32.mrb[0].mxu0
        %v3092 = vpop.f32.mrb[0].mxu0
        %v3093 = vadd.f32 0.0, %v3092
        %v3094 = vpop.f32.mrb[0].mxu0
        %3095 = vmatprep.mubr.bf16.mxu0 0
        %3096 = vmatmul.mubr.bf16.gmra.mrb[0].mxu0 %v2580
        %v3097 = vpop.f32.mrb[0].mxu0
        %v3098 = vadd.f32 0.0, %v3097
        %v3099 = vpop.f32.mrb[0].mxu0
        %v3100 = vpop.f32.mrb[0].mxu0
        %v3101 = vadd.f32 0.0, %v3100
        %v3102 = vpop.f32.mrb[0].mxu0
        %3103 = vmatprep.mubr.bf16.mxu0 0
        %3104 = vmatmul.mubr.bf16.gmra.mrb[0].mxu0 %v2582
        %v3105 = vpop.f32.mrb[0].mxu0
        %v3106 = vadd.f32 0.0, %v3105
        %v3107 = vpop.f32.mrb[0].mxu0
        %v3108 = vpop.f32.mrb[0].mxu0
        %v3109 = vadd.f32 0.0, %v3108
        %v3110 = vpop.f32.mrb[0].mxu0
        %3111 = vmatprep.mubr.bf16.mxu0 0
        %3112 = vmatmul.mubr.bf16.gmra.mrb[0].mxu0 %v2584
        %v3113 = vpop.f32.mrb[0].mxu0
        %v3114 = vadd.f32 0.0, %v3113
        %v3115 = vpop.f32.mrb[0].mxu0
        %v3116 = vpop.f32.mrb[0].mxu0
        %v3117 = vadd.f32 0.0, %v3116
        %v3118 = vpop.f32.mrb[0].mxu0
        %3119 = vmatprep.mubr.bf16.mxu0 0
        %3120 = vmatmul.mubr.bf16.gmra.mrb[0].mxu0 %v2586
        %v3121 = vpop.f32.mrb[0].mxu0
        %v3122 = vadd.f32 0.0, %v3121
        %v3123 = vpop.f32.mrb[0].mxu0
        %v3124 = vpop.f32.mrb[0].mxu0
        %v3125 = vadd.f32 0.0, %v3124
        %v3126 = vpop.f32.mrb[0].mxu0
        %3127 = vmatprep.mubr.bf16.mxu0 0
        %3128 = vmatmul.mubr.bf16.gmra.mrb[0].mxu0 %v2588
        %v3129 = vpop.f32.mrb[0].mxu0
        %v3130 = vadd.f32 0.0, %v3129
        %v3131 = vpop.f32.mrb[0].mxu0
        %v3132 = vpop.f32.mrb[0].mxu0
        %v3133 = vadd.f32 0.0, %v3132
        %v3134 = vpop.f32.mrb[0].mxu0
        %3135 = vmatprep.mubr.bf16.mxu0 0
        %3136 = vmatmul.mubr.bf16.gmra.mrb[0].mxu0 %v2590
        %v3137 = vpop.f32.mrb[0].mxu0
        %v3138 = vadd.f32 0.0, %v3137
        %v3139 = vpop.f32.mrb[0].mxu0
        %v3140 = vpop.f32.mrb[0].mxu0
        %v3141 = vadd.f32 0.0, %v3140
        %v3142 = vpop.f32.mrb[0].mxu0
        %3143 = vdwg.mxu0
        %v3146 = vunpack.c.l.b16 %v2453
        %v3147 = vunpack.c.l.b16 %v2454
        %v3148 = vpack.c.b16 %v3147, %v3146
        %v3149 = vsel %vm2463, %v2322, 0
        %v3151 = vsel %vm2463, %v2324, 0
        %v3154 = vand.u32 %v3148, %v2595
        %3156 = vmatprep.subr.bf16.mxu0 0
        %3157 = vmatpush1.bf16.msra.mxu0 %v3154
        %3158 = vmatprep.subr.bf16.mxu0 0
        %3159 = vmatpush1.bf16.msra.mxu0 0
        %3160 = vmatprep.subr.bf16.mxu0 0
        %3161 = vmatpush1.bf16.msra.mxu0 0
        %3162 = vmatprep.subr.bf16.mxu0 0
        %3163 = vmatpush1.bf16.msra.mxu0 0
        %3164 = vmatprep.subr.bf16.mxu0 0
        %3165 = vmatpush1.bf16.msra.mxu0 0
        %3166 = vmatprep.subr.bf16.mxu0 0
        %3167 = vmatpush1.bf16.msra.mxu0 0
        %3168 = vmatprep.subr.bf16.mxu0 0
        %3169 = vmatpush1.bf16.msra.mxu0 0
        %3170 = vmatprep.subr.bf16.mxu0 0
        %3171 = vmatpush1.bf16.msra.mxu0 0
        %3172 = vmatprep.subr.bf16.mxu0 0
        %3173 = vmatpush1.bf16.msra.mxu0 0
        %3174 = vmatprep.subr.bf16.mxu0 0
        %3175 = vmatpush1.bf16.msra.mxu0 0
        %3176 = vmatprep.subr.bf16.mxu0 0
        %3177 = vmatpush1.bf16.msra.mxu0 0
        %3178 = vmatprep.subr.bf16.mxu0 0
        %3179 = vmatpush1.bf16.msra.mxu0 0
        %3180 = vmatprep.subr.bf16.mxu0 0
        %3181 = vmatpush1.bf16.msra.mxu0 0
        %3182 = vmatprep.subr.bf16.mxu0 0
        %3183 = vmatpush1.bf16.msra.mxu0 0
        %3184 = vmatprep.subr.bf16.mxu0 0
        %3185 = vmatpush1.bf16.msra.mxu0 0
        %3186 = vmatprep.subr.bf16.mxu0 0
        %3187 = vmatpush1.bf16.msra.mxu0 0
        %3188 = vmatprep.mubr.bf16.mxu0 0
        %3189 = vmatmul.mubr.bf16.gmra.mrb[0].mxu0 %v3149
        %v3190 = vpop.f32.mrb[0].mxu0
        %v3191 = vadd.f32 %v2634, %v3190
        %v3192 = vpop.f32.mrb[0].mxu0
        %v3193 = vpop.f32.mrb[0].mxu0
        %v3194 = vadd.f32 %v2637, %v3193
        %v3195 = vpop.f32.mrb[0].mxu0
        %3196 = vmatprep.mubr.bf16.mxu0 0
        %3197 = vmatmul.mubr.bf16.gmra.mrb[0].mxu0 %v3151
        %v3198 = vpop.f32.mrb[0].mxu0
        %v3199 = vadd.f32 %v2642, %v3198
        %v3200 = vpop.f32.mrb[0].mxu0
        %v3201 = vpop.f32.mrb[0].mxu0
        %v3202 = vadd.f32 %v2645, %v3201
        %v3203 = vpop.f32.mrb[0].mxu0
        %3204 = vmatprep.mubr.bf16.mxu0 0
        %3205 = vmatmul.mubr.bf16.gmra.mrb[0].mxu0 %v2464
        %v3206 = vpop.f32.mrb[0].mxu0
        %v3207 = vadd.f32 %v2650, %v3206
        %v3208 = vpop.f32.mrb[0].mxu0
        %v3209 = vpop.f32.mrb[0].mxu0
        %v3210 = vadd.f32 %v2653, %v3209
        %v3211 = vpop.f32.mrb[0].mxu0
        %3212 = vmatprep.mubr.bf16.mxu0 0
        %3213 = vmatmul.mubr.bf16.gmra.mrb[0].mxu0 %v2466
        %v3214 = vpop.f32.mrb[0].mxu0
        %v3215 = vadd.f32 %v2658, %v3214
        %v3216 = vpop.f32.mrb[0].mxu0
        %v3217 = vpop.f32.mrb[0].mxu0
        %v3218 = vadd.f32 %v2661, %v3217
        %v3219 = vpop.f32.mrb[0].mxu0
        %3220 = vmatprep.mubr.bf16.mxu0 0
        %3221 = vmatmul.mubr.bf16.gmra.mrb[0].mxu0 %v2468
        %v3222 = vpop.f32.mrb[0].mxu0
        %v3223 = vadd.f32 %v2666, %v3222
        %v3224 = vpop.f32.mrb[0].mxu0
        %v3225 = vpop.f32.mrb[0].mxu0
        %v3226 = vadd.f32 %v2669, %v3225
        %v3227 = vpop.f32.mrb[0].mxu0
        %3228 = vmatprep.mubr.bf16.mxu0 0
        %3229 = vmatmul.mubr.bf16.gmra.mrb[0].mxu0 %v2470
        %v3230 = vpop.f32.mrb[0].mxu0
        %v3231 = vadd.f32 %v2674, %v3230
        %v3232 = vpop.f32.mrb[0].mxu0
        %v3233 = vpop.f32.mrb[0].mxu0
        %v3234 = vadd.f32 %v2677, %v3233
        %v3235 = vpop.f32.mrb[0].mxu0
        %3236 = vmatprep.mubr.bf16.mxu0 0
        %3237 = vmatmul.mubr.bf16.gmra.mrb[0].mxu0 %v2472
        %v3238 = vpop.f32.mrb[0].mxu0
        %v3239 = vadd.f32 %v2682, %v3238
        %v3240 = vpop.f32.mrb[0].mxu0
        %v3241 = vpop.f32.mrb[0].mxu0
        %v3242 = vadd.f32 %v2685, %v3241
        %v3243 = vpop.f32.mrb[0].mxu0
        %3244 = vmatprep.mubr.bf16.mxu0 0
        %3245 = vmatmul.mubr.bf16.gmra.mrb[0].mxu0 %v2474
        %v3246 = vpop.f32.mrb[0].mxu0
        %v3247 = vadd.f32 %v2690, %v3246
        %v3248 = vpop.f32.mrb[0].mxu0
        %v3249 = vpop.f32.mrb[0].mxu0
        %v3250 = vadd.f32 %v2693, %v3249
        %v3251 = vpop.f32.mrb[0].mxu0
        %3252 = vmatprep.mubr.bf16.mxu0 0
        %3253 = vmatmul.mubr.bf16.gmra.mrb[0].mxu0 %v2476
        %v3254 = vpop.f32.mrb[0].mxu0
        %v3255 = vadd.f32 %v2698, %v3254
        %v3256 = vpop.f32.mrb[0].mxu0
        %v3257 = vpop.f32.mrb[0].mxu0
        %v3258 = vadd.f32 %v2701, %v3257
        %v3259 = vpop.f32.mrb[0].mxu0
        %3260 = vmatprep.mubr.bf16.mxu0 0
        %3261 = vmatmul.mubr.bf16.gmra.mrb[0].mxu0 %v2478
        %v3262 = vpop.f32.mrb[0].mxu0
        %v3263 = vadd.f32 %v2706, %v3262
        %v3264 = vpop.f32.mrb[0].mxu0
        %v3265 = vpop.f32.mrb[0].mxu0
        %v3266 = vadd.f32 %v2709, %v3265
        %v3267 = vpop.f32.mrb[0].mxu0
        %3268 = vmatprep.mubr.bf16.mxu0 0
        %3269 = vmatmul.mubr.bf16.gmra.mrb[0].mxu0 %v2480
        %v3270 = vpop.f32.mrb[0].mxu0
        %v3271 = vadd.f32 %v2714, %v3270
        %v3272 = vpop.f32.mrb[0].mxu0
        %v3273 = vpop.f32.mrb[0].mxu0
        %v3274 = vadd.f32 %v2717, %v3273
        %v3275 = vpop.f32.mrb[0].mxu0
        %3276 = vmatprep.mubr.bf16.mxu0 0
        %3277 = vmatmul.mubr.bf16.gmra.mrb[0].mxu0 %v2482
        %v3278 = vpop.f32.mrb[0].mxu0
        %v3279 = vadd.f32 %v2722, %v3278
        %v3280 = vpop.f32.mrb[0].mxu0
        %v3281 = vpop.f32.mrb[0].mxu0
        %v3282 = vadd.f32 %v2725, %v3281
        %v3283 = vpop.f32.mrb[0].mxu0
        %3284 = vmatprep.mubr.bf16.mxu0 0
        %3285 = vmatmul.mubr.bf16.gmra.mrb[0].mxu0 %v2484
        %v3286 = vpop.f32.mrb[0].mxu0
        %v3287 = vadd.f32 %v2730, %v3286
        %v3288 = vpop.f32.mrb[0].mxu0
        %v3289 = vpop.f32.mrb[0].mxu0
        %v3290 = vadd.f32 %v2733, %v3289
        %v3291 = vpop.f32.mrb[0].mxu0
        %3292 = vmatprep.mubr.bf16.mxu0 0
        %3293 = vmatmul.mubr.bf16.gmra.mrb[0].mxu0 %v2486
        %v3294 = vpop.f32.mrb[0].mxu0
        %v3295 = vadd.f32 %v2738, %v3294
        %v3296 = vpop.f32.mrb[0].mxu0
        %v3297 = vpop.f32.mrb[0].mxu0
        %v3298 = vadd.f32 %v2741, %v3297
        %v3299 = vpop.f32.mrb[0].mxu0
        %3300 = vmatprep.mubr.bf16.mxu0 0
        %3301 = vmatmul.mubr.bf16.gmra.mrb[0].mxu0 %v2488
        %v3302 = vpop.f32.mrb[0].mxu0
        %v3303 = vadd.f32 %v2746, %v3302
        %v3304 = vpop.f32.mrb[0].mxu0
        %v3305 = vpop.f32.mrb[0].mxu0
        %v3306 = vadd.f32 %v2749, %v3305
        %v3307 = vpop.f32.mrb[0].mxu0
        %3308 = vmatprep.mubr.bf16.mxu0 0
        %3309 = vmatmul.mubr.bf16.gmra.mrb[0].mxu0 %v2490
        %v3310 = vpop.f32.mrb[0].mxu0
        %v3311 = vadd.f32 %v2754, %v3310
        %v3312 = vpop.f32.mrb[0].mxu0
        %v3313 = vpop.f32.mrb[0].mxu0
        %v3314 = vadd.f32 %v2757, %v3313
        %v3315 = vpop.f32.mrb[0].mxu0
        %3316 = vmatprep.mubr.bf16.mxu0 0
        %3317 = vmatmul.mubr.bf16.gmra.mrb[0].mxu0 %v2492
        %v3318 = vpop.f32.mrb[0].mxu0
        %v3319 = vadd.f32 %v2762, %v3318
        %v3320 = vpop.f32.mrb[0].mxu0
        %v3321 = vpop.f32.mrb[0].mxu0
        %v3322 = vadd.f32 %v2765, %v3321
        %v3323 = vpop.f32.mrb[0].mxu0
        %3324 = vmatprep.mubr.bf16.mxu0 0
        %3325 = vmatmul.mubr.bf16.gmra.mrb[0].mxu0 %v2494
        %v3326 = vpop.f32.mrb[0].mxu0
        %v3327 = vadd.f32 %v2770, %v3326
        %v3328 = vpop.f32.mrb[0].mxu0
        %v3329 = vpop.f32.mrb[0].mxu0
        %v3330 = vadd.f32 %v2773, %v3329
        %v3331 = vpop.f32.mrb[0].mxu0
        %3332 = vmatprep.mubr.bf16.mxu0 0
        %3333 = vmatmul.mubr.bf16.gmra.mrb[0].mxu0 %v2496
        %v3334 = vpop.f32.mrb[0].mxu0
        %v3335 = vadd.f32 %v2778, %v3334
        %v3336 = vpop.f32.mrb[0].mxu0
        %v3337 = vpop.f32.mrb[0].mxu0
        %v3338 = vadd.f32 %v2781, %v3337
        %v3339 = vpop.f32.mrb[0].mxu0
        %3340 = vmatprep.mubr.bf16.mxu0 0
        %3341 = vmatmul.mubr.bf16.gmra.mrb[0].mxu0 %v2498
        %v3342 = vpop.f32.mrb[0].mxu0
        %v3343 = vadd.f32 %v2786, %v3342
        %v3344 = vpop.f32.mrb[0].mxu0
        %v3345 = vpop.f32.mrb[0].mxu0
        %v3346 = vadd.f32 %v2789, %v3345
        %v3347 = vpop.f32.mrb[0].mxu0
        %3348 = vmatprep.mubr.bf16.mxu0 0
        %3349 = vmatmul.mubr.bf16.gmra.mrb[0].mxu0 %v2500
        %v3350 = vpop.f32.mrb[0].mxu0
        %v3351 = vadd.f32 %v2794, %v3350
        %v3352 = vpop.f32.mrb[0].mxu0
        %v3353 = vpop.f32.mrb[0].mxu0
        %v3354 = vadd.f32 %v2797, %v3353
        %v3355 = vpop.f32.mrb[0].mxu0
        %3356 = vmatprep.mubr.bf16.mxu0 0
        %3357 = vmatmul.mubr.bf16.gmra.mrb[0].mxu0 %v2502
        %v3358 = vpop.f32.mrb[0].mxu0
        %v3359 = vadd.f32 %v2802, %v3358
        %v3360 = vpop.f32.mrb[0].mxu0
        %v3361 = vpop.f32.mrb[0].mxu0
        %v3362 = vadd.f32 %v2805, %v3361
        %v3363 = vpop.f32.mrb[0].mxu0
        %3364 = vmatprep.mubr.bf16.mxu0 0
        %3365 = vmatmul.mubr.bf16.gmra.mrb[0].mxu0 %v2504
        %v3366 = vpop.f32.mrb[0].mxu0
        %v3367 = vadd.f32 %v2810, %v3366
        %v3368 = vpop.f32.mrb[0].mxu0
        %v3369 = vpop.f32.mrb[0].mxu0
        %v3370 = vadd.f32 %v2813, %v3369
        %v3371 = vpop.f32.mrb[0].mxu0
        %3372 = vmatprep.mubr.bf16.mxu0 0
        %3373 = vmatmul.mubr.bf16.gmra.mrb[0].mxu0 %v2506
        %v3374 = vpop.f32.mrb[0].mxu0
        %v3375 = vadd.f32 %v2818, %v3374
        %v3376 = vpop.f32.mrb[0].mxu0
        %v3377 = vpop.f32.mrb[0].mxu0
        %v3378 = vadd.f32 %v2821, %v3377
        %v3379 = vpop.f32.mrb[0].mxu0
        %3380 = vmatprep.mubr.bf16.mxu0 0
        %3381 = vmatmul.mubr.bf16.gmra.mrb[0].mxu0 %v2508
        %v3382 = vpop.f32.mrb[0].mxu0
        %v3383 = vadd.f32 %v2826, %v3382
        %v3384 = vpop.f32.mrb[0].mxu0
        %v3385 = vpop.f32.mrb[0].mxu0
        %v3386 = vadd.f32 %v2829, %v3385
        %v3387 = vpop.f32.mrb[0].mxu0
        %3388 = vmatprep.mubr.bf16.mxu0 0
        %3389 = vmatmul.mubr.bf16.gmra.mrb[0].mxu0 %v2510
        %v3390 = vpop.f32.mrb[0].mxu0
        %v3391 = vadd.f32 %v2834, %v3390
        %v3392 = vpop.f32.mrb[0].mxu0
        %v3393 = vpop.f32.mrb[0].mxu0
        %v3394 = vadd.f32 %v2837, %v3393
        %v3395 = vpop.f32.mrb[0].mxu0
        %3396 = vmatprep.mubr.bf16.mxu0 0
        %3397 = vmatmul.mubr.bf16.gmra.mrb[0].mxu0 %v2512
        %v3398 = vpop.f32.mrb[0].mxu0
        %v3399 = vadd.f32 %v2842, %v3398
        %v3400 = vpop.f32.mrb[0].mxu0
        %v3401 = vpop.f32.mrb[0].mxu0
        %v3402 = vadd.f32 %v2845, %v3401
        %v3403 = vpop.f32.mrb[0].mxu0
        %3404 = vmatprep.mubr.bf16.mxu0 0
        %3405 = vmatmul.mubr.bf16.gmra.mrb[0].mxu0 %v2514
        %v3406 = vpop.f32.mrb[0].mxu0
        %v3407 = vadd.f32 %v2850, %v3406
        %v3408 = vpop.f32.mrb[0].mxu0
        %v3409 = vpop.f32.mrb[0].mxu0
        %v3410 = vadd.f32 %v2853, %v3409
        %v3411 = vpop.f32.mrb[0].mxu0
        %3412 = vmatprep.mubr.bf16.mxu0 0
        %3413 = vmatmul.mubr.bf16.gmra.mrb[0].mxu0 %v2516
        %v3414 = vpop.f32.mrb[0].mxu0
        %v3415 = vadd.f32 %v2858, %v3414
        %v3416 = vpop.f32.mrb[0].mxu0
        %v3417 = vpop.f32.mrb[0].mxu0
        %v3418 = vadd.f32 %v2861, %v3417
        %v3419 = vpop.f32.mrb[0].mxu0
        %3420 = vmatprep.mubr.bf16.mxu0 0
        %3421 = vmatmul.mubr.bf16.gmra.mrb[0].mxu0 %v2518
        %v3422 = vpop.f32.mrb[0].mxu0
        %v3423 = vadd.f32 %v2866, %v3422
        %v3424 = vpop.f32.mrb[0].mxu0
        %v3425 = vpop.f32.mrb[0].mxu0
        %v3426 = vadd.f32 %v2869, %v3425
        %v3427 = vpop.f32.mrb[0].mxu0
        %3428 = vmatprep.mubr.bf16.mxu0 0
        %3429 = vmatmul.mubr.bf16.gmra.mrb[0].mxu0 %v2520
        %v3430 = vpop.f32.mrb[0].mxu0
        %v3431 = vadd.f32 %v2874, %v3430
        %v3432 = vpop.f32.mrb[0].mxu0
        %v3433 = vpop.f32.mrb[0].mxu0
        %v3434 = vadd.f32 %v2877, %v3433
        %v3435 = vpop.f32.mrb[0].mxu0
        %3436 = vmatprep.mubr.bf16.mxu0 0
        %3437 = vmatmul.mubr.bf16.gmra.mrb[0].mxu0 %v2522
        %v3438 = vpop.f32.mrb[0].mxu0
        %v3439 = vadd.f32 %v2882, %v3438
        %v3440 = vpop.f32.mrb[0].mxu0
        %v3441 = vpop.f32.mrb[0].mxu0
        %v3442 = vadd.f32 %v2885, %v3441
        %v3443 = vpop.f32.mrb[0].mxu0
        %3444 = vmatprep.mubr.bf16.mxu0 0
        %3445 = vmatmul.mubr.bf16.gmra.mrb[0].mxu0 %v2524
        %v3446 = vpop.f32.mrb[0].mxu0
        %v3447 = vadd.f32 %v2890, %v3446
        %v3448 = vpop.f32.mrb[0].mxu0
        %v3449 = vpop.f32.mrb[0].mxu0
        %v3450 = vadd.f32 %v2893, %v3449
        %v3451 = vpop.f32.mrb[0].mxu0
        %3452 = vmatprep.mubr.bf16.mxu0 0
        %3453 = vmatmul.mubr.bf16.gmra.mrb[0].mxu0 %v2526
        %v3454 = vpop.f32.mrb[0].mxu0
        %v3455 = vadd.f32 %v2898, %v3454
        %v3456 = vpop.f32.mrb[0].mxu0
        %v3457 = vpop.f32.mrb[0].mxu0
        %v3458 = vadd.f32 %v2901, %v3457
        %v3459 = vpop.f32.mrb[0].mxu0
        %3460 = vmatprep.mubr.bf16.mxu0 0
        %3461 = vmatmul.mubr.bf16.gmra.mrb[0].mxu0 %v2528
        %v3462 = vpop.f32.mrb[0].mxu0
        %v3463 = vadd.f32 %v2906, %v3462
        %v3464 = vpop.f32.mrb[0].mxu0
        %v3465 = vpop.f32.mrb[0].mxu0
        %v3466 = vadd.f32 %v2909, %v3465
        %v3467 = vpop.f32.mrb[0].mxu0
        %3468 = vmatprep.mubr.bf16.mxu0 0
        %3469 = vmatmul.mubr.bf16.gmra.mrb[0].mxu0 %v2530
        %v3470 = vpop.f32.mrb[0].mxu0
        %v3471 = vadd.f32 %v2914, %v3470
        %v3472 = vpop.f32.mrb[0].mxu0
        %v3473 = vpop.f32.mrb[0].mxu0
        %v3474 = vadd.f32 %v2917, %v3473
        %v3475 = vpop.f32.mrb[0].mxu0
        %3476 = vmatprep.mubr.bf16.mxu0 0
        %3477 = vmatmul.mubr.bf16.gmra.mrb[0].mxu0 %v2532
        %v3478 = vpop.f32.mrb[0].mxu0
        %v3479 = vadd.f32 %v2922, %v3478
        %v3480 = vpop.f32.mrb[0].mxu0
        %v3481 = vpop.f32.mrb[0].mxu0
        %v3482 = vadd.f32 %v2925, %v3481
        %v3483 = vpop.f32.mrb[0].mxu0
        %3484 = vmatprep.mubr.bf16.mxu0 0
        %3485 = vmatmul.mubr.bf16.gmra.mrb[0].mxu0 %v2534
        %v3486 = vpop.f32.mrb[0].mxu0
        %v3487 = vadd.f32 %v2930, %v3486
        %v3488 = vpop.f32.mrb[0].mxu0
        %v3489 = vpop.f32.mrb[0].mxu0
        %v3490 = vadd.f32 %v2933, %v3489
        %v3491 = vpop.f32.mrb[0].mxu0
        %3492 = vmatprep.mubr.bf16.mxu0 0
        %3493 = vmatmul.mubr.bf16.gmra.mrb[0].mxu0 %v2536
        %v3494 = vpop.f32.mrb[0].mxu0
        %v3495 = vadd.f32 %v2938, %v3494
        %v3496 = vpop.f32.mrb[0].mxu0
        %v3497 = vpop.f32.mrb[0].mxu0
        %v3498 = vadd.f32 %v2941, %v3497
        %v3499 = vpop.f32.mrb[0].mxu0
        %3500 = vmatprep.mubr.bf16.mxu0 0
        %3501 = vmatmul.mubr.bf16.gmra.mrb[0].mxu0 %v2538
        %v3502 = vpop.f32.mrb[0].mxu0
        %v3503 = vadd.f32 %v2946, %v3502
        %v3504 = vpop.f32.mrb[0].mxu0
        %v3505 = vpop.f32.mrb[0].mxu0
        %v3506 = vadd.f32 %v2949, %v3505
        %v3507 = vpop.f32.mrb[0].mxu0
        %3508 = vmatprep.mubr.bf16.mxu0 0
        %3509 = vmatmul.mubr.bf16.gmra.mrb[0].mxu0 %v2540
        %v3510 = vpop.f32.mrb[0].mxu0
        %v3511 = vadd.f32 %v2954, %v3510
        %v3512 = vpop.f32.mrb[0].mxu0
        %v3513 = vpop.f32.mrb[0].mxu0
        %v3514 = vadd.f32 %v2957, %v3513
        %v3515 = vpop.f32.mrb[0].mxu0
        %3516 = vmatprep.mubr.bf16.mxu0 0
        %3517 = vmatmul.mubr.bf16.gmra.mrb[0].mxu0 %v2542
        %v3518 = vpop.f32.mrb[0].mxu0
        %v3519 = vadd.f32 %v2962, %v3518
        %v3520 = vpop.f32.mrb[0].mxu0
        %v3521 = vpop.f32.mrb[0].mxu0
        %v3522 = vadd.f32 %v2965, %v3521
        %v3523 = vpop.f32.mrb[0].mxu0
        %3524 = vmatprep.mubr.bf16.mxu0 0
        %3525 = vmatmul.mubr.bf16.gmra.mrb[0].mxu0 %v2544
        %v3526 = vpop.f32.mrb[0].mxu0
        %v3527 = vadd.f32 %v2970, %v3526
        %v3528 = vpop.f32.mrb[0].mxu0
        %v3529 = vpop.f32.mrb[0].mxu0
        %v3530 = vadd.f32 %v2973, %v3529
        %v3531 = vpop.f32.mrb[0].mxu0
        %3532 = vmatprep.mubr.bf16.mxu0 0
        %3533 = vmatmul.mubr.bf16.gmra.mrb[0].mxu0 %v2546
        %v3534 = vpop.f32.mrb[0].mxu0
        %v3535 = vadd.f32 %v2978, %v3534
        %v3536 = vpop.f32.mrb[0].mxu0
        %v3537 = vpop.f32.mrb[0].mxu0
        %v3538 = vadd.f32 %v2981, %v3537
        %v3539 = vpop.f32.mrb[0].mxu0
        %3540 = vmatprep.mubr.bf16.mxu0 0
        %3541 = vmatmul.mubr.bf16.gmra.mrb[0].mxu0 %v2548
        %v3542 = vpop.f32.mrb[0].mxu0
        %v3543 = vadd.f32 %v2986, %v3542
        %v3544 = vpop.f32.mrb[0].mxu0
        %v3545 = vpop.f32.mrb[0].mxu0
        %v3546 = vadd.f32 %v2989, %v3545
        %v3547 = vpop.f32.mrb[0].mxu0
        %3548 = vmatprep.mubr.bf16.mxu0 0
        %3549 = vmatmul.mubr.bf16.gmra.mrb[0].mxu0 %v2550
        %v3550 = vpop.f32.mrb[0].mxu0
        %v3551 = vadd.f32 %v2994, %v3550
        %v3552 = vpop.f32.mrb[0].mxu0
        %v3553 = vpop.f32.mrb[0].mxu0
        %v3554 = vadd.f32 %v2997, %v3553
        %v3555 = vpop.f32.mrb[0].mxu0
        %3556 = vmatprep.mubr.bf16.mxu0 0
        %3557 = vmatmul.mubr.bf16.gmra.mrb[0].mxu0 %v2552
        %v3558 = vpop.f32.mrb[0].mxu0
        %v3559 = vadd.f32 %v3002, %v3558
        %v3560 = vpop.f32.mrb[0].mxu0
        %v3561 = vpop.f32.mrb[0].mxu0
        %v3562 = vadd.f32 %v3005, %v3561
        %v3563 = vpop.f32.mrb[0].mxu0
        %3564 = vmatprep.mubr.bf16.mxu0 0
        %3565 = vmatmul.mubr.bf16.gmra.mrb[0].mxu0 %v2554
        %v3566 = vpop.f32.mrb[0].mxu0
        %v3567 = vadd.f32 %v3010, %v3566
        %v3568 = vpop.f32.mrb[0].mxu0
        %v3569 = vpop.f32.mrb[0].mxu0
        %v3570 = vadd.f32 %v3013, %v3569
        %v3571 = vpop.f32.mrb[0].mxu0
        %3572 = vmatprep.mubr.bf16.mxu0 0
        %3573 = vmatmul.mubr.bf16.gmra.mrb[0].mxu0 %v2556
        %v3574 = vpop.f32.mrb[0].mxu0
        %v3575 = vadd.f32 %v3018, %v3574
        %v3576 = vpop.f32.mrb[0].mxu0
        %v3577 = vpop.f32.mrb[0].mxu0
        %v3578 = vadd.f32 %v3021, %v3577
        %v3579 = vpop.f32.mrb[0].mxu0
        %3580 = vmatprep.mubr.bf16.mxu0 0
        %3581 = vmatmul.mubr.bf16.gmra.mrb[0].mxu0 %v2558
        %v3582 = vpop.f32.mrb[0].mxu0
        %v3583 = vadd.f32 %v3026, %v3582
        %v3584 = vpop.f32.mrb[0].mxu0
        %v3585 = vpop.f32.mrb[0].mxu0
        %v3586 = vadd.f32 %v3029, %v3585
        %v3587 = vpop.f32.mrb[0].mxu0
        %3588 = vmatprep.mubr.bf16.mxu0 0
        %3589 = vmatmul.mubr.bf16.gmra.mrb[0].mxu0 %v2560
        %v3590 = vpop.f32.mrb[0].mxu0
        %v3591 = vadd.f32 %v3034, %v3590
        %v3592 = vpop.f32.mrb[0].mxu0
        %v3593 = vpop.f32.mrb[0].mxu0
        %v3594 = vadd.f32 %v3037, %v3593
        %v3595 = vpop.f32.mrb[0].mxu0
        %3596 = vmatprep.mubr.bf16.mxu0 0
        %3597 = vmatmul.mubr.bf16.gmra.mrb[0].mxu0 %v2562
        %v3598 = vpop.f32.mrb[0].mxu0
        %v3599 = vadd.f32 %v3042, %v3598
        %v3600 = vpop.f32.mrb[0].mxu0
        %v3601 = vpop.f32.mrb[0].mxu0
        %v3602 = vadd.f32 %v3045, %v3601
        %v3603 = vpop.f32.mrb[0].mxu0
        %3604 = vmatprep.mubr.bf16.mxu0 0
        %3605 = vmatmul.mubr.bf16.gmra.mrb[0].mxu0 %v2564
        %v3606 = vpop.f32.mrb[0].mxu0
        %v3607 = vadd.f32 %v3050, %v3606
        %v3608 = vpop.f32.mrb[0].mxu0
        %v3609 = vpop.f32.mrb[0].mxu0
        %v3610 = vadd.f32 %v3053, %v3609
        %v3611 = vpop.f32.mrb[0].mxu0
        %3612 = vmatprep.mubr.bf16.mxu0 0
        %3613 = vmatmul.mubr.bf16.gmra.mrb[0].mxu0 %v2566
        %v3614 = vpop.f32.mrb[0].mxu0
        %v3615 = vadd.f32 %v3058, %v3614
        %v3616 = vpop.f32.mrb[0].mxu0
        %v3617 = vpop.f32.mrb[0].mxu0
        %v3618 = vadd.f32 %v3061, %v3617
        %v3619 = vpop.f32.mrb[0].mxu0
        %3620 = vmatprep.mubr.bf16.mxu0 0
        %3621 = vmatmul.mubr.bf16.gmra.mrb[0].mxu0 %v2568
        %v3622 = vpop.f32.mrb[0].mxu0
        %v3623 = vadd.f32 %v3066, %v3622
        %v3624 = vpop.f32.mrb[0].mxu0
        %v3625 = vpop.f32.mrb[0].mxu0
        %v3626 = vadd.f32 %v3069, %v3625
        %v3627 = vpop.f32.mrb[0].mxu0
        %3628 = vmatprep.mubr.bf16.mxu0 0
        %3629 = vmatmul.mubr.bf16.gmra.mrb[0].mxu0 %v2570
        %v3630 = vpop.f32.mrb[0].mxu0
        %v3631 = vadd.f32 %v3074, %v3630
        %v3632 = vpop.f32.mrb[0].mxu0
        %v3633 = vpop.f32.mrb[0].mxu0
        %v3634 = vadd.f32 %v3077, %v3633
        %v3635 = vpop.f32.mrb[0].mxu0
        %3636 = vmatprep.mubr.bf16.mxu0 0
        %3637 = vmatmul.mubr.bf16.gmra.mrb[0].mxu0 %v2572
        %v3638 = vpop.f32.mrb[0].mxu0
        %v3639 = vadd.f32 %v3082, %v3638
        %v3640 = vpop.f32.mrb[0].mxu0
        %v3641 = vpop.f32.mrb[0].mxu0
        %v3642 = vadd.f32 %v3085, %v3641
        %v3643 = vpop.f32.mrb[0].mxu0
        %3644 = vmatprep.mubr.bf16.mxu0 0
        %3645 = vmatmul.mubr.bf16.gmra.mrb[0].mxu0 %v2574
        %v3646 = vpop.f32.mrb[0].mxu0
        %v3647 = vadd.f32 %v3090, %v3646
        %v3648 = vpop.f32.mrb[0].mxu0
        %v3649 = vpop.f32.mrb[0].mxu0
        %v3650 = vadd.f32 %v3093, %v3649
        %v3651 = vpop.f32.mrb[0].mxu0
        %3652 = vmatprep.mubr.bf16.mxu0 0
        %3653 = vmatmul.mubr.bf16.gmra.mrb[0].mxu0 %v2576
        %v3654 = vpop.f32.mrb[0].mxu0
        %v3655 = vadd.f32 %v3098, %v3654
        %v3656 = vpop.f32.mrb[0].mxu0
        %v3657 = vpop.f32.mrb[0].mxu0
        %v3658 = vadd.f32 %v3101, %v3657
        %v3659 = vpop.f32.mrb[0].mxu0
        %3660 = vmatprep.mubr.bf16.mxu0 0
        %3661 = vmatmul.mubr.bf16.gmra.mrb[0].mxu0 %v2578
        %v3662 = vpop.f32.mrb[0].mxu0
        %v3663 = vadd.f32 %v3106, %v3662
        %v3664 = vpop.f32.mrb[0].mxu0
        %v3665 = vpop.f32.mrb[0].mxu0
        %v3666 = vadd.f32 %v3109, %v3665
        %v3667 = vpop.f32.mrb[0].mxu0
        %3668 = vmatprep.mubr.bf16.mxu0 0
        %3669 = vmatmul.mubr.bf16.gmra.mrb[0].mxu0 %v2580
        %v3670 = vpop.f32.mrb[0].mxu0
        %v3671 = vadd.f32 %v3114, %v3670
        %v3672 = vpop.f32.mrb[0].mxu0
        %v3673 = vpop.f32.mrb[0].mxu0
        %v3674 = vadd.f32 %v3117, %v3673
        %v3675 = vpop.f32.mrb[0].mxu0
        %3676 = vmatprep.mubr.bf16.mxu0 0
        %3677 = vmatmul.mubr.bf16.gmra.mrb[0].mxu0 %v2582
        %v3678 = vpop.f32.mrb[0].mxu0
        %v3679 = vadd.f32 %v3122, %v3678
        %v3680 = vpop.f32.mrb[0].mxu0
        %v3681 = vpop.f32.mrb[0].mxu0
        %v3682 = vadd.f32 %v3125, %v3681
        %v3683 = vpop.f32.mrb[0].mxu0
        %3684 = vmatprep.mubr.bf16.mxu0 0
        %3685 = vmatmul.mubr.bf16.gmra.mrb[0].mxu0 %v2584
        %v3686 = vpop.f32.mrb[0].mxu0
        %v3687 = vadd.f32 %v3130, %v3686
        %v3688 = vpop.f32.mrb[0].mxu0
        %v3689 = vpop.f32.mrb[0].mxu0
        %v3690 = vadd.f32 %v3133, %v3689
        %v3691 = vpop.f32.mrb[0].mxu0
        %3692 = vmatprep.mubr.bf16.mxu0 0
        %3693 = vmatmul.mubr.bf16.gmra.mrb[0].mxu0 %v2586
        %v3694 = vpop.f32.mrb[0].mxu0
        %v3695 = vadd.f32 %v3138, %v3694
        %v3696 = vpop.f32.mrb[0].mxu0
        %v3697 = vpop.f32.mrb[0].mxu0
        %v3698 = vadd.f32 %v3141, %v3697
        %v3699 = vpop.f32.mrb[0].mxu0
        %3700 = vdwg.mxu0
        %s3701 = scalar_lea.vmem %s210, 16
        %v3702 = vld [vmem:[%s3701] sm:$0xf]
        %v3703 = vld [vmem:[%s3701 + $0x4] sm:$0x1]
        %v3706 = vunpack.c.l.b16 %v3702
        %v3707 = vunpack.c.l.b16 %v3703
        %v3708 = vpack.c.b16 %v3707, %v3706
        %v3710 = vand.u32 %v3708, %v2595
        %3712 = vmatprep.subr.bf16.mxu0 0
        %3713 = vmatpush1.bf16.msra.mxu0 %v3710
        %3714 = vmatprep.subr.bf16.mxu0 0
        %3715 = vmatpush1.bf16.msra.mxu0 0
        %3716 = vmatprep.subr.bf16.mxu0 0
        %3717 = vmatpush1.bf16.msra.mxu0 0
        %3718 = vmatprep.subr.bf16.mxu0 0
        %3719 = vmatpush1.bf16.msra.mxu0 0
        %3720 = vmatprep.subr.bf16.mxu0 0
        %3721 = vmatpush1.bf16.msra.mxu0 0
        %3722 = vmatprep.subr.bf16.mxu0 0
        %3723 = vmatpush1.bf16.msra.mxu0 0
        %3724 = vmatprep.subr.bf16.mxu0 0
        %3725 = vmatpush1.bf16.msra.mxu0 0
        %3726 = vmatprep.subr.bf16.mxu0 0
        %3727 = vmatpush1.bf16.msra.mxu0 0
        %3728 = vmatprep.subr.bf16.mxu0 0
        %3729 = vmatpush1.bf16.msra.mxu0 0
        %3730 = vmatprep.subr.bf16.mxu0 0
        %3731 = vmatpush1.bf16.msra.mxu0 0
        %3732 = vmatprep.subr.bf16.mxu0 0
        %3733 = vmatpush1.bf16.msra.mxu0 0
        %3734 = vmatprep.subr.bf16.mxu0 0
        %3735 = vmatpush1.bf16.msra.mxu0 0
        %3736 = vmatprep.subr.bf16.mxu0 0
        %3737 = vmatpush1.bf16.msra.mxu0 0
        %3738 = vmatprep.subr.bf16.mxu0 0
        %3739 = vmatpush1.bf16.msra.mxu0 0
        %3740 = vmatprep.subr.bf16.mxu0 0
        %3741 = vmatpush1.bf16.msra.mxu0 0
        %3742 = vmatprep.subr.bf16.mxu0 0
        %3743 = vmatpush1.bf16.msra.mxu0 0
        %3744 = vmatprep.mubr.bf16.mxu0 0
        %3745 = vmatmul.mubr.bf16.gmra.mrb[0].mxu0 %v2468
        %v3746 = vpop.f32.mrb[0].mxu0
        %v3747 = vadd.f32 0.0, %v3746
        %v3748 = vpop.f32.mrb[0].mxu0
        %v3749 = vpop.f32.mrb[0].mxu0
        %v3750 = vadd.f32 0.0, %v3749
        %v3751 = vpop.f32.mrb[0].mxu0
        %3752 = vmatprep.mubr.bf16.mxu0 0
        %3753 = vmatmul.mubr.bf16.gmra.mrb[0].mxu0 %v2470
        %v3754 = vpop.f32.mrb[0].mxu0
        %v3755 = vadd.f32 0.0, %v3754
        %v3756 = vpop.f32.mrb[0].mxu0
        %v3757 = vpop.f32.mrb[0].mxu0
        %v3758 = vadd.f32 0.0, %v3757
        %v3759 = vpop.f32.mrb[0].mxu0
        %3760 = vmatprep.mubr.bf16.mxu0 0
        %3761 = vmatmul.mubr.bf16.gmra.mrb[0].mxu0 %v2472
        %v3762 = vpop.f32.mrb[0].mxu0
        %v3763 = vadd.f32 0.0, %v3762
        %v3764 = vpop.f32.mrb[0].mxu0
        %v3765 = vpop.f32.mrb[0].mxu0
        %v3766 = vadd.f32 0.0, %v3765
        %v3767 = vpop.f32.mrb[0].mxu0
        %3768 = vmatprep.mubr.bf16.mxu0 0
        %3769 = vmatmul.mubr.bf16.gmra.mrb[0].mxu0 %v2474
        %v3770 = vpop.f32.mrb[0].mxu0
        %v3771 = vadd.f32 0.0, %v3770
        %v3772 = vpop.f32.mrb[0].mxu0
        %v3773 = vpop.f32.mrb[0].mxu0
        %v3774 = vadd.f32 0.0, %v3773
        %v3775 = vpop.f32.mrb[0].mxu0
        %3776 = vmatprep.mubr.bf16.mxu0 0
        %3777 = vmatmul.mubr.bf16.gmra.mrb[0].mxu0 %v2476
        %v3778 = vpop.f32.mrb[0].mxu0
        %v3779 = vadd.f32 0.0, %v3778
        %v3780 = vpop.f32.mrb[0].mxu0
        %v3781 = vpop.f32.mrb[0].mxu0
        %v3782 = vadd.f32 0.0, %v3781
        %v3783 = vpop.f32.mrb[0].mxu0
        %3784 = vmatprep.mubr.bf16.mxu0 0
        %3785 = vmatmul.mubr.bf16.gmra.mrb[0].mxu0 %v2478
        %v3786 = vpop.f32.mrb[0].mxu0
        %v3787 = vadd.f32 0.0, %v3786
        %v3788 = vpop.f32.mrb[0].mxu0
        %v3789 = vpop.f32.mrb[0].mxu0
        %v3790 = vadd.f32 0.0, %v3789
        %v3791 = vpop.f32.mrb[0].mxu0
        %3792 = vmatprep.mubr.bf16.mxu0 0
        %3793 = vmatmul.mubr.bf16.gmra.mrb[0].mxu0 %v2480
        %v3794 = vpop.f32.mrb[0].mxu0
        %v3795 = vadd.f32 0.0, %v3794
        %v3796 = vpop.f32.mrb[0].mxu0
        %v3797 = vpop.f32.mrb[0].mxu0
        %v3798 = vadd.f32 0.0, %v3797
        %v3799 = vpop.f32.mrb[0].mxu0
        %3800 = vmatprep.mubr.bf16.mxu0 0
        %3801 = vmatmul.mubr.bf16.gmra.mrb[0].mxu0 %v2482
        %v3802 = vpop.f32.mrb[0].mxu0
        %v3803 = vadd.f32 0.0, %v3802
        %v3804 = vpop.f32.mrb[0].mxu0
        %v3805 = vpop.f32.mrb[0].mxu0
        %v3806 = vadd.f32 0.0, %v3805
        %v3807 = vpop.f32.mrb[0].mxu0
        %3808 = vmatprep.mubr.bf16.mxu0 0
        %3809 = vmatmul.mubr.bf16.gmra.mrb[0].mxu0 %v2484
        %v3810 = vpop.f32.mrb[0].mxu0
        %v3811 = vadd.f32 0.0, %v3810
        %v3812 = vpop.f32.mrb[0].mxu0
        %v3813 = vpop.f32.mrb[0].mxu0
        %v3814 = vadd.f32 0.0, %v3813
        %v3815 = vpop.f32.mrb[0].mxu0
        %3816 = vmatprep.mubr.bf16.mxu0 0
        %3817 = vmatmul.mubr.bf16.gmra.mrb[0].mxu0 %v2486
        %v3818 = vpop.f32.mrb[0].mxu0
        %v3819 = vadd.f32 0.0, %v3818
        %v3820 = vpop.f32.mrb[0].mxu0
        %v3821 = vpop.f32.mrb[0].mxu0
        %v3822 = vadd.f32 0.0, %v3821
        %v3823 = vpop.f32.mrb[0].mxu0
        %3824 = vmatprep.mubr.bf16.mxu0 0
        %3825 = vmatmul.mubr.bf16.gmra.mrb[0].mxu0 %v2488
        %v3826 = vpop.f32.mrb[0].mxu0
        %v3827 = vadd.f32 0.0, %v3826
        %v3828 = vpop.f32.mrb[0].mxu0
        %v3829 = vpop.f32.mrb[0].mxu0
        %v3830 = vadd.f32 0.0, %v3829
        %v3831 = vpop.f32.mrb[0].mxu0
        %3832 = vmatprep.mubr.bf16.mxu0 0
        %3833 = vmatmul.mubr.bf16.gmra.mrb[0].mxu0 %v2490
        %v3834 = vpop.f32.mrb[0].mxu0
        %v3835 = vadd.f32 0.0, %v3834
        %v3836 = vpop.f32.mrb[0].mxu0
        %v3837 = vpop.f32.mrb[0].mxu0
        %v3838 = vadd.f32 0.0, %v3837
        %v3839 = vpop.f32.mrb[0].mxu0
        %3840 = vmatprep.mubr.bf16.mxu0 0
        %3841 = vmatmul.mubr.bf16.gmra.mrb[0].mxu0 %v2492
        %v3842 = vpop.f32.mrb[0].mxu0
        %v3843 = vadd.f32 0.0, %v3842
        %v3844 = vpop.f32.mrb[0].mxu0
        %v3845 = vpop.f32.mrb[0].mxu0
        %v3846 = vadd.f32 0.0, %v3845
        %v3847 = vpop.f32.mrb[0].mxu0
        %3848 = vmatprep.mubr.bf16.mxu0 0
        %3849 = vmatmul.mubr.bf16.gmra.mrb[0].mxu0 %v2494
        %v3850 = vpop.f32.mrb[0].mxu0
        %v3851 = vadd.f32 0.0, %v3850
        %v3852 = vpop.f32.mrb[0].mxu0
        %v3853 = vpop.f32.mrb[0].mxu0
        %v3854 = vadd.f32 0.0, %v3853
        %v3855 = vpop.f32.mrb[0].mxu0
        %3856 = vmatprep.mubr.bf16.mxu0 0
        %3857 = vmatmul.mubr.bf16.gmra.mrb[0].mxu0 %v2496
        %v3858 = vpop.f32.mrb[0].mxu0
        %v3859 = vadd.f32 0.0, %v3858
        %v3860 = vpop.f32.mrb[0].mxu0
        %v3861 = vpop.f32.mrb[0].mxu0
        %v3862 = vadd.f32 0.0, %v3861
        %v3863 = vpop.f32.mrb[0].mxu0
        %3864 = vmatprep.mubr.bf16.mxu0 0
        %3865 = vmatmul.mubr.bf16.gmra.mrb[0].mxu0 %v2498
        %v3866 = vpop.f32.mrb[0].mxu0
        %v3867 = vadd.f32 0.0, %v3866
        %v3868 = vpop.f32.mrb[0].mxu0
        %v3869 = vpop.f32.mrb[0].mxu0
        %v3870 = vadd.f32 0.0, %v3869
        %v3871 = vpop.f32.mrb[0].mxu0
        %3872 = vmatprep.mubr.bf16.mxu0 0
        %3873 = vmatmul.mubr.bf16.gmra.mrb[0].mxu0 %v2500
        %v3874 = vpop.f32.mrb[0].mxu0
        %v3875 = vadd.f32 0.0, %v3874
        %v3876 = vpop.f32.mrb[0].mxu0
        %v3877 = vpop.f32.mrb[0].mxu0
        %v3878 = vadd.f32 0.0, %v3877
        %v3879 = vpop.f32.mrb[0].mxu0
        %3880 = vmatprep.mubr.bf16.mxu0 0
        %3881 = vmatmul.mubr.bf16.gmra.mrb[0].mxu0 %v2502
        %v3882 = vpop.f32.mrb[0].mxu0
        %v3883 = vadd.f32 0.0, %v3882
        %v3884 = vpop.f32.mrb[0].mxu0
        %v3885 = vpop.f32.mrb[0].mxu0
        %v3886 = vadd.f32 0.0, %v3885
        %v3887 = vpop.f32.mrb[0].mxu0
        %3888 = vmatprep.mubr.bf16.mxu0 0
        %3889 = vmatmul.mubr.bf16.gmra.mrb[0].mxu0 %v2504
        %v3890 = vpop.f32.mrb[0].mxu0
        %v3891 = vadd.f32 0.0, %v3890
        %v3892 = vpop.f32.mrb[0].mxu0
        %v3893 = vpop.f32.mrb[0].mxu0
        %v3894 = vadd.f32 0.0, %v3893
        %v3895 = vpop.f32.mrb[0].mxu0
        %3896 = vmatprep.mubr.bf16.mxu0 0
        %3897 = vmatmul.mubr.bf16.gmra.mrb[0].mxu0 %v2506
        %v3898 = vpop.f32.mrb[0].mxu0
        %v3899 = vadd.f32 0.0, %v3898
        %v3900 = vpop.f32.mrb[0].mxu0
        %v3901 = vpop.f32.mrb[0].mxu0
        %v3902 = vadd.f32 0.0, %v3901
        %v3903 = vpop.f32.mrb[0].mxu0
        %3904 = vmatprep.mubr.bf16.mxu0 0
        %3905 = vmatmul.mubr.bf16.gmra.mrb[0].mxu0 %v2508
        %v3906 = vpop.f32.mrb[0].mxu0
        %v3907 = vadd.f32 0.0, %v3906
        %v3908 = vpop.f32.mrb[0].mxu0
        %v3909 = vpop.f32.mrb[0].mxu0
        %v3910 = vadd.f32 0.0, %v3909
        %v3911 = vpop.f32.mrb[0].mxu0
        %3912 = vmatprep.mubr.bf16.mxu0 0
        %3913 = vmatmul.mubr.bf16.gmra.mrb[0].mxu0 %v2510
        %v3914 = vpop.f32.mrb[0].mxu0
        %v3915 = vadd.f32 0.0, %v3914
        %v3916 = vpop.f32.mrb[0].mxu0
        %v3917 = vpop.f32.mrb[0].mxu0
        %v3918 = vadd.f32 0.0, %v3917
        %v3919 = vpop.f32.mrb[0].mxu0
        %3920 = vmatprep.mubr.bf16.mxu0 0
        %3921 = vmatmul.mubr.bf16.gmra.mrb[0].mxu0 %v2512
        %v3922 = vpop.f32.mrb[0].mxu0
        %v3923 = vadd.f32 0.0, %v3922
        %v3924 = vpop.f32.mrb[0].mxu0
        %v3925 = vpop.f32.mrb[0].mxu0
        %v3926 = vadd.f32 0.0, %v3925
        %v3927 = vpop.f32.mrb[0].mxu0
        %3928 = vmatprep.mubr.bf16.mxu0 0
        %3929 = vmatmul.mubr.bf16.gmra.mrb[0].mxu0 %v2514
        %v3930 = vpop.f32.mrb[0].mxu0
        %v3931 = vadd.f32 0.0, %v3930
        %v3932 = vpop.f32.mrb[0].mxu0
        %v3933 = vpop.f32.mrb[0].mxu0
        %v3934 = vadd.f32 0.0, %v3933
        %v3935 = vpop.f32.mrb[0].mxu0
        %3936 = vmatprep.mubr.bf16.mxu0 0
        %3937 = vmatmul.mubr.bf16.gmra.mrb[0].mxu0 %v2516
        %v3938 = vpop.f32.mrb[0].mxu0
        %v3939 = vadd.f32 0.0, %v3938
        %v3940 = vpop.f32.mrb[0].mxu0
        %v3941 = vpop.f32.mrb[0].mxu0
        %v3942 = vadd.f32 0.0, %v3941
        %v3943 = vpop.f32.mrb[0].mxu0
        %3944 = vmatprep.mubr.bf16.mxu0 0
        %3945 = vmatmul.mubr.bf16.gmra.mrb[0].mxu0 %v2518
        %v3946 = vpop.f32.mrb[0].mxu0
        %v3947 = vadd.f32 0.0, %v3946
        %v3948 = vpop.f32.mrb[0].mxu0
        %v3949 = vpop.f32.mrb[0].mxu0
        %v3950 = vadd.f32 0.0, %v3949
        %v3951 = vpop.f32.mrb[0].mxu0
        %3952 = vmatprep.mubr.bf16.mxu0 0
        %3953 = vmatmul.mubr.bf16.gmra.mrb[0].mxu0 %v2520
        %v3954 = vpop.f32.mrb[0].mxu0
        %v3955 = vadd.f32 0.0, %v3954
        %v3956 = vpop.f32.mrb[0].mxu0
        %v3957 = vpop.f32.mrb[0].mxu0
        %v3958 = vadd.f32 0.0, %v3957
        %v3959 = vpop.f32.mrb[0].mxu0
        %3960 = vmatprep.mubr.bf16.mxu0 0
        %3961 = vmatmul.mubr.bf16.gmra.mrb[0].mxu0 %v2522
        %v3962 = vpop.f32.mrb[0].mxu0
        %v3963 = vadd.f32 0.0, %v3962
        %v3964 = vpop.f32.mrb[0].mxu0
        %v3965 = vpop.f32.mrb[0].mxu0
        %v3966 = vadd.f32 0.0, %v3965
        %v3967 = vpop.f32.mrb[0].mxu0
        %3968 = vmatprep.mubr.bf16.mxu0 0
        %3969 = vmatmul.mubr.bf16.gmra.mrb[0].mxu0 %v2524
        %v3970 = vpop.f32.mrb[0].mxu0
        %v3971 = vadd.f32 0.0, %v3970
        %v3972 = vpop.f32.mrb[0].mxu0
        %v3973 = vpop.f32.mrb[0].mxu0
        %v3974 = vadd.f32 0.0, %v3973
        %v3975 = vpop.f32.mrb[0].mxu0
        %3976 = vmatprep.mubr.bf16.mxu0 0
        %3977 = vmatmul.mubr.bf16.gmra.mrb[0].mxu0 %v2526
        %v3978 = vpop.f32.mrb[0].mxu0
        %v3979 = vadd.f32 0.0, %v3978
        %v3980 = vpop.f32.mrb[0].mxu0
        %v3981 = vpop.f32.mrb[0].mxu0
        %v3982 = vadd.f32 0.0, %v3981
        %v3983 = vpop.f32.mrb[0].mxu0
        %3984 = vmatprep.mubr.bf16.mxu0 0
        %3985 = vmatmul.mubr.bf16.gmra.mrb[0].mxu0 %v2528
        %v3986 = vpop.f32.mrb[0].mxu0
        %v3987 = vadd.f32 0.0, %v3986
        %v3988 = vpop.f32.mrb[0].mxu0
        %v3989 = vpop.f32.mrb[0].mxu0
        %v3990 = vadd.f32 0.0, %v3989
        %v3991 = vpop.f32.mrb[0].mxu0
        %3992 = vmatprep.mubr.bf16.mxu0 0
        %3993 = vmatmul.mubr.bf16.gmra.mrb[0].mxu0 %v2530
        %v3994 = vpop.f32.mrb[0].mxu0
        %v3995 = vadd.f32 0.0, %v3994
        %v3996 = vpop.f32.mrb[0].mxu0
        %v3997 = vpop.f32.mrb[0].mxu0
        %v3998 = vadd.f32 0.0, %v3997
        %v3999 = vpop.f32.mrb[0].mxu0
        %4000 = vmatprep.mubr.bf16.mxu0 0
        %4001 = vmatmul.mubr.bf16.gmra.mrb[0].mxu0 %v2532
        %v4002 = vpop.f32.mrb[0].mxu0
        %v4003 = vadd.f32 0.0, %v4002
        %v4004 = vpop.f32.mrb[0].mxu0
        %v4005 = vpop.f32.mrb[0].mxu0
        %v4006 = vadd.f32 0.0, %v4005
        %v4007 = vpop.f32.mrb[0].mxu0
        %4008 = vmatprep.mubr.bf16.mxu0 0
        %4009 = vmatmul.mubr.bf16.gmra.mrb[0].mxu0 %v2534
        %v4010 = vpop.f32.mrb[0].mxu0
        %v4011 = vadd.f32 0.0, %v4010
        %v4012 = vpop.f32.mrb[0].mxu0
        %v4013 = vpop.f32.mrb[0].mxu0
        %v4014 = vadd.f32 0.0, %v4013
        %v4015 = vpop.f32.mrb[0].mxu0
        %4016 = vmatprep.mubr.bf16.mxu0 0
        %4017 = vmatmul.mubr.bf16.gmra.mrb[0].mxu0 %v2536
        %v4018 = vpop.f32.mrb[0].mxu0
        %v4019 = vadd.f32 0.0, %v4018
        %v4020 = vpop.f32.mrb[0].mxu0
        %v4021 = vpop.f32.mrb[0].mxu0
        %v4022 = vadd.f32 0.0, %v4021
        %v4023 = vpop.f32.mrb[0].mxu0
        %4024 = vmatprep.mubr.bf16.mxu0 0
        %4025 = vmatmul.mubr.bf16.gmra.mrb[0].mxu0 %v2538
        %v4026 = vpop.f32.mrb[0].mxu0
        %v4027 = vadd.f32 0.0, %v4026
        %v4028 = vpop.f32.mrb[0].mxu0
        %v4029 = vpop.f32.mrb[0].mxu0
        %v4030 = vadd.f32 0.0, %v4029
        %v4031 = vpop.f32.mrb[0].mxu0
        %4032 = vmatprep.mubr.bf16.mxu0 0
        %4033 = vmatmul.mubr.bf16.gmra.mrb[0].mxu0 %v2540
        %v4034 = vpop.f32.mrb[0].mxu0
        %v4035 = vadd.f32 0.0, %v4034
        %v4036 = vpop.f32.mrb[0].mxu0
        %v4037 = vpop.f32.mrb[0].mxu0
        %v4038 = vadd.f32 0.0, %v4037
        %v4039 = vpop.f32.mrb[0].mxu0
        %4040 = vmatprep.mubr.bf16.mxu0 0
        %4041 = vmatmul.mubr.bf16.gmra.mrb[0].mxu0 %v2542
        %v4042 = vpop.f32.mrb[0].mxu0
        %v4043 = vadd.f32 0.0, %v4042
        %v4044 = vpop.f32.mrb[0].mxu0
        %v4045 = vpop.f32.mrb[0].mxu0
        %v4046 = vadd.f32 0.0, %v4045
        %v4047 = vpop.f32.mrb[0].mxu0
        %4048 = vmatprep.mubr.bf16.mxu0 0
        %4049 = vmatmul.mubr.bf16.gmra.mrb[0].mxu0 %v2544
        %v4050 = vpop.f32.mrb[0].mxu0
        %v4051 = vadd.f32 0.0, %v4050
        %v4052 = vpop.f32.mrb[0].mxu0
        %v4053 = vpop.f32.mrb[0].mxu0
        %v4054 = vadd.f32 0.0, %v4053
        %v4055 = vpop.f32.mrb[0].mxu0
        %4056 = vmatprep.mubr.bf16.mxu0 0
        %4057 = vmatmul.mubr.bf16.gmra.mrb[0].mxu0 %v2546
        %v4058 = vpop.f32.mrb[0].mxu0
        %v4059 = vadd.f32 0.0, %v4058
        %v4060 = vpop.f32.mrb[0].mxu0
        %v4061 = vpop.f32.mrb[0].mxu0
        %v4062 = vadd.f32 0.0, %v4061
        %v4063 = vpop.f32.mrb[0].mxu0
        %4064 = vmatprep.mubr.bf16.mxu0 0
        %4065 = vmatmul.mubr.bf16.gmra.mrb[0].mxu0 %v2548
        %v4066 = vpop.f32.mrb[0].mxu0
        %v4067 = vadd.f32 0.0, %v4066
        %v4068 = vpop.f32.mrb[0].mxu0
        %v4069 = vpop.f32.mrb[0].mxu0
        %v4070 = vadd.f32 0.0, %v4069
        %v4071 = vpop.f32.mrb[0].mxu0
        %4072 = vmatprep.mubr.bf16.mxu0 0
        %4073 = vmatmul.mubr.bf16.gmra.mrb[0].mxu0 %v2550
        %v4074 = vpop.f32.mrb[0].mxu0
        %v4075 = vadd.f32 0.0, %v4074
        %v4076 = vpop.f32.mrb[0].mxu0
        %v4077 = vpop.f32.mrb[0].mxu0
        %v4078 = vadd.f32 0.0, %v4077
        %v4079 = vpop.f32.mrb[0].mxu0
        %4080 = vmatprep.mubr.bf16.mxu0 0
        %4081 = vmatmul.mubr.bf16.gmra.mrb[0].mxu0 %v2552
        %v4082 = vpop.f32.mrb[0].mxu0
        %v4083 = vadd.f32 0.0, %v4082
        %v4084 = vpop.f32.mrb[0].mxu0
        %v4085 = vpop.f32.mrb[0].mxu0
        %v4086 = vadd.f32 0.0, %v4085
        %v4087 = vpop.f32.mrb[0].mxu0
        %4088 = vmatprep.mubr.bf16.mxu0 0
        %4089 = vmatmul.mubr.bf16.gmra.mrb[0].mxu0 %v2554
        %v4090 = vpop.f32.mrb[0].mxu0
        %v4091 = vadd.f32 0.0, %v4090
        %v4092 = vpop.f32.mrb[0].mxu0
        %v4093 = vpop.f32.mrb[0].mxu0
        %v4094 = vadd.f32 0.0, %v4093
        %v4095 = vpop.f32.mrb[0].mxu0
        %4096 = vmatprep.mubr.bf16.mxu0 0
        %4097 = vmatmul.mubr.bf16.gmra.mrb[0].mxu0 %v2556
        %v4098 = vpop.f32.mrb[0].mxu0
        %v4099 = vadd.f32 0.0, %v4098
        %v4100 = vpop.f32.mrb[0].mxu0
        %v4101 = vpop.f32.mrb[0].mxu0
        %v4102 = vadd.f32 0.0, %v4101
        %v4103 = vpop.f32.mrb[0].mxu0
        %4104 = vmatprep.mubr.bf16.mxu0 0
        %4105 = vmatmul.mubr.bf16.gmra.mrb[0].mxu0 %v2558
        %v4106 = vpop.f32.mrb[0].mxu0
        %v4107 = vadd.f32 0.0, %v4106
        %v4108 = vpop.f32.mrb[0].mxu0
        %v4109 = vpop.f32.mrb[0].mxu0
        %v4110 = vadd.f32 0.0, %v4109
        %v4111 = vpop.f32.mrb[0].mxu0
        %4112 = vmatprep.mubr.bf16.mxu0 0
        %4113 = vmatmul.mubr.bf16.gmra.mrb[0].mxu0 %v2560
        %v4114 = vpop.f32.mrb[0].mxu0
        %v4115 = vadd.f32 0.0, %v4114
        %v4116 = vpop.f32.mrb[0].mxu0
        %v4117 = vpop.f32.mrb[0].mxu0
        %v4118 = vadd.f32 0.0, %v4117
        %v4119 = vpop.f32.mrb[0].mxu0
        %4120 = vmatprep.mubr.bf16.mxu0 0
        %4121 = vmatmul.mubr.bf16.gmra.mrb[0].mxu0 %v2562
        %v4122 = vpop.f32.mrb[0].mxu0
        %v4123 = vadd.f32 0.0, %v4122
        %v4124 = vpop.f32.mrb[0].mxu0
        %v4125 = vpop.f32.mrb[0].mxu0
        %v4126 = vadd.f32 0.0, %v4125
        %v4127 = vpop.f32.mrb[0].mxu0
        %4128 = vmatprep.mubr.bf16.mxu0 0
        %4129 = vmatmul.mubr.bf16.gmra.mrb[0].mxu0 %v2564
        %v4130 = vpop.f32.mrb[0].mxu0
        %v4131 = vadd.f32 0.0, %v4130
        %v4132 = vpop.f32.mrb[0].mxu0
        %v4133 = vpop.f32.mrb[0].mxu0
        %v4134 = vadd.f32 0.0, %v4133
        %v4135 = vpop.f32.mrb[0].mxu0
        %4136 = vmatprep.mubr.bf16.mxu0 0
        %4137 = vmatmul.mubr.bf16.gmra.mrb[0].mxu0 %v2566
        %v4138 = vpop.f32.mrb[0].mxu0
        %v4139 = vadd.f32 0.0, %v4138
        %v4140 = vpop.f32.mrb[0].mxu0
        %v4141 = vpop.f32.mrb[0].mxu0
        %v4142 = vadd.f32 0.0, %v4141
        %v4143 = vpop.f32.mrb[0].mxu0
        %4144 = vmatprep.mubr.bf16.mxu0 0
        %4145 = vmatmul.mubr.bf16.gmra.mrb[0].mxu0 %v2568
        %v4146 = vpop.f32.mrb[0].mxu0
        %v4147 = vadd.f32 0.0, %v4146
        %v4148 = vpop.f32.mrb[0].mxu0
        %v4149 = vpop.f32.mrb[0].mxu0
        %v4150 = vadd.f32 0.0, %v4149
        %v4151 = vpop.f32.mrb[0].mxu0
        %4152 = vmatprep.mubr.bf16.mxu0 0
        %4153 = vmatmul.mubr.bf16.gmra.mrb[0].mxu0 %v2570
        %v4154 = vpop.f32.mrb[0].mxu0
        %v4155 = vadd.f32 0.0, %v4154
        %v4156 = vpop.f32.mrb[0].mxu0
        %v4157 = vpop.f32.mrb[0].mxu0
        %v4158 = vadd.f32 0.0, %v4157
        %v4159 = vpop.f32.mrb[0].mxu0
        %4160 = vmatprep.mubr.bf16.mxu0 0
        %4161 = vmatmul.mubr.bf16.gmra.mrb[0].mxu0 %v2572
        %v4162 = vpop.f32.mrb[0].mxu0
        %v4163 = vadd.f32 0.0, %v4162
        %v4164 = vpop.f32.mrb[0].mxu0
        %v4165 = vpop.f32.mrb[0].mxu0
        %v4166 = vadd.f32 0.0, %v4165
        %v4167 = vpop.f32.mrb[0].mxu0
        %4168 = vmatprep.mubr.bf16.mxu0 0
        %4169 = vmatmul.mubr.bf16.gmra.mrb[0].mxu0 %v2574
        %v4170 = vpop.f32.mrb[0].mxu0
        %v4171 = vadd.f32 0.0, %v4170
        %v4172 = vpop.f32.mrb[0].mxu0
        %v4173 = vpop.f32.mrb[0].mxu0
        %v4174 = vadd.f32 0.0, %v4173
        %v4175 = vpop.f32.mrb[0].mxu0
        %4176 = vmatprep.mubr.bf16.mxu0 0
        %4177 = vmatmul.mubr.bf16.gmra.mrb[0].mxu0 %v2576
        %v4178 = vpop.f32.mrb[0].mxu0
        %v4179 = vadd.f32 0.0, %v4178
        %v4180 = vpop.f32.mrb[0].mxu0
        %v4181 = vpop.f32.mrb[0].mxu0
        %v4182 = vadd.f32 0.0, %v4181
        %v4183 = vpop.f32.mrb[0].mxu0
        %4184 = vmatprep.mubr.bf16.mxu0 0
        %4185 = vmatmul.mubr.bf16.gmra.mrb[0].mxu0 %v2578
        %v4186 = vpop.f32.mrb[0].mxu0
        %v4187 = vadd.f32 0.0, %v4186
        %v4188 = vpop.f32.mrb[0].mxu0
        %v4189 = vpop.f32.mrb[0].mxu0
        %v4190 = vadd.f32 0.0, %v4189
        %v4191 = vpop.f32.mrb[0].mxu0
        %4192 = vmatprep.mubr.bf16.mxu0 0
        %4193 = vmatmul.mubr.bf16.gmra.mrb[0].mxu0 %v2580
        %v4194 = vpop.f32.mrb[0].mxu0
        %v4195 = vadd.f32 0.0, %v4194
        %v4196 = vpop.f32.mrb[0].mxu0
        %v4197 = vpop.f32.mrb[0].mxu0
        %v4198 = vadd.f32 0.0, %v4197
        %v4199 = vpop.f32.mrb[0].mxu0
        %4200 = vmatprep.mubr.bf16.mxu0 0
        %4201 = vmatmul.mubr.bf16.gmra.mrb[0].mxu0 %v2582
        %v4202 = vpop.f32.mrb[0].mxu0
        %v4203 = vadd.f32 0.0, %v4202
        %v4204 = vpop.f32.mrb[0].mxu0
        %v4205 = vpop.f32.mrb[0].mxu0
        %v4206 = vadd.f32 0.0, %v4205
        %v4207 = vpop.f32.mrb[0].mxu0
        %4208 = vmatprep.mubr.bf16.mxu0 0
        %4209 = vmatmul.mubr.bf16.gmra.mrb[0].mxu0 %v2584
        %v4210 = vpop.f32.mrb[0].mxu0
        %v4211 = vadd.f32 0.0, %v4210
        %v4212 = vpop.f32.mrb[0].mxu0
        %v4213 = vpop.f32.mrb[0].mxu0
        %v4214 = vadd.f32 0.0, %v4213
        %v4215 = vpop.f32.mrb[0].mxu0
        %4216 = vmatprep.mubr.bf16.mxu0 0
        %4217 = vmatmul.mubr.bf16.gmra.mrb[0].mxu0 %v2586
        %v4218 = vpop.f32.mrb[0].mxu0
        %v4219 = vadd.f32 0.0, %v4218
        %v4220 = vpop.f32.mrb[0].mxu0
        %v4221 = vpop.f32.mrb[0].mxu0
        %v4222 = vadd.f32 0.0, %v4221
        %v4223 = vpop.f32.mrb[0].mxu0
        %4224 = vmatprep.mubr.bf16.mxu0 0
        %4225 = vmatmul.mubr.bf16.gmra.mrb[0].mxu0 %v2588
        %v4226 = vpop.f32.mrb[0].mxu0
        %v4227 = vadd.f32 0.0, %v4226
        %v4228 = vpop.f32.mrb[0].mxu0
        %v4229 = vpop.f32.mrb[0].mxu0
        %v4230 = vadd.f32 0.0, %v4229
        %v4231 = vpop.f32.mrb[0].mxu0
        %4232 = vmatprep.mubr.bf16.mxu0 0
        %4233 = vmatmul.mubr.bf16.gmra.mrb[0].mxu0 %v2590
        %v4234 = vpop.f32.mrb[0].mxu0
        %v4235 = vadd.f32 0.0, %v4234
        %v4236 = vpop.f32.mrb[0].mxu0
        %v4237 = vpop.f32.mrb[0].mxu0
        %v4238 = vadd.f32 0.0, %v4237
        %v4239 = vpop.f32.mrb[0].mxu0
        %4240 = vmatprep.mubr.bf16.mxu0 0
        %4241 = vmatmul.mubr.bf16.gmra.mrb[0].mxu0 %v3149
        %v4242 = vpop.f32.mrb[0].mxu0
        %v4243 = vadd.f32 0.0, %v4242
        %v4244 = vpop.f32.mrb[0].mxu0
        %v4245 = vpop.f32.mrb[0].mxu0
        %v4246 = vadd.f32 0.0, %v4245
        %v4247 = vpop.f32.mrb[0].mxu0
        %4248 = vmatprep.mubr.bf16.mxu0 0
        %4249 = vmatmul.mubr.bf16.gmra.mrb[0].mxu0 %v3151
        %v4250 = vpop.f32.mrb[0].mxu0
        %v4251 = vadd.f32 0.0, %v4250
        %v4252 = vpop.f32.mrb[0].mxu0
        %v4253 = vpop.f32.mrb[0].mxu0
        %v4254 = vadd.f32 0.0, %v4253
        %v4255 = vpop.f32.mrb[0].mxu0
        %4256 = vdwg.mxu0
        %v4257 = vadd.f32 %v3191, %v3747
        %v4258 = vadd.f32 %v3194, %v3750
        %v4259 = vadd.f32 %v3199, %v3755
        %v4260 = vadd.f32 %v3202, %v3758
        %v4261 = vadd.f32 %v3207, %v3763
        %v4262 = vadd.f32 %v3210, %v3766
        %v4263 = vadd.f32 %v3215, %v3771
        %v4264 = vadd.f32 %v3218, %v3774
        %v4265 = vadd.f32 %v3223, %v3779
        %v4266 = vadd.f32 %v3226, %v3782
        %v4267 = vadd.f32 %v3231, %v3787
        %v4268 = vadd.f32 %v3234, %v3790
        %v4269 = vadd.f32 %v3239, %v3795
        %v4270 = vadd.f32 %v3242, %v3798
        %v4271 = vadd.f32 %v3247, %v3803
        %v4272 = vadd.f32 %v3250, %v3806
        %v4273 = vadd.f32 %v3255, %v3811
        %v4274 = vadd.f32 %v3258, %v3814
        %v4275 = vadd.f32 %v3263, %v3819
        %v4276 = vadd.f32 %v3266, %v3822
        %v4277 = vadd.f32 %v3271, %v3827
        %v4278 = vadd.f32 %v3274, %v3830
        %v4279 = vadd.f32 %v3279, %v3835
        %v4280 = vadd.f32 %v3282, %v3838
        %v4281 = vadd.f32 %v3287, %v3843
        %v4282 = vadd.f32 %v3290, %v3846
        %v4283 = vadd.f32 %v3295, %v3851
        %v4284 = vadd.f32 %v3298, %v3854
        %v4285 = vadd.f32 %v3303, %v3859
        %v4286 = vadd.f32 %v3306, %v3862
        %v4287 = vadd.f32 %v3311, %v3867
        %v4288 = vadd.f32 %v3314, %v3870
        %v4289 = vadd.f32 %v3319, %v3875
        %v4290 = vadd.f32 %v3322, %v3878
        %v4291 = vadd.f32 %v3327, %v3883
        %v4292 = vadd.f32 %v3330, %v3886
        %v4293 = vadd.f32 %v3335, %v3891
        %v4294 = vadd.f32 %v3338, %v3894
        %v4295 = vadd.f32 %v3343, %v3899
        %v4296 = vadd.f32 %v3346, %v3902
        %v4297 = vadd.f32 %v3351, %v3907
        %v4298 = vadd.f32 %v3354, %v3910
        %v4299 = vadd.f32 %v3359, %v3915
        %v4300 = vadd.f32 %v3362, %v3918
        %v4301 = vadd.f32 %v3367, %v3923
        %v4302 = vadd.f32 %v3370, %v3926
        %v4303 = vadd.f32 %v3375, %v3931
        %v4304 = vadd.f32 %v3378, %v3934
        %v4305 = vadd.f32 %v3383, %v3939
        %v4306 = vadd.f32 %v3386, %v3942
        %v4307 = vadd.f32 %v3391, %v3947
        %v4308 = vadd.f32 %v3394, %v3950
        %v4309 = vadd.f32 %v3399, %v3955
        %v4310 = vadd.f32 %v3402, %v3958
        %v4311 = vadd.f32 %v3407, %v3963
        %v4312 = vadd.f32 %v3410, %v3966
        %v4313 = vadd.f32 %v3415, %v3971
        %v4314 = vadd.f32 %v3418, %v3974
        %v4315 = vadd.f32 %v3423, %v3979
        %v4316 = vadd.f32 %v3426, %v3982
        %v4317 = vadd.f32 %v3431, %v3987
        %v4318 = vadd.f32 %v3434, %v3990
        %v4319 = vadd.f32 %v3439, %v3995
        %v4320 = vadd.f32 %v3442, %v3998
        %v4321 = vadd.f32 %v3447, %v4003
        %v4322 = vadd.f32 %v3450, %v4006
        %v4323 = vadd.f32 %v3455, %v4011
        %v4324 = vadd.f32 %v3458, %v4014
        %v4325 = vadd.f32 %v3463, %v4019
        %v4326 = vadd.f32 %v3466, %v4022
        %v4327 = vadd.f32 %v3471, %v4027
        %v4328 = vadd.f32 %v3474, %v4030
        %v4329 = vadd.f32 %v3479, %v4035
        %v4330 = vadd.f32 %v3482, %v4038
        %v4331 = vadd.f32 %v3487, %v4043
        %v4332 = vadd.f32 %v3490, %v4046
        %v4333 = vadd.f32 %v3495, %v4051
        %v4334 = vadd.f32 %v3498, %v4054
        %v4335 = vadd.f32 %v3503, %v4059
        %v4336 = vadd.f32 %v3506, %v4062
        %v4337 = vadd.f32 %v3511, %v4067
        %v4338 = vadd.f32 %v3514, %v4070
        %v4339 = vadd.f32 %v3519, %v4075
        %v4340 = vadd.f32 %v3522, %v4078
        %v4341 = vadd.f32 %v3527, %v4083
        %v4342 = vadd.f32 %v3530, %v4086
        %v4343 = vadd.f32 %v3535, %v4091
        %v4344 = vadd.f32 %v3538, %v4094
        %v4345 = vadd.f32 %v3543, %v4099
        %v4346 = vadd.f32 %v3546, %v4102
        %v4347 = vadd.f32 %v3551, %v4107
        %v4348 = vadd.f32 %v3554, %v4110
        %v4349 = vadd.f32 %v3559, %v4115
        %v4350 = vadd.f32 %v3562, %v4118
        %v4351 = vadd.f32 %v3567, %v4123
        %v4352 = vadd.f32 %v3570, %v4126
        %v4353 = vadd.f32 %v3575, %v4131
        %v4354 = vadd.f32 %v3578, %v4134
        %v4355 = vadd.f32 %v3583, %v4139
        %v4356 = vadd.f32 %v3586, %v4142
        %v4357 = vadd.f32 %v3591, %v4147
        %v4358 = vadd.f32 %v3594, %v4150
        %v4359 = vadd.f32 %v3599, %v4155
        %v4360 = vadd.f32 %v3602, %v4158
        %v4361 = vadd.f32 %v3607, %v4163
        %v4362 = vadd.f32 %v3610, %v4166
        %v4363 = vadd.f32 %v3615, %v4171
        %v4364 = vadd.f32 %v3618, %v4174
        %v4365 = vadd.f32 %v3623, %v4179
        %v4366 = vadd.f32 %v3626, %v4182
        %v4367 = vadd.f32 %v3631, %v4187
        %v4368 = vadd.f32 %v3634, %v4190
        %v4369 = vadd.f32 %v3639, %v4195
        %v4370 = vadd.f32 %v3642, %v4198
        %v4371 = vadd.f32 %v3647, %v4203
        %v4372 = vadd.f32 %v3650, %v4206
        %v4373 = vadd.f32 %v3655, %v4211
        %v4374 = vadd.f32 %v3658, %v4214
        %v4375 = vadd.f32 %v3663, %v4219
        %v4376 = vadd.f32 %v3666, %v4222
        %v4377 = vadd.f32 %v3671, %v4227
        %v4378 = vadd.f32 %v3674, %v4230
        %v4379 = vadd.f32 %v3679, %v4235
        %v4380 = vadd.f32 %v3682, %v4238
        %v4381 = vadd.f32 %v3687, %v4243
        %v4382 = vadd.f32 %v3690, %v4246
        %v4383 = vadd.f32 %v3695, %v4251
        %v4384 = vadd.f32 %v3698, %v4254
        %v4385 = vld [vmem:[%s213] sm:$0x1]
        %v4387 = vlaneseq
        %v4388 = vshrl.u32 %v4387, 7
        %v4389 = vsub.s32 0, %v4388
        %v4390 = vrot.slane %v4385, %v4389
        %v4392 = vadd.f32 %v4257, %v4390
        %v4393 = vadd.f32 %v4258, %v4390
        %v4394 = vadd.f32 %v4259, %v4390
        %v4395 = vadd.f32 %v4260, %v4390
        %v4396 = vadd.f32 %v4261, %v4390
        %v4397 = vadd.f32 %v4262, %v4390
        %v4398 = vadd.f32 %v4263, %v4390
        %v4399 = vadd.f32 %v4264, %v4390
        %v4400 = vadd.f32 %v4265, %v4390
        %v4401 = vadd.f32 %v4266, %v4390
        %v4402 = vadd.f32 %v4267, %v4390
        %v4403 = vadd.f32 %v4268, %v4390
        %v4404 = vadd.f32 %v4269, %v4390
        %v4405 = vadd.f32 %v4270, %v4390
        %v4406 = vadd.f32 %v4271, %v4390
        %v4407 = vadd.f32 %v4272, %v4390
        %v4408 = vadd.f32 %v4273, %v4390
        %v4409 = vadd.f32 %v4274, %v4390
        %v4410 = vadd.f32 %v4275, %v4390
        %v4411 = vadd.f32 %v4276, %v4390
        %v4412 = vadd.f32 %v4277, %v4390
        %v4413 = vadd.f32 %v4278, %v4390
        %v4414 = vadd.f32 %v4279, %v4390
        %v4415 = vadd.f32 %v4280, %v4390
        %v4416 = vadd.f32 %v4281, %v4390
        %v4417 = vadd.f32 %v4282, %v4390
        %v4418 = vadd.f32 %v4283, %v4390
        %v4419 = vadd.f32 %v4284, %v4390
        %v4420 = vadd.f32 %v4285, %v4390
        %v4421 = vadd.f32 %v4286, %v4390
        %v4422 = vadd.f32 %v4287, %v4390
        %v4423 = vadd.f32 %v4288, %v4390
        %v4424 = vadd.f32 %v4289, %v4390
        %v4425 = vadd.f32 %v4290, %v4390
        %v4426 = vadd.f32 %v4291, %v4390
        %v4427 = vadd.f32 %v4292, %v4390
        %v4428 = vadd.f32 %v4293, %v4390
        %v4429 = vadd.f32 %v4294, %v4390
        %v4430 = vadd.f32 %v4295, %v4390
        %v4431 = vadd.f32 %v4296, %v4390
        %v4432 = vadd.f32 %v4297, %v4390
        %v4433 = vadd.f32 %v4298, %v4390
        %v4434 = vadd.f32 %v4299, %v4390
        %v4435 = vadd.f32 %v4300, %v4390
        %v4436 = vadd.f32 %v4301, %v4390
        %v4437 = vadd.f32 %v4302, %v4390
        %v4438 = vadd.f32 %v4303, %v4390
        %v4439 = vadd.f32 %v4304, %v4390
        %v4440 = vadd.f32 %v4305, %v4390
        %v4441 = vadd.f32 %v4306, %v4390
        %v4442 = vadd.f32 %v4307, %v4390
        %v4443 = vadd.f32 %v4308, %v4390
        %v4444 = vadd.f32 %v4309, %v4390
        %v4445 = vadd.f32 %v4310, %v4390
        %v4446 = vadd.f32 %v4311, %v4390
        %v4447 = vadd.f32 %v4312, %v4390
        %v4448 = vadd.f32 %v4313, %v4390
        %v4449 = vadd.f32 %v4314, %v4390
        %v4450 = vadd.f32 %v4315, %v4390
        %v4451 = vadd.f32 %v4316, %v4390
        %v4452 = vadd.f32 %v4317, %v4390
        %v4453 = vadd.f32 %v4318, %v4390
        %v4454 = vadd.f32 %v4319, %v4390
        %v4455 = vadd.f32 %v4320, %v4390
        %v4456 = vadd.f32 %v4321, %v4390
        %v4457 = vadd.f32 %v4322, %v4390
        %v4458 = vadd.f32 %v4323, %v4390
        %v4459 = vadd.f32 %v4324, %v4390
        %v4460 = vadd.f32 %v4325, %v4390
        %v4461 = vadd.f32 %v4326, %v4390
        %v4462 = vadd.f32 %v4327, %v4390
        %v4463 = vadd.f32 %v4328, %v4390
        %v4464 = vadd.f32 %v4329, %v4390
        %v4465 = vadd.f32 %v4330, %v4390
        %v4466 = vadd.f32 %v4331, %v4390
        %v4467 = vadd.f32 %v4332, %v4390
        %v4468 = vadd.f32 %v4333, %v4390
        %v4469 = vadd.f32 %v4334, %v4390
        %v4470 = vadd.f32 %v4335, %v4390
        %v4471 = vadd.f32 %v4336, %v4390
        %v4472 = vadd.f32 %v4337, %v4390
        %v4473 = vadd.f32 %v4338, %v4390
        %v4474 = vadd.f32 %v4339, %v4390
        %v4475 = vadd.f32 %v4340, %v4390
        %v4476 = vadd.f32 %v4341, %v4390
        %v4477 = vadd.f32 %v4342, %v4390
        %v4478 = vadd.f32 %v4343, %v4390
        %v4479 = vadd.f32 %v4344, %v4390
        %v4480 = vadd.f32 %v4345, %v4390
        %v4481 = vadd.f32 %v4346, %v4390
        %v4482 = vadd.f32 %v4347, %v4390
        %v4483 = vadd.f32 %v4348, %v4390
        %v4484 = vadd.f32 %v4349, %v4390
        %v4485 = vadd.f32 %v4350, %v4390
        %v4486 = vadd.f32 %v4351, %v4390
        %v4487 = vadd.f32 %v4352, %v4390
        %v4488 = vadd.f32 %v4353, %v4390
        %v4489 = vadd.f32 %v4354, %v4390
        %v4490 = vadd.f32 %v4355, %v4390
        %v4491 = vadd.f32 %v4356, %v4390
        %v4492 = vadd.f32 %v4357, %v4390
        %v4493 = vadd.f32 %v4358, %v4390
        %v4494 = vadd.f32 %v4359, %v4390
        %v4495 = vadd.f32 %v4360, %v4390
        %v4496 = vadd.f32 %v4361, %v4390
        %v4497 = vadd.f32 %v4362, %v4390
        %v4498 = vadd.f32 %v4363, %v4390
        %v4499 = vadd.f32 %v4364, %v4390
        %v4500 = vadd.f32 %v4365, %v4390
        %v4501 = vadd.f32 %v4366, %v4390
        %v4502 = vadd.f32 %v4367, %v4390
        %v4503 = vadd.f32 %v4368, %v4390
        %v4504 = vadd.f32 %v4369, %v4390
        %v4505 = vadd.f32 %v4370, %v4390
        %v4506 = vadd.f32 %v4371, %v4390
        %v4507 = vadd.f32 %v4372, %v4390
        %v4508 = vadd.f32 %v4373, %v4390
        %v4509 = vadd.f32 %v4374, %v4390
        %v4510 = vadd.f32 %v4375, %v4390
        %v4511 = vadd.f32 %v4376, %v4390
        %v4512 = vadd.f32 %v4377, %v4390
        %v4513 = vadd.f32 %v4378, %v4390
        %v4514 = vadd.f32 %v4379, %v4390
        %v4515 = vadd.f32 %v4380, %v4390
        %v4516 = vadd.f32 %v4381, %v4390
        %v4517 = vadd.f32 %v4382, %v4390
        %v4518 = vadd.f32 %v4383, %v4390
        %v4519 = vadd.f32 %v4384, %v4390
        %v4520 = vmax.f32 %v4392, 0.0
        %v4521 = vmax.f32 %v4393, 0.0
        %v4522 = vmax.f32 %v4394, 0.0
        %v4523 = vmax.f32 %v4395, 0.0
        %v4524 = vmax.f32 %v4396, 0.0
        %v4525 = vmax.f32 %v4397, 0.0
        %v4526 = vmax.f32 %v4398, 0.0
        %v4527 = vmax.f32 %v4399, 0.0
        %v4528 = vmax.f32 %v4400, 0.0
        %v4529 = vmax.f32 %v4401, 0.0
        %v4530 = vmax.f32 %v4402, 0.0
        %v4531 = vmax.f32 %v4403, 0.0
        %v4532 = vmax.f32 %v4404, 0.0
        %v4533 = vmax.f32 %v4405, 0.0
        %v4534 = vmax.f32 %v4406, 0.0
        %v4535 = vmax.f32 %v4407, 0.0
        %v4536 = vmax.f32 %v4408, 0.0
        %v4537 = vmax.f32 %v4409, 0.0
        %v4538 = vmax.f32 %v4410, 0.0
        %v4539 = vmax.f32 %v4411, 0.0
        %v4540 = vmax.f32 %v4412, 0.0
        %v4541 = vmax.f32 %v4413, 0.0
        %v4542 = vmax.f32 %v4414, 0.0
        %v4543 = vmax.f32 %v4415, 0.0
        %v4544 = vmax.f32 %v4416, 0.0
        %v4545 = vmax.f32 %v4417, 0.0
        %v4546 = vmax.f32 %v4418, 0.0
        %v4547 = vmax.f32 %v4419, 0.0
        %v4548 = vmax.f32 %v4420, 0.0
        %v4549 = vmax.f32 %v4421, 0.0
        %v4550 = vmax.f32 %v4422, 0.0
        %v4551 = vmax.f32 %v4423, 0.0
        %v4552 = vmax.f32 %v4424, 0.0
        %v4553 = vmax.f32 %v4425, 0.0
        %v4554 = vmax.f32 %v4426, 0.0
        %v4555 = vmax.f32 %v4427, 0.0
        %v4556 = vmax.f32 %v4428, 0.0
        %v4557 = vmax.f32 %v4429, 0.0
        %v4558 = vmax.f32 %v4430, 0.0
        %v4559 = vmax.f32 %v4431, 0.0
        %v4560 = vmax.f32 %v4432, 0.0
        %v4561 = vmax.f32 %v4433, 0.0
        %v4562 = vmax.f32 %v4434, 0.0
        %v4563 = vmax.f32 %v4435, 0.0
        %v4564 = vmax.f32 %v4436, 0.0
        %v4565 = vmax.f32 %v4437, 0.0
        %v4566 = vmax.f32 %v4438, 0.0
        %v4567 = vmax.f32 %v4439, 0.0
        %v4568 = vmax.f32 %v4440, 0.0
        %v4569 = vmax.f32 %v4441, 0.0
        %v4570 = vmax.f32 %v4442, 0.0
        %v4571 = vmax.f32 %v4443, 0.0
        %v4572 = vmax.f32 %v4444, 0.0
        %v4573 = vmax.f32 %v4445, 0.0
        %v4574 = vmax.f32 %v4446, 0.0
        %v4575 = vmax.f32 %v4447, 0.0
        %v4576 = vmax.f32 %v4448, 0.0
        %v4577 = vmax.f32 %v4449, 0.0
        %v4578 = vmax.f32 %v4450, 0.0
        %v4579 = vmax.f32 %v4451, 0.0
        %v4580 = vmax.f32 %v4452, 0.0
        %v4581 = vmax.f32 %v4453, 0.0
        %v4582 = vmax.f32 %v4454, 0.0
        %v4583 = vmax.f32 %v4455, 0.0
        %v4584 = vmax.f32 %v4456, 0.0
        %v4585 = vmax.f32 %v4457, 0.0
        %v4586 = vmax.f32 %v4458, 0.0
        %v4587 = vmax.f32 %v4459, 0.0
        %v4588 = vmax.f32 %v4460, 0.0
        %v4589 = vmax.f32 %v4461, 0.0
        %v4590 = vmax.f32 %v4462, 0.0
        %v4591 = vmax.f32 %v4463, 0.0
        %v4592 = vmax.f32 %v4464, 0.0
        %v4593 = vmax.f32 %v4465, 0.0
        %v4594 = vmax.f32 %v4466, 0.0
        %v4595 = vmax.f32 %v4467, 0.0
        %v4596 = vmax.f32 %v4468, 0.0
        %v4597 = vmax.f32 %v4469, 0.0
        %v4598 = vmax.f32 %v4470, 0.0
        %v4599 = vmax.f32 %v4471, 0.0
        %v4600 = vmax.f32 %v4472, 0.0
        %v4601 = vmax.f32 %v4473, 0.0
        %v4602 = vmax.f32 %v4474, 0.0
        %v4603 = vmax.f32 %v4475, 0.0
        %v4604 = vmax.f32 %v4476, 0.0
        %v4605 = vmax.f32 %v4477, 0.0
        %v4606 = vmax.f32 %v4478, 0.0
        %v4607 = vmax.f32 %v4479, 0.0
        %v4608 = vmax.f32 %v4480, 0.0
        %v4609 = vmax.f32 %v4481, 0.0
        %v4610 = vmax.f32 %v4482, 0.0
        %v4611 = vmax.f32 %v4483, 0.0
        %v4612 = vmax.f32 %v4484, 0.0
        %v4613 = vmax.f32 %v4485, 0.0
        %v4614 = vmax.f32 %v4486, 0.0
        %v4615 = vmax.f32 %v4487, 0.0
        %v4616 = vmax.f32 %v4488, 0.0
        %v4617 = vmax.f32 %v4489, 0.0
        %v4618 = vmax.f32 %v4490, 0.0
        %v4619 = vmax.f32 %v4491, 0.0
        %v4620 = vmax.f32 %v4492, 0.0
        %v4621 = vmax.f32 %v4493, 0.0
        %v4622 = vmax.f32 %v4494, 0.0
        %v4623 = vmax.f32 %v4495, 0.0
        %v4624 = vmax.f32 %v4496, 0.0
        %v4625 = vmax.f32 %v4497, 0.0
        %v4626 = vmax.f32 %v4498, 0.0
        %v4627 = vmax.f32 %v4499, 0.0
        %v4628 = vmax.f32 %v4500, 0.0
        %v4629 = vmax.f32 %v4501, 0.0
        %v4630 = vmax.f32 %v4502, 0.0
        %v4631 = vmax.f32 %v4503, 0.0
        %v4632 = vmax.f32 %v4504, 0.0
        %v4633 = vmax.f32 %v4505, 0.0
        %v4634 = vmax.f32 %v4506, 0.0
        %v4635 = vmax.f32 %v4507, 0.0
        %v4636 = vmax.f32 %v4508, 0.0
        %v4637 = vmax.f32 %v4509, 0.0
        %v4638 = vmax.f32 %v4510, 0.0
        %v4639 = vmax.f32 %v4511, 0.0
        %v4640 = vmax.f32 %v4512, 0.0
        %v4641 = vmax.f32 %v4513, 0.0
        %v4642 = vmax.f32 %v4514, 0.0
        %v4643 = vmax.f32 %v4515, 0.0
        %v4644 = vmax.f32 %v4516, 0.0
        %v4645 = vmax.f32 %v4517, 0.0
        %v4646 = vmax.f32 %v4518, 0.0
        %v4647 = vmax.f32 %v4519, 0.0
        %vm4648 = vcmask 523264
        %4649 = vst.msk [vmem:[%s201] sm:$0xff] %vm4648, %v4520
        %4650 = vst.msk [vmem:[%s201 + $0x8] sm:$0xff] %vm4648, %v4521
        %4651 = vst.msk [vmem:[%s201 + $0x10] sm:$0xff] %vm4648, %v4522
        %4652 = vst.msk [vmem:[%s201 + $0x18] sm:$0xff] %vm4648, %v4523
        %4653 = vst.msk [vmem:[%s201 + $0x20] sm:$0xff] %vm4648, %v4524
        %4654 = vst.msk [vmem:[%s201 + $0x28] sm:$0xff] %vm4648, %v4525
        %4655 = vst.msk [vmem:[%s201 + $0x30] sm:$0xff] %vm4648, %v4526
        %4656 = vst.msk [vmem:[%s201 + $0x38] sm:$0xff] %vm4648, %v4527
        %4657 = vst.msk [vmem:[%s201 + $0x40] sm:$0xff] %vm4648, %v4528
        %4658 = vst.msk [vmem:[%s201 + $0x48] sm:$0xff] %vm4648, %v4529
        %4659 = vst.msk [vmem:[%s201 + $0x50] sm:$0xff] %vm4648, %v4530
        %4660 = vst.msk [vmem:[%s201 + $0x58] sm:$0xff] %vm4648, %v4531
        %4661 = vst.msk [vmem:[%s201 + $0x60] sm:$0xff] %vm4648, %v4532
        %4662 = vst.msk [vmem:[%s201 + $0x68] sm:$0xff] %vm4648, %v4533
        %4663 = vst.msk [vmem:[%s201 + $0x70] sm:$0xff] %vm4648, %v4534
        %4664 = vst.msk [vmem:[%s201 + $0x78] sm:$0xff] %vm4648, %v4535
        %4665 = vst.msk [vmem:[%s201 + $0x80] sm:$0xff] %vm4648, %v4536
        %4666 = vst.msk [vmem:[%s201 + $0x88] sm:$0xff] %vm4648, %v4537
        %4667 = vst.msk [vmem:[%s201 + $0x90] sm:$0xff] %vm4648, %v4538
        %4668 = vst.msk [vmem:[%s201 + $0x98] sm:$0xff] %vm4648, %v4539
        %4669 = vst.msk [vmem:[%s201 + $0xa0] sm:$0xff] %vm4648, %v4540
        %4670 = vst.msk [vmem:[%s201 + $0xa8] sm:$0xff] %vm4648, %v4541
        %4671 = vst.msk [vmem:[%s201 + $0xb0] sm:$0xff] %vm4648, %v4542
        %4672 = vst.msk [vmem:[%s201 + $0xb8] sm:$0xff] %vm4648, %v4543
        %4673 = vst.msk [vmem:[%s201 + $0xc0] sm:$0xff] %vm4648, %v4544
        %4674 = vst.msk [vmem:[%s201 + $0xc8] sm:$0xff] %vm4648, %v4545
        %4675 = vst.msk [vmem:[%s201 + $0xd0] sm:$0xff] %vm4648, %v4546
        %4676 = vst.msk [vmem:[%s201 + $0xd8] sm:$0xff] %vm4648, %v4547
        %4677 = vst.msk [vmem:[%s201 + $0xe0] sm:$0xff] %vm4648, %v4548
        %4678 = vst.msk [vmem:[%s201 + $0xe8] sm:$0xff] %vm4648, %v4549
        %4679 = vst.msk [vmem:[%s201 + $0xf0] sm:$0xff] %vm4648, %v4550
        %4680 = vst.msk [vmem:[%s201 + $0xf8] sm:$0xff] %vm4648, %v4551
        %4681 = vst.msk [vmem:[%s201 + $0x100] sm:$0xff] %vm4648, %v4552
        %4682 = vst.msk [vmem:[%s201 + $0x108] sm:$0xff] %vm4648, %v4553
        %4683 = vst.msk [vmem:[%s201 + $0x110] sm:$0xff] %vm4648, %v4554
        %4684 = vst.msk [vmem:[%s201 + $0x118] sm:$0xff] %vm4648, %v4555
        %4685 = vst.msk [vmem:[%s201 + $0x120] sm:$0xff] %vm4648, %v4556
        %4686 = vst.msk [vmem:[%s201 + $0x128] sm:$0xff] %vm4648, %v4557
        %4687 = vst.msk [vmem:[%s201 + $0x130] sm:$0xff] %vm4648, %v4558
        %4688 = vst.msk [vmem:[%s201 + $0x138] sm:$0xff] %vm4648, %v4559
        %4689 = vst.msk [vmem:[%s201 + $0x140] sm:$0xff] %vm4648, %v4560
        %4690 = vst.msk [vmem:[%s201 + $0x148] sm:$0xff] %vm4648, %v4561
        %4691 = vst.msk [vmem:[%s201 + $0x150] sm:$0xff] %vm4648, %v4562
        %4692 = vst.msk [vmem:[%s201 + $0x158] sm:$0xff] %vm4648, %v4563
        %4693 = vst.msk [vmem:[%s201 + $0x160] sm:$0xff] %vm4648, %v4564
        %4694 = vst.msk [vmem:[%s201 + $0x168] sm:$0xff] %vm4648, %v4565
        %4695 = vst.msk [vmem:[%s201 + $0x170] sm:$0xff] %vm4648, %v4566
        %4696 = vst.msk [vmem:[%s201 + $0x178] sm:$0xff] %vm4648, %v4567
        %4697 = vst.msk [vmem:[%s201 + $0x180] sm:$0xff] %vm4648, %v4568
        %4698 = vst.msk [vmem:[%s201 + $0x188] sm:$0xff] %vm4648, %v4569
        %4699 = vst.msk [vmem:[%s201 + $0x190] sm:$0xff] %vm4648, %v4570
        %4700 = vst.msk [vmem:[%s201 + $0x198] sm:$0xff] %vm4648, %v4571
        %4701 = vst.msk [vmem:[%s201 + $0x1a0] sm:$0xff] %vm4648, %v4572
        %4702 = vst.msk [vmem:[%s201 + $0x1a8] sm:$0xff] %vm4648, %v4573
        %4703 = vst.msk [vmem:[%s201 + $0x1b0] sm:$0xff] %vm4648, %v4574
        %4704 = vst.msk [vmem:[%s201 + $0x1b8] sm:$0xff] %vm4648, %v4575
        %4705 = vst.msk [vmem:[%s201 + $0x1c0] sm:$0xff] %vm4648, %v4576
        %4706 = vst.msk [vmem:[%s201 + $0x1c8] sm:$0xff] %vm4648, %v4577
        %4707 = vst.msk [vmem:[%s201 + $0x1d0] sm:$0xff] %vm4648, %v4578
        %4708 = vst.msk [vmem:[%s201 + $0x1d8] sm:$0xff] %vm4648, %v4579
        %4709 = vst.msk [vmem:[%s201 + $0x1e0] sm:$0xff] %vm4648, %v4580
        %4710 = vst.msk [vmem:[%s201 + $0x1e8] sm:$0xff] %vm4648, %v4581
        %4711 = vst.msk [vmem:[%s201 + $0x1f0] sm:$0xff] %vm4648, %v4582
        %4712 = vst.msk [vmem:[%s201 + $0x1f8] sm:$0xff] %vm4648, %v4583
        %4713 = vst.msk [vmem:[%s201 + $0x200] sm:$0xff] %vm4648, %v4584
        %4714 = vst.msk [vmem:[%s201 + $0x208] sm:$0xff] %vm4648, %v4585
        %4715 = vst.msk [vmem:[%s201 + $0x210] sm:$0xff] %vm4648, %v4586
        %4716 = vst.msk [vmem:[%s201 + $0x218] sm:$0xff] %vm4648, %v4587
        %4717 = vst.msk [vmem:[%s201 + $0x220] sm:$0xff] %vm4648, %v4588
        %4718 = vst.msk [vmem:[%s201 + $0x228] sm:$0xff] %vm4648, %v4589
        %4719 = vst.msk [vmem:[%s201 + $0x230] sm:$0xff] %vm4648, %v4590
        %4720 = vst.msk [vmem:[%s201 + $0x238] sm:$0xff] %vm4648, %v4591
        %4721 = vst.msk [vmem:[%s201 + $0x240] sm:$0xff] %vm4648, %v4592
        %4722 = vst.msk [vmem:[%s201 + $0x248] sm:$0xff] %vm4648, %v4593
        %4723 = vst.msk [vmem:[%s201 + $0x250] sm:$0xff] %vm4648, %v4594
        %4724 = vst.msk [vmem:[%s201 + $0x258] sm:$0xff] %vm4648, %v4595
        %4725 = vst.msk [vmem:[%s201 + $0x260] sm:$0xff] %vm4648, %v4596
        %4726 = vst.msk [vmem:[%s201 + $0x268] sm:$0xff] %vm4648, %v4597
        %4727 = vst.msk [vmem:[%s201 + $0x270] sm:$0xff] %vm4648, %v4598
        %4728 = vst.msk [vmem:[%s201 + $0x278] sm:$0xff] %vm4648, %v4599
        %4729 = vst.msk [vmem:[%s201 + $0x280] sm:$0xff] %vm4648, %v4600
        %4730 = vst.msk [vmem:[%s201 + $0x288] sm:$0xff] %vm4648, %v4601
        %4731 = vst.msk [vmem:[%s201 + $0x290] sm:$0xff] %vm4648, %v4602
        %4732 = vst.msk [vmem:[%s201 + $0x298] sm:$0xff] %vm4648, %v4603
        %4733 = vst.msk [vmem:[%s201 + $0x2a0] sm:$0xff] %vm4648, %v4604
        %4734 = vst.msk [vmem:[%s201 + $0x2a8] sm:$0xff] %vm4648, %v4605
        %4735 = vst.msk [vmem:[%s201 + $0x2b0] sm:$0xff] %vm4648, %v4606
        %4736 = vst.msk [vmem:[%s201 + $0x2b8] sm:$0xff] %vm4648, %v4607
        %4737 = vst.msk [vmem:[%s201 + $0x2c0] sm:$0xff] %vm4648, %v4608
        %4738 = vst.msk [vmem:[%s201 + $0x2c8] sm:$0xff] %vm4648, %v4609
        %4739 = vst.msk [vmem:[%s201 + $0x2d0] sm:$0xff] %vm4648, %v4610
        %4740 = vst.msk [vmem:[%s201 + $0x2d8] sm:$0xff] %vm4648, %v4611
        %4741 = vst.msk [vmem:[%s201 + $0x2e0] sm:$0xff] %vm4648, %v4612
        %4742 = vst.msk [vmem:[%s201 + $0x2e8] sm:$0xff] %vm4648, %v4613
        %4743 = vst.msk [vmem:[%s201 + $0x2f0] sm:$0xff] %vm4648, %v4614
        %4744 = vst.msk [vmem:[%s201 + $0x2f8] sm:$0xff] %vm4648, %v4615
        %4745 = vst.msk [vmem:[%s201 + $0x300] sm:$0xff] %vm4648, %v4616
        %4746 = vst.msk [vmem:[%s201 + $0x308] sm:$0xff] %vm4648, %v4617
        %4747 = vst.msk [vmem:[%s201 + $0x310] sm:$0xff] %vm4648, %v4618
        %4748 = vst.msk [vmem:[%s201 + $0x318] sm:$0xff] %vm4648, %v4619
        %4749 = vst.msk [vmem:[%s201 + $0x320] sm:$0xff] %vm4648, %v4620
        %4750 = vst.msk [vmem:[%s201 + $0x328] sm:$0xff] %vm4648, %v4621
        %4751 = vst.msk [vmem:[%s201 + $0x330] sm:$0xff] %vm4648, %v4622
        %4752 = vst.msk [vmem:[%s201 + $0x338] sm:$0xff] %vm4648, %v4623
        %4753 = vst.msk [vmem:[%s201 + $0x340] sm:$0xff] %vm4648, %v4624
        %4754 = vst.msk [vmem:[%s201 + $0x348] sm:$0xff] %vm4648, %v4625
        %4755 = vst.msk [vmem:[%s201 + $0x350] sm:$0xff] %vm4648, %v4626
        %4756 = vst.msk [vmem:[%s201 + $0x358] sm:$0xff] %vm4648, %v4627
        %4757 = vst.msk [vmem:[%s201 + $0x360] sm:$0xff] %vm4648, %v4628
        %4758 = vst.msk [vmem:[%s201 + $0x368] sm:$0xff] %vm4648, %v4629
        %4759 = vst.msk [vmem:[%s201 + $0x370] sm:$0xff] %vm4648, %v4630
        %4760 = vst.msk [vmem:[%s201 + $0x378] sm:$0xff] %vm4648, %v4631
        %4761 = vst.msk [vmem:[%s201 + $0x380] sm:$0xff] %vm4648, %v4632
        %4762 = vst.msk [vmem:[%s201 + $0x388] sm:$0xff] %vm4648, %v4633
        %4763 = vst.msk [vmem:[%s201 + $0x390] sm:$0xff] %vm4648, %v4634
        %4764 = vst.msk [vmem:[%s201 + $0x398] sm:$0xff] %vm4648, %v4635
        %4765 = vst.msk [vmem:[%s201 + $0x3a0] sm:$0xff] %vm4648, %v4636
        %4766 = vst.msk [vmem:[%s201 + $0x3a8] sm:$0xff] %vm4648, %v4637
        %4767 = vst.msk [vmem:[%s201 + $0x3b0] sm:$0xff] %vm4648, %v4638
        %4768 = vst.msk [vmem:[%s201 + $0x3b8] sm:$0xff] %vm4648, %v4639
        %4769 = vst.msk [vmem:[%s201 + $0x3c0] sm:$0xff] %vm4648, %v4640
        %4770 = vst.msk [vmem:[%s201 + $0x3c8] sm:$0xff] %vm4648, %v4641
        %4771 = vst.msk [vmem:[%s201 + $0x3d0] sm:$0xff] %vm4648, %v4642
        %4772 = vst.msk [vmem:[%s201 + $0x3d8] sm:$0xff] %vm4648, %v4643
        %4773 = vst.msk [vmem:[%s201 + $0x3e0] sm:$0xff] %vm4648, %v4644
        %4774 = vst.msk [vmem:[%s201 + $0x3e8] sm:$0xff] %vm4648, %v4645
        %4775 = vst.msk [vmem:[%s201 + $0x3f0] sm:$0xff] %vm4648, %v4646
        %4776 = vst.msk [vmem:[%s201 + $0x3f8] sm:$0xff] %vm4648, %v4647
        %s4777 = sand.u32 %s117, 1
        %s4778 = scalar_lea.sflag [#allocation3], %s4777
        %s4779 = sand.u32 %s117, 1
        %s4780 = smul.addr %s4779, 1024
        %s4781 = scalar_lea.vmem [#allocation2], %s4780
        // Predicated region
        $region33: #{tpu_custom_call.1} parent=31 // pred_check
          %p4782 = pneg %p127
        $region34: #{tpu_custom_call.1} parent=31 // pred_check_branch
          %4784 = sbr.rel (%p4782) target = $region36
        $region35: #{tpu_custom_call.1} parent=31 // pred_region
          %s4786 = ssub.s32 16384, 16384
          %4787 = vsyncadd %s4778, %s4786
          %s4788 = smul.addr %s22, 128
          %s4789 = sadd.s32 %s21, %s4788
          %s4790 = smul.addr %s4789, 128
          %s4791 = scalar_lea.hbm %s3, %s4790
          %s4792 = sshll.u32 %s4781, 4
          %s4793 = int_to_ptr.vmem [resolvable:$true] %s4792
          %4798 = dma.vmem_to_hbm [thread:$0]  %s4793, 16384, %s4791, %s4778, 128, 128, 8
        $region36: #{tpu_custom_call.1} parent=31 // pred_fallthru
          _
      $region32: #{tpu_custom_call.1} parent=5 // pred_fallthru
        _
      %p4799 = scmp.le.s32.totalorder 2, %s12
      // Predicated region
      $region37: #{tpu_custom_call.1} parent=5 // pred_check
        %p4800 = pneg %p4799
      $region38: #{tpu_custom_call.1} parent=5 // pred_check_branch
        %4802 = sbr.rel (%p4800) target = $region40
      $region39: #{tpu_custom_call.1} parent=5 // pred_region
        %s4803 = ssub.s32 %s12, 2
        // Predicated region
        $region41: #{tpu_custom_call.1} parent=39 // pred_check
          %p4804 = pneg %p133
        $region42: #{tpu_custom_call.1} parent=39 // pred_check_branch
          %4806 = sbr.rel (%p4804) target = $region44
        $region43: #{tpu_custom_call.1} parent=39 // pred_region
          %s4807 = sand.u32 %s118, 1
          %s4808 = scalar_lea.sflag [#allocation3], %s4807
          %s4809 = sand.u32 %s118, 1
          %s4810 = smul.addr %s4809, 1024
          %s4811 = scalar_lea.vmem [#allocation2], %s4810
          %4812 = dma.done %s4808, 16384
        $region44: #{tpu_custom_call.1} parent=39 // pred_fallthru
          _
      $region40: #{tpu_custom_call.1} parent=5 // pred_fallthru
        _
    $region6: #{tpu_custom_call.1} parent=1 // loop_footer
      %s16 = sadd.s32 1, %s12
    $region7: #{tpu_custom_call.1} parent=1 // loop_footer_branch
      %11 = sbr.rel target = $region3
    $region8: #{tpu_custom_call.1} parent=1 // loop_exit
      _
    %4813 = vsyncpa [#allocation3], 1
    %s4814 = scalar_lea.sflag [#allocation3], 1
    %4815 = vsyncpa %s4814, 1

</llo_original>
